<compile_context>
chip_gen: v6e
topology: v6e:2x2x1
jax: 0.10.0
libtpu: 0.0.40
codegen_flags: <defaults>
</compile_context>

<pallas_src>
import functools

import jax
import jax.numpy as jnp
from jax.experimental import pallas as pl
from jax.experimental.pallas import tpu as pltpu

LANE = 128


def _rup(x, m):
    return (x + m - 1) // m * m


# ----------------------------------------------------------------------------
# Fused C2f kernel: one (batch, row-tile) block per grid step
# ----------------------------------------------------------------------------
def _c2f_kernel(x_ref, w1_ref, b1_ref, wm1_ref, bm1_ref, wm2_ref, bm2_ref,
                w2_ref, b2_ref, o_ref, pad_ref, *, n, cp, add, H, W, TH, halo):
    """x_ref  : (1, 1, THe*W, C1p)   extended row tile (halo rows included)
       w1_ref : (C1p, 2cp), b1_ref: (1, 2cp)          folded cv1 (1x1)
       wm*_ref: (n, 9cp, cp), bm*_ref: (n, 1, cp)     folded 3x3 convs (im2col)
       w2_ref : ((2+n)cp, C2p), b2_ref: (1, C2p)      folded cv2 (1x1)
       o_ref  : (1, 1, TH*W, C2p)
       pad_ref: (THe+2, W+9, cp) VMEM scratch for 'same' padding of 3x3 convs
    """
    THe = TH + 2 * halo
    THWe = THe * W
    cd = x_ref.dtype

    # Zero only the border strips the 3x3 taps actually read (rows 0 / THe+1,
    # columns 7 / 8+W).  Interior is fully rewritten before every conv.  Done
    # every step (cheap) so the kernel stays correct under megacore splitting.
    pad_ref[0:1, :, :] = jnp.zeros((1, W + 9, cp), cd)
    pad_ref[THe + 1:THe + 2, :, :] = jnp.zeros((1, W + 9, cp), cd)
    pad_ref[:, 7:8, :] = jnp.zeros((THe + 2, 1, cp), cd)
    pad_ref[:, 8 + W:9 + W, :] = jnp.zeros((THe + 2, 1, cp), cd)

    # Extended-tile rows that fall outside the image must act as zero padding
    # for every 3x3 conv.  Build the mask once per grid step (hoisted broadcast).
    r0 = pl.program_id(1) * TH - halo
    gi = jax.lax.broadcasted_iota(jnp.int32, (THe, 1), 0) + r0
    row_mask = jnp.logical_and(gi >= 0, gi < H).astype(cd)
    row_mask = jnp.broadcast_to(row_mask.reshape(THe, 1, 1), (THe, W, cp))

    def silu(v):
        return v * jax.nn.sigmoid(v)

    def interior(t2d):                       # keep only the TH output rows
        return t2d[halo * W:(halo + TH) * W, :]

    def conv3x3_bn_silu(t2d, w_im2col, b_row):
        # t2d: (THWe, cp) in compute dtype; w_im2col: (9cp, cp); b_row: (1, cp)
        t3 = (t2d.reshape(THe, W, cp) * row_mask).astype(pad_ref.dtype)
        pad_ref[1:THe + 1, 8:8 + W, :] = t3           # sublane-aligned store
        cols = []
        for ky in range(3):
            for kx in range(3):
                cols.append(pad_ref[ky:ky + THe,
                                    7 + kx:7 + kx + W, :].reshape(THWe, cp))
        patches = jnp.concatenate(cols, axis=-1)      # (THWe, 9cp) im2col
        y = jnp.dot(patches, w_im2col,
                    preferred_element_type=jnp.float32) + b_row
        return silu(y).astype(cd)

    # ---- cv1 : 1x1 conv + folded BN + SiLU ---------------------------------
    y = jnp.dot(x_ref[0, 0], w1_ref[...],
                preferred_element_type=jnp.float32) + b1_ref[0]
    y = silu(y).astype(cd)                            # (THWe, 2cp)
    y0 = y[:, :cp]
    y1 = y[:, cp:2 * cp]

    # ---- cv2 streamed accumulation (channel concat never materialized) -----
    acc = jnp.dot(interior(y0), w2_ref[0:cp, :],
                  preferred_element_type=jnp.float32)
    acc = acc + jnp.dot(interior(y1), w2_ref[cp:2 * cp, :],
                        preferred_element_type=jnp.float32)

    t = y1
    for i in range(n):                                # bottleneck chain
        h = conv3x3_bn_silu(t, wm1_ref[i], bm1_ref[i])
        h = conv3x3_bn_silu(h, wm2_ref[i], bm2_ref[i])
        t = (t + h) if add else h
        acc = acc + jnp.dot(interior(t),
                            w2_ref[(2 + i) * cp:(3 + i) * cp, :],
                            preferred_element_type=jnp.float32)

    out = silu(acc + b2_ref[0])
    o_ref[0, 0] = out.astype(o_ref.dtype)


# ----------------------------------------------------------------------------
# BatchNorm folding + channel padding (eval mode)
# ----------------------------------------------------------------------------
def _fold_bn(w, gamma, beta, mean, var, eps=1e-5):
    scale = gamma / jnp.sqrt(var + eps)
    return w * scale[:, None, None, None], beta - mean * scale


def _pack_1x1(w, g, be, m, v, cin_pad, cout_pad):
    wf, bias = _fold_bn(w, g, be, m, v)
    cout, cin = w.shape[0], w.shape[1]
    w2d = jnp.transpose(wf[:, :, 0, 0])                       # (Cin, Cout)
    wp = jnp.zeros((cin_pad, cout_pad), jnp.float32).at[:cin, :cout].set(w2d)
    bp = jnp.zeros((cout_pad,), jnp.float32).at[:cout].set(bias)
    return wp, bp


def _pack_3x3_im2col(w, g, be, m, v, cin_pad, cout_pad):
    wf, bias = _fold_bn(w, g, be, m, v)                       # (Cout, Cin, 3, 3)
    cout, cin = w.shape[0], w.shape[1]
    wp = jnp.zeros((cout_pad, cin_pad, 3, 3), jnp.float32).at[:cout, :cin].set(wf)
    w_im2col = jnp.transpose(wp, (2, 3, 1, 0)).reshape(9 * cin_pad, cout_pad)
    bp = jnp.zeros((cout_pad,), jnp.float32).at[:cout].set(bias)
    return w_im2col, bp


# ----------------------------------------------------------------------------
# Wrapper
# ----------------------------------------------------------------------------
def c2f_forward(x_nchw, params, shortcut=False, row_tile=None,
                compute_dtype=jnp.float32):
    """C2f.forward (eval mode) on NCHW input using one fused Pallas kernel."""
    B, C1, H, W = x_nchw.shape
    n, c = params["m_w1"].shape[0], params["m_w1"].shape[1]
    C2 = params["cv2_w"].shape[0]

    assert W % 8 == 0, "W must be a multiple of 8 (sublane) for this kernel"
    TH = H if row_tile is None else row_tile
    assert H % TH == 0, "row_tile must divide H"
    n_tiles = H // TH
    halo = 2 * n                      # one halo row per chained 3x3 conv
    THe = TH + 2 * halo

    C1p, cp, C2p = _rup(C1, LANE), _rup(c, LANE), _rup(C2, LANE)

    # ---- fold BN, pad channels to lane-dense multiples of 128 --------------
    w1_h, b1_h = [], []
    for h in range(2):                                  # per cv1 output chunk
        sl = slice(h * c, (h + 1) * c)
        wp, bp = _pack_1x1(params["cv1_w"][sl], params["cv1_g"][sl],
                           params["cv1_be"][sl], params["cv1_m"][sl],
                           params["cv1_v"][sl], C1p, cp)
        w1_h.append(wp); b1_h.append(bp)
    w1 = jnp.concatenate(w1_h, axis=1)                  # (C1p, 2cp)
    b1 = jnp.concatenate(b1_h).reshape(1, 2 * cp)

    wm1l, bm1l, wm2l, bm2l = [], [], [], []
    for i in range(n):
        wt, bt = _pack_3x3_im2col(params["m_w1"][i], params["m_g1"][i],
                                  params["m_be1"][i], params["m_m1"][i],
                                  params["m_v1"][i], cp, cp)
        wm1l.append(wt); bm1l.append(bt.reshape(1, cp))
        wt, bt = _pack_3x3_im2col(params["m_w2"][i], params["m_g2"][i],
                                  params["m_be2"][i], params["m_m2"][i],
                                  params["m_v2"][i], cp, cp)
        wm2l.append(wt); bm2l.append(bt.reshape(1, cp))
    wm1, bm1 = jnp.stack(wm1l), jnp.stack(bm1l)         # (n, 9cp, cp), (n, 1, cp)
    wm2, bm2 = jnp.stack(wm2l), jnp.stack(bm2l)

    wf2, bias2 = _fold_bn(params["cv2_w"], params["cv2_g"], params["cv2_be"],
                          params["cv2_m"], params["cv2_v"])
    w2d = jnp.transpose(wf2[:, :, 0, 0])                # ((2+n)c, C2)
    w2 = jnp.zeros(((2 + n) * cp, C2p), jnp.float32)
    for i in range(2 + n):                              # chunk-wise row padding
        w2 = w2.at[i * cp:i * cp + c, :C2].set(w2d[i * c:(i + 1) * c, :])
    b2 = jnp.zeros((1, C2p), jnp.float32).at[0, :C2].set(bias2)

    w1 = w1.astype(compute_dtype); wm1 = wm1.astype(compute_dtype)
    wm2 = wm2.astype(compute_dtype); w2 = w2.astype(compute_dtype)

    # ---- input: NCHW -> NHWC, channel pad, H halo pad, pre-tiled rows ------
    x = jnp.transpose(x_nchw, (0, 2, 3, 1)).astype(jnp.float32)
    x = jnp.pad(x, ((0, 0), (halo, halo), (0, 0), (0, C1p - C1)))
    tiles = [x[:, t * TH:t * TH + THe] for t in range(n_tiles)]
    x_tiles = (jnp.stack(tiles, axis=1)
               .reshape(B, n_tiles, THe * W, C1p).astype(compute_dtype))

    kernel = functools.partial(_c2f_kernel, n=n, cp=cp, add=bool(shortcut),
                               H=H, W=W, TH=TH, halo=halo)

    flops = 2 * B * H * W * (C1p * 2 * cp + n * 2 * 9 * cp * cp
                             + (2 + n) * cp * C2p)
    transc = B * H * W * (2 * cp + 2 * n * cp + C2p)
    bytes_acc = (x_tiles.size * x_tiles.dtype.itemsize + B * H * W * C2p * 4
                 + sum(a.size * a.dtype.itemsize
                       for a in (w1, b1, wm1, bm1, wm2, bm2, w2, b2)))

    out_tiles = pl.pallas_call(
        kernel,
        out_shape=jax.ShapeDtypeStruct((B, n_tiles, TH * W, C2p), jnp.float32),
        grid_spec=pltpu.PrefetchScalarGridSpec(
            num_scalar_prefetch=0,
            grid=(B, n_tiles),
            in_specs=[
                pl.BlockSpec((1, 1, THe * W, C1p), lambda b, t: (b, t, 0, 0)),
                pl.BlockSpec((C1p, 2 * cp), lambda b, t: (0, 0)),
                pl.BlockSpec((1, 2 * cp), lambda b, t: (0, 0)),
                pl.BlockSpec((n, 9 * cp, cp), lambda b, t: (0, 0, 0)),
                pl.BlockSpec((n, 1, cp), lambda b, t: (0, 0, 0)),
                pl.BlockSpec((n, 9 * cp, cp), lambda b, t: (0, 0, 0)),
                pl.BlockSpec((n, 1, cp), lambda b, t: (0, 0, 0)),
                pl.BlockSpec(((2 + n) * cp, C2p), lambda b, t: (0, 0)),
                pl.BlockSpec((1, C2p), lambda b, t: (0, 0)),
            ],
            out_specs=pl.BlockSpec((1, 1, TH * W, C2p),
                                   lambda b, t: (b, t, 0, 0)),
            scratch_shapes=[pltpu.VMEM((THe + 2, W + 9, cp), compute_dtype)],
        ),
        compiler_params=pltpu.CompilerParams(
            dimension_semantics=("parallel", "parallel"),
            vmem_limit_bytes=32 * 1024 * 1024),
        cost_estimate=pl.CostEstimate(flops=int(flops),
                                      transcendentals=int(transc),
                                      bytes_accessed=int(bytes_acc)),
    )(x_tiles, w1, b1, wm1, bm1, wm2, bm2, w2, b2)

    out = out_tiles.reshape(B, H, W, C2p)[..., :C2]
    return jnp.transpose(out, (0, 3, 1, 2))


# ----------------------------------------------------------------------------
# Pure-JAX reference (NCHW) for correctness checking
# ----------------------------------------------------------------------------
def _ref_conv_bn_silu(x, w, gamma, beta, mean, var, eps=1e-5):
    pad = w.shape[-1] // 2
    y = jax.lax.conv_general_dilated(
        x, w, window_strides=(1, 1), padding=((pad, pad), (pad, pad)),
        dimension_numbers=("NCHW", "OIHW", "NCHW"),
        precision=jax.lax.Precision.HIGHEST)
    scale = gamma / jnp.sqrt(var + eps)
    y = y * scale[None, :, None, None] + (beta - mean * scale)[None, :, None, None]
    return y * jax.nn.sigmoid(y)


def c2f_reference(x, p, shortcut=False):
    n, c = p["m_w1"].shape[0], p["m_w1"].shape[1]
    y = _ref_conv_bn_silu(x, p["cv1_w"], p["cv1_g"], p["cv1_be"],
                          p["cv1_m"], p["cv1_v"])
    ys = [y[:, :c], y[:, c:2 * c]]
    for i in range(n):
        t = ys[-1]
        h = _ref_conv_bn_silu(t, p["m_w1"][i], p["m_g1"][i], p["m_be1"][i],
                              p["m_m1"][i], p["m_v1"][i])
        h = _ref_conv_bn_silu(h, p["m_w2"][i], p["m_g2"][i], p["m_be2"][i],
                              p["m_m2"][i], p["m_v2"][i])
        ys.append(t + h if shortcut else h)
    cat = jnp.concatenate(ys, axis=1)
    return _ref_conv_bn_silu(cat, p["cv2_w"], p["cv2_g"], p["cv2_be"],
                             p["cv2_m"], p["cv2_v"])


# ----------------------------------------------------------------------------
# Main
# ----------------------------------------------------------------------------
if __name__ == "__main__":
    key = jax.random.PRNGKey(0)
    B, C1, H, W = 2, 4, 16, 16
    C2_out, n, e = 4, 1, 0.5
    c = int(C2_out * e)              # hidden width of C2f (= 2)

    kx, k_cv1, k_m1a, k_m1b, k_cv2 = jax.random.split(key, 5)
    x = jax.random.normal(kx, (B, C1, H, W), dtype=jnp.float32)

    def conv_bn(cout, cin, ksz, kk):
        kw, kg, kb, km, kv = jax.random.split(kk, 5)
        return (0.1 * jax.random.normal(kw, (cout, cin, ksz, ksz), jnp.float32),
                1.0 + 0.1 * jax.random.normal(kg, (cout,), jnp.float32),
                0.05 * jax.random.normal(kb, (cout,), jnp.float32),
                0.1 * jax.random.normal(km, (cout,), jnp.float32),
                0.5 + jax.random.uniform(kv, (cout,), jnp.float32))

    params = {}
    w, g, be, m, v = conv_bn(2 * c, C1, 1, k_cv1)            # C2f.cv1 (1x1)
    params.update(cv1_w=w, cv1_g=g, cv1_be=be, cv1_m=m, cv1_v=v)
    w, g, be, m, v = conv_bn(c, c, 3, k_m1a)                 # m[0].cv1 (3x3)
    params.update(m_w1=w[None], m_g1=g[None], m_be1=be[None],
                  m_m1=m[None], m_v1=v[None])
    w, g, be, m, v = conv_bn(c, c, 3, k_m1b)                 # m[0].cv2 (3x3)
    params.update(m_w2=w[None], m_g2=g[None], m_be2=be[None],
                  m_m2=m[None], m_v2=v[None])
    w, g, be, m, v = conv_bn(C2_out, (2 + n) * c, 1, k_cv2)  # C2f.cv2 (1x1)
    params.update(cv2_w=w, cv2_g=g, cv2_be=be, cv2_m=m, cv2_v=v)

    # f32, residual on -- H=16 with row_tile=8 exercises the 2-tile halo path.
    f32_sc = jax.jit(functools.partial(c2f_forward, shortcut=True, row_tile=8))
    out = jax.block_until_ready(f32_sc(x, params))
    ref = c2f_reference(x, params, shortcut=True)
    assert out.shape == (B, C2_out, H, W), out.shape
    assert jnp.allclose(out, ref, atol=1e-3, rtol=1e-3), float(
        jnp.max(jnp.abs(out - ref)))

    # f32, C2f default (no residual).
    f32_ns = jax.jit(functools.partial(c2f_forward, shortcut=False, row_tile=8))
    out2 = jax.block_until_ready(f32_ns(x, params))
    ref2 = c2f_reference(x, params, shortcut=False)
    assert jnp.allclose(out2, ref2, atol=1e-3, rtol=1e-3), float(
        jnp.max(jnp.abs(out2 - ref2)))

    # bf16 matmul-operand path (v6e/v7x recommendation), f32 accumulation.
    bf16_sc = jax.jit(functools.partial(c2f_forward, shortcut=True, row_tile=8,
                                        compute_dtype=jnp.bfloat16))
    out3 = jax.block_until_ready(bf16_sc(x, params))
    assert jnp.allclose(out3, ref, atol=8e-2, rtol=8e-2), float(
        jnp.max(jnp.abs(out3 - ref)))

    print("KERNEL_OK")
</pallas_src>

<mosaic_0001>
module attributes {stable_mosaic.version = 11 : i64} {
  func.func @_c2f_kernel(%arg0: i32, %arg1: i32, %arg2: memref<1x1x192x128xf32, #tpu.memory_space<vmem>>, %arg3: memref<128x256xf32, #tpu.memory_space<vmem>>, %arg4: memref<1x256xf32, #tpu.memory_space<vmem>>, %arg5: memref<1x1152x128xf32, #tpu.memory_space<vmem>>, %arg6: memref<1x1x128xf32, #tpu.memory_space<vmem>>, %arg7: memref<1x1152x128xf32, #tpu.memory_space<vmem>>, %arg8: memref<1x1x128xf32, #tpu.memory_space<vmem>>, %arg9: memref<384x128xf32, #tpu.memory_space<vmem>>, %arg10: memref<1x128xf32, #tpu.memory_space<vmem>>, %arg11: memref<1x1x128x128xf32, #tpu.memory_space<vmem>>, %arg12: memref<14x25x128xf32, #tpu.memory_space<vmem>>) attributes {dimension_semantics = [#tpu.dimension_semantics<parallel>, #tpu.dimension_semantics<parallel>], iteration_bounds = array<i64: 2, 2>, scalar_prefetch = 0 : i64, scratch_operands = 1 : i64, tpu.core_type = #tpu.core_type<tc>, window_params = [{transform_indices = @transform_0, window_bounds = array<i64: 1, 1, 192, 128>}, {pipeline_mode = #tpu.pipeline_mode<synchronous>, transform_indices = @transform_1, window_bounds = array<i64: 128, 256>}, {pipeline_mode = #tpu.pipeline_mode<synchronous>, transform_indices = @transform_2, window_bounds = array<i64: 1, 256>}, {pipeline_mode = #tpu.pipeline_mode<synchronous>, transform_indices = @transform_3, window_bounds = array<i64: 1, 1152, 128>}, {pipeline_mode = #tpu.pipeline_mode<synchronous>, transform_indices = @transform_4, window_bounds = array<i64: 1, 1, 128>}, {pipeline_mode = #tpu.pipeline_mode<synchronous>, transform_indices = @transform_5, window_bounds = array<i64: 1, 1152, 128>}, {pipeline_mode = #tpu.pipeline_mode<synchronous>, transform_indices = @transform_6, window_bounds = array<i64: 1, 1, 128>}, {pipeline_mode = #tpu.pipeline_mode<synchronous>, transform_indices = @transform_7, window_bounds = array<i64: 384, 128>}, {pipeline_mode = #tpu.pipeline_mode<synchronous>, transform_indices = @transform_8, window_bounds = array<i64: 1, 128>}, {transform_indices = @transform_9, window_bounds = array<i64: 1, 1, 128, 128>}]} {
    %cst = arith.constant 0.000000e+00 : f32
    %0 = vector.broadcast %cst : f32 to vector<1x25x128xf32>
    %c0 = arith.constant 0 : index
    %c0_0 = arith.constant 0 : index
    %c0_1 = arith.constant 0 : index
    %1 = vector.load %arg12[%c0, %c0_0, %c0_1] : memref<14x25x128xf32, #tpu.memory_space<vmem>>, vector<1x25x128xf32>
    tpu.vector_store %arg12[%c0, %c0_0, %c0_1], %0 {strides = array<i32>} : memref<14x25x128xf32, #tpu.memory_space<vmem>>, vector<1x25x128xf32>,
    %cst_2 = arith.constant 0.000000e+00 : f32
    %2 = vector.broadcast %cst_2 : f32 to vector<1x25x128xf32>
    %c13 = arith.constant 13 : index
    %c0_3 = arith.constant 0 : index
    %c0_4 = arith.constant 0 : index
    %3 = vector.load %arg12[%c13, %c0_3, %c0_4] : memref<14x25x128xf32, #tpu.memory_space<vmem>>, vector<1x25x128xf32>
    tpu.vector_store %arg12[%c13, %c0_3, %c0_4], %2 {strides = array<i32>} : memref<14x25x128xf32, #tpu.memory_space<vmem>>, vector<1x25x128xf32>,
    %cst_5 = arith.constant 0.000000e+00 : f32
    %4 = vector.broadcast %cst_5 : f32 to vector<14x1x128xf32>
    %c0_6 = arith.constant 0 : index
    %c7 = arith.constant 7 : index
    %c0_7 = arith.constant 0 : index
    %5 = vector.load %arg12[%c0_6, %c7, %c0_7] : memref<14x25x128xf32, #tpu.memory_space<vmem>>, vector<14x1x128xf32>
    tpu.vector_store %arg12[%c0_6, %c7, %c0_7], %4 {strides = array<i32>} : memref<14x25x128xf32, #tpu.memory_space<vmem>>, vector<14x1x128xf32>,
    %cst_8 = arith.constant 0.000000e+00 : f32
    %6 = vector.broadcast %cst_8 : f32 to vector<14x1x128xf32>
    %c0_9 = arith.constant 0 : index
    %c24 = arith.constant 24 : index
    %c0_10 = arith.constant 0 : index
    %7 = vector.load %arg12[%c0_9, %c24, %c0_10] : memref<14x25x128xf32, #tpu.memory_space<vmem>>, vector<14x1x128xf32>
    tpu.vector_store %arg12[%c0_9, %c24, %c0_10], %6 {strides = array<i32>} : memref<14x25x128xf32, #tpu.memory_space<vmem>>, vector<14x1x128xf32>,
    %c8_i32 = arith.constant 8 : i32
    %8 = arith.muli %arg1, %c8_i32 : i32
    %c2_i32 = arith.constant 2 : i32
    %9 = arith.subi %8, %c2_i32 : i32
    %10 = tpu.iota {dimensions = array<i32: 0>} : vector<12x1xi32>
    %11 = vector.broadcast %9 : i32 to vector<12x1xi32>
    %12 = arith.addi %10, %11 : vector<12x1xi32>
    %c0_i32 = arith.constant 0 : i32
    %13 = vector.broadcast %c0_i32 : i32 to vector<12x1xi32>
    %14 = arith.cmpi sge, %12, %13 : vector<12x1xi32>
    %c16_i32 = arith.constant 16 : i32
    %15 = vector.broadcast %c16_i32 : i32 to vector<12x1xi32>
    %16 = arith.cmpi slt, %12, %15 : vector<12x1xi32>
    %17 = arith.andi %14, %16 : vector<12x1xi1>
    %18 = arith.extui %17 : vector<12x1xi1> to vector<12x1xi32>
    %19 = arith.sitofp %18 : vector<12x1xi32> to vector<12x1xf32>
    %20 = vector.shape_cast %19 : vector<12x1xf32> to vector<12x1x1xf32>
    %21 = vector.shape_cast %20 : vector<12x1x1xf32> to vector<12x1x1xf32>
    %22 = vector.broadcast %21 : vector<12x1x1xf32> to vector<12x16x128xf32>
    %c0_11 = arith.constant 0 : index
    %c0_12 = arith.constant 0 : index
    %c0_13 = arith.constant 0 : index
    %c0_14 = arith.constant 0 : index
    %23 = vector.load %arg2[%c0_11, %c0_12, %c0_13, %c0_14] : memref<1x1x192x128xf32, #tpu.memory_space<vmem>>, vector<1x1x192x128xf32>
    %24 = vector.shape_cast %23 : vector<1x1x192x128xf32> to vector<192x128xf32>
    %c0_15 = arith.constant 0 : index
    %c0_16 = arith.constant 0 : index
    %25 = vector.load %arg3[%c0_15, %c0_16] : memref<128x256xf32, #tpu.memory_space<vmem>>, vector<128x256xf32>
    %cst_17 = arith.constant dense<0.000000e+00> : vector<192x256xf32>
    %26 = tpu.matmul %24, %25, %cst_17 {dimension_numbers = #tpu.dot_dimension_numbers<[1], [0], [0], [1], [0, 0, 1, 1], [], []>} : vector<192x128xf32>, vector<128x256xf32>, vector<192x256xf32> -> vector<192x256xf32>
    %c0_18 = arith.constant 0 : index
    %c0_19 = arith.constant 0 : index
    %27 = vector.load %arg4[%c0_18, %c0_19] : memref<1x256xf32, #tpu.memory_space<vmem>>, vector<1x256xf32>
    %28 = vector.shape_cast %27 : vector<1x256xf32> to vector<256xf32>
    %29 = vector.shape_cast %28 : vector<256xf32> to vector<1x256xf32>
    %30 = vector.broadcast %29 : vector<1x256xf32> to vector<192x256xf32>
    %31 = arith.addf %26, %30 : vector<192x256xf32>
    %32 = arith.negf %31 : vector<192x256xf32>
    %33 = math.exp %32 : vector<192x256xf32>
    %cst_20 = arith.constant 1.000000e+00 : f32
    %34 = vector.broadcast %cst_20 : f32 to vector<192x256xf32>
    %35 = arith.addf %34, %33 : vector<192x256xf32>
    %36 = arith.divf %34, %35 : vector<192x256xf32>
    %37 = arith.mulf %31, %36 : vector<192x256xf32>
    %38 = vector.extract_strided_slice %37 {offsets = [0, 0], sizes = [192, 128], strides = [1, 1]} : vector<192x256xf32> to vector<192x128xf32>
    %39 = vector.extract_strided_slice %37 {offsets = [0, 128], sizes = [192, 128], strides = [1, 1]} : vector<192x256xf32> to vector<192x128xf32>
    %40 = vector.extract_strided_slice %38 {offsets = [32, 0], sizes = [128, 128], strides = [1, 1]} : vector<192x128xf32> to vector<128x128xf32>
    %c0_21 = arith.constant 0 : index
    %c0_22 = arith.constant 0 : index
    %41 = vector.load %arg9[%c0_21, %c0_22] : memref<384x128xf32, #tpu.memory_space<vmem>>, vector<128x128xf32>
    %cst_23 = arith.constant dense<0.000000e+00> : vector<128x128xf32>
    %42 = tpu.matmul %40, %41, %cst_23 {dimension_numbers = #tpu.dot_dimension_numbers<[1], [0], [0], [1], [0, 0, 1, 1], [], []>} : vector<128x128xf32>, vector<128x128xf32>, vector<128x128xf32> -> vector<128x128xf32>
    %43 = vector.extract_strided_slice %39 {offsets = [32, 0], sizes = [128, 128], strides = [1, 1]} : vector<192x128xf32> to vector<128x128xf32>
    %c128 = arith.constant 128 : index
    %c0_24 = arith.constant 0 : index
    %44 = vector.load %arg9[%c128, %c0_24] : memref<384x128xf32, #tpu.memory_space<vmem>>, vector<128x128xf32>
    %cst_25 = arith.constant dense<0.000000e+00> : vector<128x128xf32>
    %45 = tpu.matmul %43, %44, %cst_25 {dimension_numbers = #tpu.dot_dimension_numbers<[1], [0], [0], [1], [0, 0, 1, 1], [], []>} : vector<128x128xf32>, vector<128x128xf32>, vector<128x128xf32> -> vector<128x128xf32>
    %46 = arith.addf %42, %45 : vector<128x128xf32>
    %c0_26 = arith.constant 0 : index
    %c0_27 = arith.constant 0 : index
    %c0_28 = arith.constant 0 : index
    %47 = vector.load %arg5[%c0_26, %c0_27, %c0_28] : memref<1x1152x128xf32, #tpu.memory_space<vmem>>, vector<1x1152x128xf32>
    %48 = vector.shape_cast %47 : vector<1x1152x128xf32> to vector<1152x128xf32>
    %c0_29 = arith.constant 0 : index
    %c0_30 = arith.constant 0 : index
    %c0_31 = arith.constant 0 : index
    %49 = vector.load %arg6[%c0_29, %c0_30, %c0_31] : memref<1x1x128xf32, #tpu.memory_space<vmem>>, vector<1x1x128xf32>
    %50 = vector.shape_cast %49 : vector<1x1x128xf32> to vector<1x128xf32>
    %51 = vector.shape_cast %39 : vector<192x128xf32> to vector<12x16x128xf32>
    %52 = arith.mulf %51, %22 : vector<12x16x128xf32>
    %c1 = arith.constant 1 : index
    %c8 = arith.constant 8 : index
    %c0_32 = arith.constant 0 : index
    %53 = vector.load %arg12[%c1, %c8, %c0_32] : memref<14x25x128xf32, #tpu.memory_space<vmem>>, vector<12x16x128xf32>
    tpu.vector_store %arg12[%c1, %c8, %c0_32], %52 {strides = array<i32>} : memref<14x25x128xf32, #tpu.memory_space<vmem>>, vector<12x16x128xf32>,
    %c0_33 = arith.constant 0 : index
    %c7_34 = arith.constant 7 : index
    %c0_35 = arith.constant 0 : index
    %54 = vector.load %arg12[%c0_33, %c7_34, %c0_35] : memref<14x25x128xf32, #tpu.memory_space<vmem>>, vector<12x16x128xf32>
    %55 = vector.shape_cast %54 : vector<12x16x128xf32> to vector<192x128xf32>
    %c0_36 = arith.constant 0 : index
    %c8_37 = arith.constant 8 : index
    %c0_38 = arith.constant 0 : index
    %56 = vector.load %arg12[%c0_36, %c8_37, %c0_38] : memref<14x25x128xf32, #tpu.memory_space<vmem>>, vector<12x16x128xf32>
    %57 = vector.shape_cast %56 : vector<12x16x128xf32> to vector<192x128xf32>
    %c0_39 = arith.constant 0 : index
    %c9 = arith.constant 9 : index
    %c0_40 = arith.constant 0 : index
    %58 = vector.load %arg12[%c0_39, %c9, %c0_40] : memref<14x25x128xf32, #tpu.memory_space<vmem>>, vector<12x16x128xf32>
    %59 = vector.shape_cast %58 : vector<12x16x128xf32> to vector<192x128xf32>
    %c1_41 = arith.constant 1 : index
    %c7_42 = arith.constant 7 : index
    %c0_43 = arith.constant 0 : index
    %60 = vector.load %arg12[%c1_41, %c7_42, %c0_43] : memref<14x25x128xf32, #tpu.memory_space<vmem>>, vector<12x16x128xf32>
    %61 = vector.shape_cast %60 : vector<12x16x128xf32> to vector<192x128xf32>
    %c1_44 = arith.constant 1 : index
    %c8_45 = arith.constant 8 : index
    %c0_46 = arith.constant 0 : index
    %62 = vector.load %arg12[%c1_44, %c8_45, %c0_46] : memref<14x25x128xf32, #tpu.memory_space<vmem>>, vector<12x16x128xf32>
    %63 = vector.shape_cast %62 : vector<12x16x128xf32> to vector<192x128xf32>
    %c1_47 = arith.constant 1 : index
    %c9_48 = arith.constant 9 : index
    %c0_49 = arith.constant 0 : index
    %64 = vector.load %arg12[%c1_47, %c9_48, %c0_49] : memref<14x25x128xf32, #tpu.memory_space<vmem>>, vector<12x16x128xf32>
    %65 = vector.shape_cast %64 : vector<12x16x128xf32> to vector<192x128xf32>
    %c2 = arith.constant 2 : index
    %c7_50 = arith.constant 7 : index
    %c0_51 = arith.constant 0 : index
    %66 = vector.load %arg12[%c2, %c7_50, %c0_51] : memref<14x25x128xf32, #tpu.memory_space<vmem>>, vector<12x16x128xf32>
    %67 = vector.shape_cast %66 : vector<12x16x128xf32> to vector<192x128xf32>
    %c2_52 = arith.constant 2 : index
    %c8_53 = arith.constant 8 : index
    %c0_54 = arith.constant 0 : index
    %68 = vector.load %arg12[%c2_52, %c8_53, %c0_54] : memref<14x25x128xf32, #tpu.memory_space<vmem>>, vector<12x16x128xf32>
    %69 = vector.shape_cast %68 : vector<12x16x128xf32> to vector<192x128xf32>
    %c2_55 = arith.constant 2 : index
    %c9_56 = arith.constant 9 : index
    %c0_57 = arith.constant 0 : index
    %70 = vector.load %arg12[%c2_55, %c9_56, %c0_57] : memref<14x25x128xf32, #tpu.memory_space<vmem>>, vector<12x16x128xf32>
    %71 = vector.shape_cast %70 : vector<12x16x128xf32> to vector<192x128xf32>
    %72 = tpu.concatenate %55, %57, %59, %61, %63, %65, %67, %69, %71 in 1 : vector<192x128xf32>, vector<192x128xf32>, vector<192x128xf32>, vector<192x128xf32>, vector<192x128xf32>, vector<192x128xf32>, vector<192x128xf32>, vector<192x128xf32>, vector<192x128xf32> -> vector<192x1152xf32>
    %cst_58 = arith.constant dense<0.000000e+00> : vector<192x128xf32>
    %73 = tpu.matmul %72, %48, %cst_58 {dimension_numbers = #tpu.dot_dimension_numbers<[1], [0], [0], [1], [0, 0, 1, 1], [], []>} : vector<192x1152xf32>, vector<1152x128xf32>, vector<192x128xf32> -> vector<192x128xf32>
    %74 = vector.broadcast %50 : vector<1x128xf32> to vector<192x128xf32>
    %75 = arith.addf %73, %74 : vector<192x128xf32>
    %76 = arith.negf %75 : vector<192x128xf32>
    %77 = math.exp %76 : vector<192x128xf32>
    %cst_59 = arith.constant 1.000000e+00 : f32
    %78 = vector.broadcast %cst_59 : f32 to vector<192x128xf32>
    %79 = arith.addf %78, %77 : vector<192x128xf32>
    %80 = arith.divf %78, %79 : vector<192x128xf32>
    %81 = arith.mulf %75, %80 : vector<192x128xf32>
    %c0_60 = arith.constant 0 : index
    %c0_61 = arith.constant 0 : index
    %c0_62 = arith.constant 0 : index
    %82 = vector.load %arg7[%c0_60, %c0_61, %c0_62] : memref<1x1152x128xf32, #tpu.memory_space<vmem>>, vector<1x1152x128xf32>
    %83 = vector.shape_cast %82 : vector<1x1152x128xf32> to vector<1152x128xf32>
    %c0_63 = arith.constant 0 : index
    %c0_64 = arith.constant 0 : index
    %c0_65 = arith.constant 0 : index
    %84 = vector.load %arg8[%c0_63, %c0_64, %c0_65] : memref<1x1x128xf32, #tpu.memory_space<vmem>>, vector<1x1x128xf32>
    %85 = vector.shape_cast %84 : vector<1x1x128xf32> to vector<1x128xf32>
    %86 = vector.shape_cast %81 : vector<192x128xf32> to vector<12x16x128xf32>
    %87 = arith.mulf %86, %22 : vector<12x16x128xf32>
    %c1_66 = arith.constant 1 : index
    %c8_67 = arith.constant 8 : index
    %c0_68 = arith.constant 0 : index
    %88 = vector.load %arg12[%c1_66, %c8_67, %c0_68] : memref<14x25x128xf32, #tpu.memory_space<vmem>>, vector<12x16x128xf32>
    tpu.vector_store %arg12[%c1_66, %c8_67, %c0_68], %87 {strides = array<i32>} : memref<14x25x128xf32, #tpu.memory_space<vmem>>, vector<12x16x128xf32>,
    %c0_69 = arith.constant 0 : index
    %c7_70 = arith.constant 7 : index
    %c0_71 = arith.constant 0 : index
    %89 = vector.load %arg12[%c0_69, %c7_70, %c0_71] : memref<14x25x128xf32, #tpu.memory_space<vmem>>, vector<12x16x128xf32>
    %90 = vector.shape_cast %89 : vector<12x16x128xf32> to vector<192x128xf32>
    %c0_72 = arith.constant 0 : index
    %c8_73 = arith.constant 8 : index
    %c0_74 = arith.constant 0 : index
    %91 = vector.load %arg12[%c0_72, %c8_73, %c0_74] : memref<14x25x128xf32, #tpu.memory_space<vmem>>, vector<12x16x128xf32>
    %92 = vector.shape_cast %91 : vector<12x16x128xf32> to vector<192x128xf32>
    %c0_75 = arith.constant 0 : index
    %c9_76 = arith.constant 9 : index
    %c0_77 = arith.constant 0 : index
    %93 = vector.load %arg12[%c0_75, %c9_76, %c0_77] : memref<14x25x128xf32, #tpu.memory_space<vmem>>, vector<12x16x128xf32>
    %94 = vector.shape_cast %93 : vector<12x16x128xf32> to vector<192x128xf32>
    %c1_78 = arith.constant 1 : index
    %c7_79 = arith.constant 7 : index
    %c0_80 = arith.constant 0 : index
    %95 = vector.load %arg12[%c1_78, %c7_79, %c0_80] : memref<14x25x128xf32, #tpu.memory_space<vmem>>, vector<12x16x128xf32>
    %96 = vector.shape_cast %95 : vector<12x16x128xf32> to vector<192x128xf32>
    %c1_81 = arith.constant 1 : index
    %c8_82 = arith.constant 8 : index
    %c0_83 = arith.constant 0 : index
    %97 = vector.load %arg12[%c1_81, %c8_82, %c0_83] : memref<14x25x128xf32, #tpu.memory_space<vmem>>, vector<12x16x128xf32>
    %98 = vector.shape_cast %97 : vector<12x16x128xf32> to vector<192x128xf32>
    %c1_84 = arith.constant 1 : index
    %c9_85 = arith.constant 9 : index
    %c0_86 = arith.constant 0 : index
    %99 = vector.load %arg12[%c1_84, %c9_85, %c0_86] : memref<14x25x128xf32, #tpu.memory_space<vmem>>, vector<12x16x128xf32>
    %100 = vector.shape_cast %99 : vector<12x16x128xf32> to vector<192x128xf32>
    %c2_87 = arith.constant 2 : index
    %c7_88 = arith.constant 7 : index
    %c0_89 = arith.constant 0 : index
    %101 = vector.load %arg12[%c2_87, %c7_88, %c0_89] : memref<14x25x128xf32, #tpu.memory_space<vmem>>, vector<12x16x128xf32>
    %102 = vector.shape_cast %101 : vector<12x16x128xf32> to vector<192x128xf32>
    %c2_90 = arith.constant 2 : index
    %c8_91 = arith.constant 8 : index
    %c0_92 = arith.constant 0 : index
    %103 = vector.load %arg12[%c2_90, %c8_91, %c0_92] : memref<14x25x128xf32, #tpu.memory_space<vmem>>, vector<12x16x128xf32>
    %104 = vector.shape_cast %103 : vector<12x16x128xf32> to vector<192x128xf32>
    %c2_93 = arith.constant 2 : index
    %c9_94 = arith.constant 9 : index
    %c0_95 = arith.constant 0 : index
    %105 = vector.load %arg12[%c2_93, %c9_94, %c0_95] : memref<14x25x128xf32, #tpu.memory_space<vmem>>, vector<12x16x128xf32>
    %106 = vector.shape_cast %105 : vector<12x16x128xf32> to vector<192x128xf32>
    %107 = tpu.concatenate %90, %92, %94, %96, %98, %100, %102, %104, %106 in 1 : vector<192x128xf32>, vector<192x128xf32>, vector<192x128xf32>, vector<192x128xf32>, vector<192x128xf32>, vector<192x128xf32>, vector<192x128xf32>, vector<192x128xf32>, vector<192x128xf32> -> vector<192x1152xf32>
    %cst_96 = arith.constant dense<0.000000e+00> : vector<192x128xf32>
    %108 = tpu.matmul %107, %83, %cst_96 {dimension_numbers = #tpu.dot_dimension_numbers<[1], [0], [0], [1], [0, 0, 1, 1], [], []>} : vector<192x1152xf32>, vector<1152x128xf32>, vector<192x128xf32> -> vector<192x128xf32>
    %109 = vector.broadcast %85 : vector<1x128xf32> to vector<192x128xf32>
    %110 = arith.addf %108, %109 : vector<192x128xf32>
    %111 = arith.negf %110 : vector<192x128xf32>
    %112 = math.exp %111 : vector<192x128xf32>
    %cst_97 = arith.constant 1.000000e+00 : f32
    %113 = vector.broadcast %cst_97 : f32 to vector<192x128xf32>
    %114 = arith.addf %113, %112 : vector<192x128xf32>
    %115 = arith.divf %113, %114 : vector<192x128xf32>
    %116 = arith.mulf %110, %115 : vector<192x128xf32>
    %117 = arith.addf %39, %116 : vector<192x128xf32>
    %118 = vector.extract_strided_slice %117 {offsets = [32, 0], sizes = [128, 128], strides = [1, 1]} : vector<192x128xf32> to vector<128x128xf32>
    %c256 = arith.constant 256 : index
    %c0_98 = arith.constant 0 : index
    %119 = vector.load %arg9[%c256, %c0_98] : memref<384x128xf32, #tpu.memory_space<vmem>>, vector<128x128xf32>
    %cst_99 = arith.constant dense<0.000000e+00> : vector<128x128xf32>
    %120 = tpu.matmul %118, %119, %cst_99 {dimension_numbers = #tpu.dot_dimension_numbers<[1], [0], [0], [1], [0, 0, 1, 1], [], []>} : vector<128x128xf32>, vector<128x128xf32>, vector<128x128xf32> -> vector<128x128xf32>
    %121 = arith.addf %46, %120 : vector<128x128xf32>
    %c0_100 = arith.constant 0 : index
    %c0_101 = arith.constant 0 : index
    %122 = vector.load %arg10[%c0_100, %c0_101] : memref<1x128xf32, #tpu.memory_space<vmem>>, vector<1x128xf32>
    %123 = vector.shape_cast %122 : vector<1x128xf32> to vector<128xf32>
    %124 = vector.shape_cast %123 : vector<128xf32> to vector<1x128xf32>
    %125 = vector.broadcast %124 : vector<1x128xf32> to vector<128x128xf32>
    %126 = arith.addf %121, %125 : vector<128x128xf32>
    %127 = arith.negf %126 : vector<128x128xf32>
    %128 = math.exp %127 : vector<128x128xf32>
    %cst_102 = arith.constant 1.000000e+00 : f32
    %129 = vector.broadcast %cst_102 : f32 to vector<128x128xf32>
    %130 = arith.addf %129, %128 : vector<128x128xf32>
    %131 = arith.divf %129, %130 : vector<128x128xf32>
    %132 = arith.mulf %126, %131 : vector<128x128xf32>
    %c0_103 = arith.constant 0 : index
    %c0_104 = arith.constant 0 : index
    %c0_105 = arith.constant 0 : index
    %c0_106 = arith.constant 0 : index
    %133 = vector.load %arg11[%c0_103, %c0_104, %c0_105, %c0_106] : memref<1x1x128x128xf32, #tpu.memory_space<vmem>>, vector<1x1x128x128xf32>
    %134 = vector.shape_cast %133 : vector<1x1x128x128xf32> to vector<128x128xf32>
    %135 = vector.shape_cast %132 : vector<128x128xf32> to vector<1x1x128x128xf32>
    tpu.vector_store %arg11[%c0_103, %c0_104, %c0_105, %c0_106], %135 {strides = array<i32>} : memref<1x1x128x128xf32, #tpu.memory_space<vmem>>, vector<1x1x128x128xf32>,
    return
  }
  func.func @transform_0(%arg0: i32, %arg1: i32) -> (i32, i32, i32, i32) {
    %c0_i32 = arith.constant 0 : i32
    %c0_i32_0 = arith.constant 0 : i32
    %c0_i32_1 = arith.constant 0 : i32
    return %arg0, %arg1, %c0_i32, %c0_i32_0 : i32, i32, i32, i32
  }
  func.func @transform_1(%arg0: i32, %arg1: i32) -> (i32, i32) {
    %c0_i32 = arith.constant 0 : i32
    %c0_i32_0 = arith.constant 0 : i32
    %c0_i32_1 = arith.constant 0 : i32
    return %c0_i32, %c0_i32_0 : i32, i32
  }
  func.func @transform_2(%arg0: i32, %arg1: i32) -> (i32, i32) {
    %c0_i32 = arith.constant 0 : i32
    %c0_i32_0 = arith.constant 0 : i32
    %c0_i32_1 = arith.constant 0 : i32
    return %c0_i32, %c0_i32_0 : i32, i32
  }
  func.func @transform_3(%arg0: i32, %arg1: i32) -> (i32, i32, i32) {
    %c0_i32 = arith.constant 0 : i32
    %c0_i32_0 = arith.constant 0 : i32
    %c0_i32_1 = arith.constant 0 : i32
    %c0_i32_2 = arith.constant 0 : i32
    return %c0_i32, %c0_i32_0, %c0_i32_1 : i32, i32, i32
  }
  func.func @transform_4(%arg0: i32, %arg1: i32) -> (i32, i32, i32) {
    %c0_i32 = arith.constant 0 : i32
    %c0_i32_0 = arith.constant 0 : i32
    %c0_i32_1 = arith.constant 0 : i32
    %c0_i32_2 = arith.constant 0 : i32
    return %c0_i32, %c0_i32_0, %c0_i32_1 : i32, i32, i32
  }
  func.func @transform_5(%arg0: i32, %arg1: i32) -> (i32, i32, i32) {
    %c0_i32 = arith.constant 0 : i32
    %c0_i32_0 = arith.constant 0 : i32
    %c0_i32_1 = arith.constant 0 : i32
    %c0_i32_2 = arith.constant 0 : i32
    return %c0_i32, %c0_i32_0, %c0_i32_1 : i32, i32, i32
  }
  func.func @transform_6(%arg0: i32, %arg1: i32) -> (i32, i32, i32) {
    %c0_i32 = arith.constant 0 : i32
    %c0_i32_0 = arith.constant 0 : i32
    %c0_i32_1 = arith.constant 0 : i32
    %c0_i32_2 = arith.constant 0 : i32
    return %c0_i32, %c0_i32_0, %c0_i32_1 : i32, i32, i32
  }
  func.func @transform_7(%arg0: i32, %arg1: i32) -> (i32, i32) {
    %c0_i32 = arith.constant 0 : i32
    %c0_i32_0 = arith.constant 0 : i32
    %c0_i32_1 = arith.constant 0 : i32
    return %c0_i32, %c0_i32_0 : i32, i32
  }
  func.func @transform_8(%arg0: i32, %arg1: i32) -> (i32, i32) {
    %c0_i32 = arith.constant 0 : i32
    %c0_i32_0 = arith.constant 0 : i32
    %c0_i32_1 = arith.constant 0 : i32
    return %c0_i32, %c0_i32_0 : i32, i32
  }
  func.func @transform_9(%arg0: i32, %arg1: i32) -> (i32, i32, i32, i32) {
    %c0_i32 = arith.constant 0 : i32
    %c0_i32_0 = arith.constant 0 : i32
    %c0_i32_1 = arith.constant 0 : i32
    return %arg0, %arg1, %c0_i32, %c0_i32_0 : i32, i32, i32, i32
  }
}

</mosaic_0001>

<llo_original>
// kernel: c2f_forward.1
$region0: #{c2f_forward.1}
  #allocation0 [shape = 'u32[]', space=smem, size = 0x4, offset = 0x4, fixed_abs, tag = 'smem constant byte address 0x4 - core index']
  #allocation1 [shape = 'u32[144,128]{1,0:T(1,128)}', space=vmem, size = 0x12000, scoped, tag = 'internal scratch']
  #allocation2 [shape = 'f32[14,25,128]{2,1,0:T(8,128)}', space=vmem, size = 0x38000, scoped, tag = 'scratch operand']
  %s0 = inlined_call_operand.vmem [shape: f32[2,2,192,128], index: 0, kind: input, shape index: {}]
  %s1 = inlined_call_operand.vmem [shape: f32[128,256], index: 1, kind: input, shape index: {}]
  %s2 = inlined_call_operand.vmem [shape: f32[1,256], index: 2, kind: input, shape index: {}]
  %s3 = inlined_call_operand.vmem [shape: f32[1,1152,128], index: 3, kind: input, shape index: {}]
  %s4 = inlined_call_operand.vmem [shape: f32[1,1,128], index: 4, kind: input, shape index: {}]
  %s5 = inlined_call_operand.vmem [shape: f32[1,1152,128], index: 5, kind: input, shape index: {}]
  %s6 = inlined_call_operand.vmem [shape: f32[1,1,128], index: 6, kind: input, shape index: {}]
  %s7 = inlined_call_operand.vmem [shape: f32[384,128], index: 7, kind: input, shape index: {}]
  %s8 = inlined_call_operand.vmem [shape: f32[1,128], index: 8, kind: input, shape index: {}]
  %s9 = inlined_call_operand.vmem [shape: f32[2,2,128,128], index: 9, kind: output, shape index: {}]
  %s10 = sld [smem:[#allocation0]]
  $region69: #{c2f_forward.1} parent=0
    _
  %s12 = ssub.s32 1, %s10
  %s13 = scalar_select 0, %s12, %s10
  loop: start=0, step=1, limit=6
  $region2: #{c2f_forward.1} parent=0 // loop_pre_header
    _
  $region3: #{c2f_forward.1} parent=0 // loop_header
    %s15 = sphi 0, %s19
    %p16 = scmp.ge.s32.totalorder %s15, 6
    %s22 = sphi 0, %s34
    %s23 = sphi 0, %s30
    %s24 = sphi 0, %s22
    %s25 = sphi 0, %s23
    %s26 = sphi 0, %s24
    %s27 = sphi 0, %s25
    %s39 = sphi 0, %s41
    %s42 = sphi 0, %s39
    %s43 = sphi 0, %s42
    %s59 = sphi 0, %s43
    %s63 = sphi 0, %s63
    %s65 = sphi 0, %s63
    %s66 = sphi 0, %s65
    %s80 = sphi 0, %s66
    %s84 = sphi 0, %s84
    %s86 = sphi 0, %s84
    %s87 = sphi 0, %s86
    %s101 = sphi 0, %s87
    %s105 = sphi 0, %s105
    %s107 = sphi 0, %s105
    %s108 = sphi 0, %s107
    %s122 = sphi 0, %s108
    %s126 = sphi 0, %s126
    %s128 = sphi 0, %s126
    %s129 = sphi 0, %s128
    %s143 = sphi 0, %s129
    %s147 = sphi 0, %s147
    %s149 = sphi 0, %s147
    %s150 = sphi 0, %s149
    %s164 = sphi 0, %s150
    %s168 = sphi 0, %s168
    %s170 = sphi 0, %s168
    %s171 = sphi 0, %s170
    %s185 = sphi 0, %s171
    %s189 = sphi 0, %s189
    %s191 = sphi 0, %s189
    %s192 = sphi 0, %s191
    %s206 = sphi 0, %s192
    %s210 = sphi 0, %s210
    %s212 = sphi 0, %s210
    %s213 = sphi 0, %s212
    %s227 = sphi 0, %s213
    %s235 = sphi 0, %s237
    %s238 = sphi 0, %s235
    %s239 = sphi 0, %s238
    %s255 = sphi 0, %s239
  $region4: #{c2f_forward.1} parent=0 // loop_header_branch
    %18 = sbr.rel (%p16) target = $region8
  $region5: #{c2f_forward.1} parent=0 // loop_body
    %s20 = ssub.s32 %s15, 1
    %s21 = ssub.s32 %s15, 2
    %s28 = sadd.s32 1, %s23
    %p29 = scmp.ge.s32.totalorder %s28, 2
    %s30 = scalar_select %p29, 0, %s28
    %s31 = sadd.s32 1, %s22
    %s32 = scalar_select %p29, %s31, %s22
    %p33 = scmp.ge.s32.totalorder %s32, 2
    %s34 = scalar_select %p33, 0, %s32
    %s35 = ssub.s32 %s22, %s34
    %s36 = ssub.s32 %s23, %s30
    %s37 = sor.u32 %s35, %s36
    %p38 = scmp.eq.s32.totalorder %s37, 0
    %s40 = sadd.s32 %s39, 1
    %s41 = scalar_select %p38, %s39, %s40
    %p44 = pneg %p38
    %p45 = scmp.eq.s32.totalorder %s15, 3
    %p46 = por %p44, %p45
    %p47 = scmp.ne.s32.totalorder %s39, %s42
    %p48 = scmp.eq.s32.totalorder %s15, 0
    %p49 = por %p47, %p48
    %p50 = scmp.ne.s32.totalorder %s39, %s42
    %p51 = scmp.eq.s32.totalorder %s20, 3
    %p52 = por %p50, %p51
    %p53 = scmp.ne.s32.totalorder %s42, %s43
    %p54 = scmp.eq.s32.totalorder %s20, 0
    %p55 = por %p53, %p54
    %p56 = scmp.ne.s32.totalorder %s42, %s43
    %p57 = scmp.eq.s32.totalorder %s21, 3
    %p58 = por %p56, %p57
    %p60 = scmp.ne.s32.totalorder %s43, %s59
    %p61 = scmp.eq.s32.totalorder %s21, 0
    %p62 = por %p60, %p61
    %s64 = sadd.s32 %s63, 1
    %p67 = scmp.eq.s32.totalorder %s15, 3
    %p68 = scmp.ne.s32.totalorder %s63, %s65
    %p69 = scmp.eq.s32.totalorder %s15, 0
    %p70 = por %p68, %p69
    %p71 = scmp.ne.s32.totalorder %s63, %s65
    %p72 = scmp.eq.s32.totalorder %s20, 3
    %p73 = por %p71, %p72
    %p74 = scmp.ne.s32.totalorder %s65, %s66
    %p75 = scmp.eq.s32.totalorder %s20, 0
    %p76 = por %p74, %p75
    %p77 = scmp.ne.s32.totalorder %s65, %s66
    %p78 = scmp.eq.s32.totalorder %s21, 3
    %p79 = por %p77, %p78
    %p81 = scmp.ne.s32.totalorder %s66, %s80
    %p82 = scmp.eq.s32.totalorder %s21, 0
    %p83 = por %p81, %p82
    %s85 = sadd.s32 %s84, 1
    %p88 = scmp.eq.s32.totalorder %s15, 3
    %p89 = scmp.ne.s32.totalorder %s84, %s86
    %p90 = scmp.eq.s32.totalorder %s15, 0
    %p91 = por %p89, %p90
    %p92 = scmp.ne.s32.totalorder %s84, %s86
    %p93 = scmp.eq.s32.totalorder %s20, 3
    %p94 = por %p92, %p93
    %p95 = scmp.ne.s32.totalorder %s86, %s87
    %p96 = scmp.eq.s32.totalorder %s20, 0
    %p97 = por %p95, %p96
    %p98 = scmp.ne.s32.totalorder %s86, %s87
    %p99 = scmp.eq.s32.totalorder %s21, 3
    %p100 = por %p98, %p99
    %p102 = scmp.ne.s32.totalorder %s87, %s101
    %p103 = scmp.eq.s32.totalorder %s21, 0
    %p104 = por %p102, %p103
    %s106 = sadd.s32 %s105, 1
    %p109 = scmp.eq.s32.totalorder %s15, 3
    %p110 = scmp.ne.s32.totalorder %s105, %s107
    %p111 = scmp.eq.s32.totalorder %s15, 0
    %p112 = por %p110, %p111
    %p113 = scmp.ne.s32.totalorder %s105, %s107
    %p114 = scmp.eq.s32.totalorder %s20, 3
    %p115 = por %p113, %p114
    %p116 = scmp.ne.s32.totalorder %s107, %s108
    %p117 = scmp.eq.s32.totalorder %s20, 0
    %p118 = por %p116, %p117
    %p119 = scmp.ne.s32.totalorder %s107, %s108
    %p120 = scmp.eq.s32.totalorder %s21, 3
    %p121 = por %p119, %p120
    %p123 = scmp.ne.s32.totalorder %s108, %s122
    %p124 = scmp.eq.s32.totalorder %s21, 0
    %p125 = por %p123, %p124
    %s127 = sadd.s32 %s126, 1
    %p130 = scmp.eq.s32.totalorder %s15, 3
    %p131 = scmp.ne.s32.totalorder %s126, %s128
    %p132 = scmp.eq.s32.totalorder %s15, 0
    %p133 = por %p131, %p132
    %p134 = scmp.ne.s32.totalorder %s126, %s128
    %p135 = scmp.eq.s32.totalorder %s20, 3
    %p136 = por %p134, %p135
    %p137 = scmp.ne.s32.totalorder %s128, %s129
    %p138 = scmp.eq.s32.totalorder %s20, 0
    %p139 = por %p137, %p138
    %p140 = scmp.ne.s32.totalorder %s128, %s129
    %p141 = scmp.eq.s32.totalorder %s21, 3
    %p142 = por %p140, %p141
    %p144 = scmp.ne.s32.totalorder %s129, %s143
    %p145 = scmp.eq.s32.totalorder %s21, 0
    %p146 = por %p144, %p145
    %s148 = sadd.s32 %s147, 1
    %p151 = scmp.eq.s32.totalorder %s15, 3
    %p152 = scmp.ne.s32.totalorder %s147, %s149
    %p153 = scmp.eq.s32.totalorder %s15, 0
    %p154 = por %p152, %p153
    %p155 = scmp.ne.s32.totalorder %s147, %s149
    %p156 = scmp.eq.s32.totalorder %s20, 3
    %p157 = por %p155, %p156
    %p158 = scmp.ne.s32.totalorder %s149, %s150
    %p159 = scmp.eq.s32.totalorder %s20, 0
    %p160 = por %p158, %p159
    %p161 = scmp.ne.s32.totalorder %s149, %s150
    %p162 = scmp.eq.s32.totalorder %s21, 3
    %p163 = por %p161, %p162
    %p165 = scmp.ne.s32.totalorder %s150, %s164
    %p166 = scmp.eq.s32.totalorder %s21, 0
    %p167 = por %p165, %p166
    %s169 = sadd.s32 %s168, 1
    %p172 = scmp.eq.s32.totalorder %s15, 3
    %p173 = scmp.ne.s32.totalorder %s168, %s170
    %p174 = scmp.eq.s32.totalorder %s15, 0
    %p175 = por %p173, %p174
    %p176 = scmp.ne.s32.totalorder %s168, %s170
    %p177 = scmp.eq.s32.totalorder %s20, 3
    %p178 = por %p176, %p177
    %p179 = scmp.ne.s32.totalorder %s170, %s171
    %p180 = scmp.eq.s32.totalorder %s20, 0
    %p181 = por %p179, %p180
    %p182 = scmp.ne.s32.totalorder %s170, %s171
    %p183 = scmp.eq.s32.totalorder %s21, 3
    %p184 = por %p182, %p183
    %p186 = scmp.ne.s32.totalorder %s171, %s185
    %p187 = scmp.eq.s32.totalorder %s21, 0
    %p188 = por %p186, %p187
    %s190 = sadd.s32 %s189, 1
    %p193 = scmp.eq.s32.totalorder %s15, 3
    %p194 = scmp.ne.s32.totalorder %s189, %s191
    %p195 = scmp.eq.s32.totalorder %s15, 0
    %p196 = por %p194, %p195
    %p197 = scmp.ne.s32.totalorder %s189, %s191
    %p198 = scmp.eq.s32.totalorder %s20, 3
    %p199 = por %p197, %p198
    %p200 = scmp.ne.s32.totalorder %s191, %s192
    %p201 = scmp.eq.s32.totalorder %s20, 0
    %p202 = por %p200, %p201
    %p203 = scmp.ne.s32.totalorder %s191, %s192
    %p204 = scmp.eq.s32.totalorder %s21, 3
    %p205 = por %p203, %p204
    %p207 = scmp.ne.s32.totalorder %s192, %s206
    %p208 = scmp.eq.s32.totalorder %s21, 0
    %p209 = por %p207, %p208
    %s211 = sadd.s32 %s210, 1
    %p214 = scmp.eq.s32.totalorder %s15, 3
    %p215 = scmp.ne.s32.totalorder %s210, %s212
    %p216 = scmp.eq.s32.totalorder %s15, 0
    %p217 = por %p215, %p216
    %p218 = scmp.ne.s32.totalorder %s210, %s212
    %p219 = scmp.eq.s32.totalorder %s20, 3
    %p220 = por %p218, %p219
    %p221 = scmp.ne.s32.totalorder %s212, %s213
    %p222 = scmp.eq.s32.totalorder %s20, 0
    %p223 = por %p221, %p222
    %p224 = scmp.ne.s32.totalorder %s212, %s213
    %p225 = scmp.eq.s32.totalorder %s21, 3
    %p226 = por %p224, %p225
    %p228 = scmp.ne.s32.totalorder %s213, %s227
    %p229 = scmp.eq.s32.totalorder %s21, 0
    %p230 = por %p228, %p229
    %s231 = ssub.s32 %s22, %s34
    %s232 = ssub.s32 %s23, %s30
    %s233 = sor.u32 %s231, %s232
    %p234 = scmp.eq.s32.totalorder %s233, 0
    %s236 = sadd.s32 %s235, 1
    %s237 = scalar_select %p234, %s235, %s236
    %p240 = pneg %p234
    %p241 = scmp.eq.s32.totalorder %s15, 3
    %p242 = por %p240, %p241
    %p243 = scmp.ne.s32.totalorder %s235, %s238
    %p244 = scmp.eq.s32.totalorder %s15, 0
    %p245 = por %p243, %p244
    %p246 = scmp.ne.s32.totalorder %s235, %s238
    %p247 = scmp.eq.s32.totalorder %s20, 3
    %p248 = por %p246, %p247
    %p249 = scmp.ne.s32.totalorder %s238, %s239
    %p250 = scmp.eq.s32.totalorder %s20, 0
    %p251 = por %p249, %p250
    %p252 = scmp.ne.s32.totalorder %s238, %s239
    %p253 = scmp.eq.s32.totalorder %s21, 3
    %p254 = por %p252, %p253
    %p256 = scmp.ne.s32.totalorder %s239, %s255
    %p257 = scmp.eq.s32.totalorder %s21, 0
    %p258 = por %p256, %p257
    %p259 = scmp.le.s32.totalorder 1, %s15
    %p260 = scmp.lt.s32.totalorder %s15, 5
    %p261 = pnand %p259, %p260
    %p262 = pneg %p261
    // Predicated region
    $region9: #{c2f_forward.1} parent=5 // pred_check
      _
    $region10: #{c2f_forward.1} parent=5 // pred_check_branch
      %264 = sbr.rel (%p261) target = $region12
    $region11: #{c2f_forward.1} parent=5 // pred_region
      %s265 = ssub.s32 %s15, 1
      // Predicated region
      $region13: #{c2f_forward.1} parent=11 // pred_check
        %p266 = pneg %p76
      $region14: #{c2f_forward.1} parent=11 // pred_check_branch
        %268 = sbr.rel (%p266) target = $region16
      $region15: #{c2f_forward.1} parent=11 // pred_region
        _
      $region16: #{c2f_forward.1} parent=11 // pred_fallthru
        _
      // Predicated region
      $region17: #{c2f_forward.1} parent=11 // pred_check
        %p269 = pneg %p97
      $region18: #{c2f_forward.1} parent=11 // pred_check_branch
        %271 = sbr.rel (%p269) target = $region20
      $region19: #{c2f_forward.1} parent=11 // pred_region
        _
      $region20: #{c2f_forward.1} parent=11 // pred_fallthru
        _
      // Predicated region
      $region21: #{c2f_forward.1} parent=11 // pred_check
        %p272 = pneg %p118
      $region22: #{c2f_forward.1} parent=11 // pred_check_branch
        %274 = sbr.rel (%p272) target = $region24
      $region23: #{c2f_forward.1} parent=11 // pred_region
        _
      $region24: #{c2f_forward.1} parent=11 // pred_fallthru
        _
      // Predicated region
      $region25: #{c2f_forward.1} parent=11 // pred_check
        %p275 = pneg %p139
      $region26: #{c2f_forward.1} parent=11 // pred_check_branch
        %277 = sbr.rel (%p275) target = $region28
      $region27: #{c2f_forward.1} parent=11 // pred_region
        _
      $region28: #{c2f_forward.1} parent=11 // pred_fallthru
        _
      // Predicated region
      $region29: #{c2f_forward.1} parent=11 // pred_check
        %p278 = pneg %p160
      $region30: #{c2f_forward.1} parent=11 // pred_check_branch
        %280 = sbr.rel (%p278) target = $region32
      $region31: #{c2f_forward.1} parent=11 // pred_region
        _
      $region32: #{c2f_forward.1} parent=11 // pred_fallthru
        _
      // Predicated region
      $region33: #{c2f_forward.1} parent=11 // pred_check
        %p281 = pneg %p181
      $region34: #{c2f_forward.1} parent=11 // pred_check_branch
        %283 = sbr.rel (%p281) target = $region36
      $region35: #{c2f_forward.1} parent=11 // pred_region
        _
      $region36: #{c2f_forward.1} parent=11 // pred_fallthru
        _
      // Predicated region
      $region37: #{c2f_forward.1} parent=11 // pred_check
        %p284 = pneg %p202
      $region38: #{c2f_forward.1} parent=11 // pred_check_branch
        %286 = sbr.rel (%p284) target = $region40
      $region39: #{c2f_forward.1} parent=11 // pred_region
        _
      $region40: #{c2f_forward.1} parent=11 // pred_fallthru
        _
      // Predicated region
      $region41: #{c2f_forward.1} parent=11 // pred_check
        %p287 = pneg %p223
      $region42: #{c2f_forward.1} parent=11 // pred_check_branch
        %289 = sbr.rel (%p287) target = $region44
      $region43: #{c2f_forward.1} parent=11 // pred_region
        _
      $region44: #{c2f_forward.1} parent=11 // pred_fallthru
        _
    $region12: #{c2f_forward.1} parent=5 // pred_fallthru
      _
    %p290 = scmp.lt.s32.totalorder %s15, 4
    // Predicated region
    $region45: #{c2f_forward.1} parent=5 // pred_check
      %p291 = pneg %p290
    $region46: #{c2f_forward.1} parent=5 // pred_check_branch
      %293 = sbr.rel (%p291) target = $region48
    $region47: #{c2f_forward.1} parent=5 // pred_region
      // Predicated region
      $region49: #{c2f_forward.1} parent=47 // pred_check
        %p294 = pneg %p49
      $region50: #{c2f_forward.1} parent=47 // pred_check_branch
        %296 = sbr.rel (%p294) target = $region52
      $region51: #{c2f_forward.1} parent=47 // pred_region
        %p297 = scmp.lt.s32.totalorder %s22, 1
        %s298 = scalar_select %p297, %s22, 1
        %p299 = scmp.lt.s32.totalorder %s23, 1
        %s300 = scalar_select %p299, %s23, 1
        %s301 = smul.addr %s300, 24
        %s302 = smul.addr %s298, 48
        %s303 = sadd.s32 %s301, %s302
        %s304 = smul.addr %s303, 8
        %s305 = scalar_lea.vmem %s0, %s304
      $region52: #{c2f_forward.1} parent=47 // pred_fallthru
        _
    $region48: #{c2f_forward.1} parent=5 // pred_fallthru
      _
    %p306 = scmp.le.s32.totalorder 1, %s15
    %p307 = scmp.lt.s32.totalorder %s15, 5
    %p308 = pnand %p306, %p307
    %p309 = pneg %p308
    // Predicated region
    $region53: #{c2f_forward.1} parent=5 // pred_check
      _
    $region54: #{c2f_forward.1} parent=5 // pred_check_branch
      %311 = sbr.rel (%p308) target = $region56
    $region55: #{c2f_forward.1} parent=5 // pred_region
      %s312 = ssub.s32 %s15, 1
      %p313 = scmp.lt.s32.totalorder %s24, 1
      %s314 = scalar_select %p313, %s24, 1
      %p315 = scmp.lt.s32.totalorder %s25, 1
      %s316 = scalar_select %p315, %s25, 1
      %s317 = smul.addr %s316, 24
      %s318 = smul.addr %s314, 48
      %s319 = sadd.s32 %s317, %s318
      %s320 = smul.addr %s319, 8
      %s321 = scalar_lea.vmem %s0, %s320
      %p322 = pneg %p55
      %p323 = pneg %p52
      %p324 = pneg %p76
      %p325 = pneg %p73
      %p326 = pneg %p97
      %p327 = pneg %p94
      %p328 = pneg %p118
      %p329 = pneg %p115
      %p330 = pneg %p139
      %p331 = pneg %p136
      %p332 = pneg %p160
      %p333 = pneg %p157
      %p334 = pneg %p181
      %p335 = pneg %p178
      %p336 = pneg %p202
      %p337 = pneg %p199
      %p338 = pneg %p223
      %p339 = pneg %p220
      %p340 = pneg %p251
      %p341 = pneg %p248
      %p342 = scmp.lt.s32.totalorder %s24, 1
      %s343 = scalar_select %p342, %s24, 1
      %p344 = scmp.lt.s32.totalorder %s25, 1
      %s345 = scalar_select %p344, %s25, 1
      %s346 = smul.addr %s345, 16
      %s347 = smul.addr %s343, 32
      %s348 = sadd.s32 %s346, %s347
      %s349 = smul.addr %s348, 8
      %s350 = scalar_lea.vmem %s9, %s349
      %p351 = scmp.lt.s32.totalorder %s24, 1
      %s352 = scalar_select %p351, %s24, 1
      %p353 = scmp.lt.s32.totalorder %s25, 1
      %s354 = scalar_select %p353, %s25, 1
      %s355 = smul.addr %s354, 24
      %s356 = smul.addr %s352, 48
      %s357 = sadd.s32 %s355, %s356
      %s358 = smul.addr %s357, 8
      %s359 = scalar_lea.vmem %s0, %s358
      %p360 = scmp.lt.s32.totalorder %s24, 1
      %s361 = scalar_select %p360, %s24, 1
      %p362 = scmp.lt.s32.totalorder %s25, 1
      %s363 = scalar_select %p362, %s25, 1
      %s364 = smul.addr %s363, 16
      %s365 = smul.addr %s361, 32
      %s366 = sadd.s32 %s364, %s365
      %s367 = smul.addr %s366, 8
      %s368 = scalar_lea.vmem %s9, %s367
      %369 = vst [vmem:[#allocation2] sm:$0xff] 0.0
      %370 = vst [vmem:[#allocation2 + $0x8] sm:$0xff] 0.0
      %371 = vst [vmem:[#allocation2 + $0x10] sm:$0xff] 0.0
      %372 = vst [vmem:[#allocation2 + $0x18] sm:$0x1] 0.0
      %s373 = scalar_lea.vmem [#allocation2], 416
      %374 = vst [vmem:[%s373] sm:$0xff] 0.0
      %375 = vst [vmem:[%s373 + $0x8] sm:$0xff] 0.0
      %376 = vst [vmem:[%s373 + $0x10] sm:$0xff] 0.0
      %377 = vst [vmem:[%s373 + $0x18] sm:$0x1] 0.0
      %378 = vst [vmem:[#allocation2 + $0x7] sm:$0x1] 0.0
      %379 = vst [vmem:[#allocation2 + $0x27] sm:$0x1] 0.0
      %380 = vst [vmem:[#allocation2 + $0x47] sm:$0x1] 0.0
      %381 = vst [vmem:[#allocation2 + $0x67] sm:$0x1] 0.0
      %382 = vst [vmem:[#allocation2 + $0x87] sm:$0x1] 0.0
      %383 = vst [vmem:[#allocation2 + $0xa7] sm:$0x1] 0.0
      %384 = vst [vmem:[#allocation2 + $0xc7] sm:$0x1] 0.0
      %385 = vst [vmem:[#allocation2 + $0xe7] sm:$0x1] 0.0
      %386 = vst [vmem:[#allocation2 + $0x107] sm:$0x1] 0.0
      %387 = vst [vmem:[#allocation2 + $0x127] sm:$0x1] 0.0
      %388 = vst [vmem:[#allocation2 + $0x147] sm:$0x1] 0.0
      %389 = vst [vmem:[#allocation2 + $0x167] sm:$0x1] 0.0
      %390 = vst [vmem:[#allocation2 + $0x187] sm:$0x1] 0.0
      %391 = vst [vmem:[#allocation2 + $0x1a7] sm:$0x1] 0.0
      %392 = vst [vmem:[#allocation2 + $0x18] sm:$0x1] 0.0
      %393 = vst [vmem:[#allocation2 + $0x38] sm:$0x1] 0.0
      %394 = vst [vmem:[#allocation2 + $0x58] sm:$0x1] 0.0
      %395 = vst [vmem:[#allocation2 + $0x78] sm:$0x1] 0.0
      %396 = vst [vmem:[#allocation2 + $0x98] sm:$0x1] 0.0
      %397 = vst [vmem:[#allocation2 + $0xb8] sm:$0x1] 0.0
      %398 = vst [vmem:[#allocation2 + $0xd8] sm:$0x1] 0.0
      %399 = vst [vmem:[#allocation2 + $0xf8] sm:$0x1] 0.0
      %400 = vst [vmem:[#allocation2 + $0x118] sm:$0x1] 0.0
      %401 = vst [vmem:[#allocation2 + $0x138] sm:$0x1] 0.0
      %402 = vst [vmem:[#allocation2 + $0x158] sm:$0x1] 0.0
      %403 = vst [vmem:[#allocation2 + $0x178] sm:$0x1] 0.0
      %404 = vst [vmem:[#allocation2 + $0x198] sm:$0x1] 0.0
      %405 = vst [vmem:[#allocation2 + $0x1b8] sm:$0x1] 0.0
      %s406 = smul.u32 %s25, 8
      %s407 = ssub.s32 %s406, 2
      %v408 = vlaneseq
      %v409 = vshrl.u32 %v408, 7
      %v410 = vadd.s32 %v409, 8
      %v411 = vstv %s407
      %v412 = vadd.s32 %v409, %v411
      %v413 = vadd.s32 %v410, %v411
      %vm414 = vcmp.ge.s32.totalorder %v412, 0
      %vm415 = vcmp.ge.s32.totalorder %v413, 0
      %vm416 = vcmp.lt.s32.totalorder %v412, 16
      %vm417 = vcmp.lt.s32.totalorder %v413, 16
      %vm418 = vmand %vm414, %vm416
      %vm419 = vmand %vm415, %vm417
      %v420 = vsel %vm418, 1, 0
      %v421 = vsel %vm419, 1, 0
      %v422 = vcvt.s32.f32 %v420
      %v423 = vcvt.s32.f32 %v421
      %v426 = vlaneseq
      %v427 = vshrl.u32 %v426, 7
      %v428 = vsub.s32 0, %v427
      %v429 = vrot.slane %v422, %v428
      %v430 = vlaneseq
      %v431 = vshrl.u32 %v430, 7
      %v432 = vsub.s32 1, %v431
      %v433 = vrot.slane %v422, %v432
      %v434 = vlaneseq
      %v435 = vshrl.u32 %v434, 7
      %v436 = vsub.s32 2, %v435
      %v437 = vrot.slane %v422, %v436
      %v438 = vlaneseq
      %v439 = vshrl.u32 %v438, 7
      %v440 = vsub.s32 3, %v439
      %v441 = vrot.slane %v422, %v440
      %v442 = vlaneseq
      %v443 = vshrl.u32 %v442, 7
      %v444 = vsub.s32 4, %v443
      %v445 = vrot.slane %v422, %v444
      %v446 = vlaneseq
      %v447 = vshrl.u32 %v446, 7
      %v448 = vsub.s32 5, %v447
      %v449 = vrot.slane %v422, %v448
      %v450 = vlaneseq
      %v451 = vshrl.u32 %v450, 7
      %v452 = vsub.s32 6, %v451
      %v453 = vrot.slane %v422, %v452
      %v454 = vlaneseq
      %v455 = vshrl.u32 %v454, 7
      %v456 = vsub.s32 7, %v455
      %v457 = vrot.slane %v422, %v456
      %v458 = vlaneseq
      %v459 = vshrl.u32 %v458, 7
      %v460 = vsub.s32 0, %v459
      %v461 = vrot.slane %v423, %v460
      %v462 = vlaneseq
      %v463 = vshrl.u32 %v462, 7
      %v464 = vsub.s32 1, %v463
      %v465 = vrot.slane %v423, %v464
      %v466 = vlaneseq
      %v467 = vshrl.u32 %v466, 7
      %v468 = vsub.s32 2, %v467
      %v469 = vrot.slane %v423, %v468
      %v470 = vlaneseq
      %v471 = vshrl.u32 %v470, 7
      %v472 = vsub.s32 3, %v471
      %v473 = vrot.slane %v423, %v472
      %v486 = vld [vmem:[%s359] sm:$0xff]
      %v487 = vld [vmem:[%s359 + $0x8] sm:$0xff]
      %v488 = vld [vmem:[%s359 + $0x10] sm:$0xff]
      %v489 = vld [vmem:[%s359 + $0x18] sm:$0xff]
      %v490 = vld [vmem:[%s359 + $0x20] sm:$0xff]
      %v491 = vld [vmem:[%s359 + $0x28] sm:$0xff]
      %v492 = vld [vmem:[%s359 + $0x30] sm:$0xff]
      %v493 = vld [vmem:[%s359 + $0x38] sm:$0xff]
      %v494 = vld [vmem:[%s359 + $0x40] sm:$0xff]
      %v495 = vld [vmem:[%s359 + $0x48] sm:$0xff]
      %v496 = vld [vmem:[%s359 + $0x50] sm:$0xff]
      %v497 = vld [vmem:[%s359 + $0x58] sm:$0xff]
      %v498 = vld [vmem:[%s359 + $0x60] sm:$0xff]
      %v499 = vld [vmem:[%s359 + $0x68] sm:$0xff]
      %v500 = vld [vmem:[%s359 + $0x70] sm:$0xff]
      %v501 = vld [vmem:[%s359 + $0x78] sm:$0xff]
      %v502 = vld [vmem:[%s359 + $0x80] sm:$0xff]
      %v503 = vld [vmem:[%s359 + $0x88] sm:$0xff]
      %v504 = vld [vmem:[%s359 + $0x90] sm:$0xff]
      %v505 = vld [vmem:[%s359 + $0x98] sm:$0xff]
      %v506 = vld [vmem:[%s359 + $0xa0] sm:$0xff]
      %v507 = vld [vmem:[%s359 + $0xa8] sm:$0xff]
      %v508 = vld [vmem:[%s359 + $0xb0] sm:$0xff]
      %v509 = vld [vmem:[%s359 + $0xb8] sm:$0xff]
      %v510 = vld [vmem:[%s1] sm:$0xff]
      %v511 = vld [vmem:[%s1 + $0x8] sm:$0xff]
      %v512 = vld [vmem:[%s1 + $0x10] sm:$0xff]
      %v513 = vld [vmem:[%s1 + $0x18] sm:$0xff]
      %v514 = vld [vmem:[%s1 + $0x20] sm:$0xff]
      %v515 = vld [vmem:[%s1 + $0x28] sm:$0xff]
      %v516 = vld [vmem:[%s1 + $0x30] sm:$0xff]
      %v517 = vld [vmem:[%s1 + $0x38] sm:$0xff]
      %v518 = vld [vmem:[%s1 + $0x40] sm:$0xff]
      %v519 = vld [vmem:[%s1 + $0x48] sm:$0xff]
      %v520 = vld [vmem:[%s1 + $0x50] sm:$0xff]
      %v521 = vld [vmem:[%s1 + $0x58] sm:$0xff]
      %v522 = vld [vmem:[%s1 + $0x60] sm:$0xff]
      %v523 = vld [vmem:[%s1 + $0x68] sm:$0xff]
      %v524 = vld [vmem:[%s1 + $0x70] sm:$0xff]
      %v525 = vld [vmem:[%s1 + $0x78] sm:$0xff]
      %v526 = vld [vmem:[%s1 + $0x80] sm:$0xff]
      %v527 = vld [vmem:[%s1 + $0x88] sm:$0xff]
      %v528 = vld [vmem:[%s1 + $0x90] sm:$0xff]
      %v529 = vld [vmem:[%s1 + $0x98] sm:$0xff]
      %v530 = vld [vmem:[%s1 + $0xa0] sm:$0xff]
      %v531 = vld [vmem:[%s1 + $0xa8] sm:$0xff]
      %v532 = vld [vmem:[%s1 + $0xb0] sm:$0xff]
      %v533 = vld [vmem:[%s1 + $0xb8] sm:$0xff]
      %v534 = vld [vmem:[%s1 + $0xc0] sm:$0xff]
      %v535 = vld [vmem:[%s1 + $0xc8] sm:$0xff]
      %v536 = vld [vmem:[%s1 + $0xd0] sm:$0xff]
      %v537 = vld [vmem:[%s1 + $0xd8] sm:$0xff]
      %v538 = vld [vmem:[%s1 + $0xe0] sm:$0xff]
      %v539 = vld [vmem:[%s1 + $0xe8] sm:$0xff]
      %v540 = vld [vmem:[%s1 + $0xf0] sm:$0xff]
      %v541 = vld [vmem:[%s1 + $0xf8] sm:$0xff]
      %v542 = vld [vmem:[%s2] sm:$0x3]
      %v544 = vlaneseq
      %v545 = vshrl.u32 %v544, 7
      %v546 = vsub.s32 0, %v545
      %v547 = vrot.slane %v542, %v546
      %v548 = vlaneseq
      %v549 = vshrl.u32 %v548, 7
      %v550 = vsub.s32 1, %v549
      %v551 = vrot.slane %v542, %v550
      %554 = vmatprep.subr.mxu0 %v541
      %555 = vmatpush1.msra.mxu0 %v540
      %556 = vmatprep.subr.mxu0 %v539
      %557 = vmatpush1.msra.mxu0 %v538
      %558 = vmatprep.subr.mxu0 %v537
      %559 = vmatpush1.msra.mxu0 %v536
      %560 = vmatprep.subr.mxu0 %v535
      %561 = vmatpush1.msra.mxu0 %v534
      %562 = vmatprep.subr.mxu0 %v533
      %563 = vmatpush1.msra.mxu0 %v532
      %564 = vmatprep.subr.mxu0 %v531
      %565 = vmatpush1.msra.mxu0 %v530
      %566 = vmatprep.subr.mxu0 %v529
      %567 = vmatpush1.msra.mxu0 %v528
      %568 = vmatprep.subr.mxu0 %v527
      %569 = vmatpush1.msra.mxu0 %v526
      %570 = vmatprep.subr.mxu0 %v525
      %571 = vmatpush1.msra.mxu0 %v524
      %572 = vmatprep.subr.mxu0 %v523
      %573 = vmatpush1.msra.mxu0 %v522
      %574 = vmatprep.subr.mxu0 %v521
      %575 = vmatpush1.msra.mxu0 %v520
      %576 = vmatprep.subr.mxu0 %v519
      %577 = vmatpush1.msra.mxu0 %v518
      %578 = vmatprep.subr.mxu0 %v517
      %579 = vmatpush1.msra.mxu0 %v516
      %580 = vmatprep.subr.mxu0 %v515
      %581 = vmatpush1.msra.mxu0 %v514
      %582 = vmatprep.subr.mxu0 %v513
      %583 = vmatpush1.msra.mxu0 %v512
      %584 = vmatprep.subr.mxu0 %v511
      %585 = vmatpush1.msra.mxu0 %v510
      %586 = vmatprep.subr.mxu0 0.0
      %587 = vmatpush2.msra.mxu0 0.0
      %588 = vmatprep.subr.mxu0 0.0
      %589 = vmatpush2.msra.mxu0 0.0
      %590 = vmatprep.subr.mxu0 0.0
      %591 = vmatpush2.msra.mxu0 0.0
      %592 = vmatprep.subr.mxu0 0.0
      %593 = vmatpush2.msra.mxu0 0.0
      %594 = vmatprep.subr.mxu0 0.0
      %595 = vmatpush2.msra.mxu0 0.0
      %596 = vmatprep.subr.mxu0 0.0
      %597 = vmatpush2.msra.mxu0 0.0
      %598 = vmatprep.subr.mxu0 0.0
      %599 = vmatpush2.msra.mxu0 0.0
      %600 = vmatprep.subr.mxu0 0.0
      %601 = vmatpush2.msra.mxu0 0.0
      %602 = vmatprep.subr.mxu0 0.0
      %603 = vmatpush2.msra.mxu0 0.0
      %604 = vmatprep.subr.mxu0 0.0
      %605 = vmatpush2.msra.mxu0 0.0
      %606 = vmatprep.subr.mxu0 0.0
      %607 = vmatpush2.msra.mxu0 0.0
      %608 = vmatprep.subr.mxu0 0.0
      %609 = vmatpush2.msra.mxu0 0.0
      %610 = vmatprep.subr.mxu0 0.0
      %611 = vmatpush2.msra.mxu0 0.0
      %612 = vmatprep.subr.mxu0 0.0
      %613 = vmatpush2.msra.mxu0 0.0
      %614 = vmatprep.subr.mxu0 0.0
      %615 = vmatpush2.msra.mxu0 0.0
      %616 = vmatprep.subr.mxu0 0.0
      %617 = vmatpush2.msra.mxu0 0.0
      %618 = vmatprep.mubr.f32.mxu0 0.0
      %619 = vmatmul.mubr.f32.gmra.mxu0 %v486
      %v620 = vpop.f32.mrf.mxu0
      %v621 = vpop.f32.mrf.mxu0
      %v622 = vadd.f32 %v551, %v621
      %623 = vmatprep.mubr.f32.mxu0 0.0
      %624 = vmatmul.mubr.f32.gmra.mxu0 %v487
      %v625 = vpop.f32.mrf.mxu0
      %v626 = vpop.f32.mrf.mxu0
      %v627 = vadd.f32 %v551, %v626
      %628 = vmatprep.mubr.f32.mxu0 0.0
      %629 = vmatmul.mubr.f32.gmra.mxu0 %v488
      %v630 = vpop.f32.mrf.mxu0
      %v631 = vpop.f32.mrf.mxu0
      %v632 = vadd.f32 %v551, %v631
      %633 = vmatprep.mubr.f32.mxu0 0.0
      %634 = vmatmul.mubr.f32.gmra.mxu0 %v489
      %v635 = vpop.f32.mrf.mxu0
      %v636 = vpop.f32.mrf.mxu0
      %v637 = vadd.f32 %v551, %v636
      %638 = vmatprep.mubr.f32.mxu0 0.0
      %639 = vmatmul.mubr.f32.gmra.mxu0 %v490
      %v640 = vpop.f32.mrf.mxu0
      %v641 = vadd.f32 %v547, %v640
      %v642 = vpop.f32.mrf.mxu0
      %v643 = vadd.f32 %v551, %v642
      %644 = vmatprep.mubr.f32.mxu0 0.0
      %645 = vmatmul.mubr.f32.gmra.mxu0 %v491
      %v646 = vpop.f32.mrf.mxu0
      %v647 = vadd.f32 %v547, %v646
      %v648 = vpop.f32.mrf.mxu0
      %v649 = vadd.f32 %v551, %v648
      %650 = vmatprep.mubr.f32.mxu0 0.0
      %651 = vmatmul.mubr.f32.gmra.mxu0 %v492
      %v652 = vpop.f32.mrf.mxu0
      %v653 = vadd.f32 %v547, %v652
      %v654 = vpop.f32.mrf.mxu0
      %v655 = vadd.f32 %v551, %v654
      %656 = vmatprep.mubr.f32.mxu0 0.0
      %657 = vmatmul.mubr.f32.gmra.mxu0 %v493
      %v658 = vpop.f32.mrf.mxu0
      %v659 = vadd.f32 %v547, %v658
      %v660 = vpop.f32.mrf.mxu0
      %v661 = vadd.f32 %v551, %v660
      %662 = vmatprep.mubr.f32.mxu0 0.0
      %663 = vmatmul.mubr.f32.gmra.mxu0 %v494
      %v664 = vpop.f32.mrf.mxu0
      %v665 = vadd.f32 %v547, %v664
      %v666 = vpop.f32.mrf.mxu0
      %v667 = vadd.f32 %v551, %v666
      %668 = vmatprep.mubr.f32.mxu0 0.0
      %669 = vmatmul.mubr.f32.gmra.mxu0 %v495
      %v670 = vpop.f32.mrf.mxu0
      %v671 = vadd.f32 %v547, %v670
      %v672 = vpop.f32.mrf.mxu0
      %v673 = vadd.f32 %v551, %v672
      %674 = vmatprep.mubr.f32.mxu0 0.0
      %675 = vmatmul.mubr.f32.gmra.mxu0 %v496
      %v676 = vpop.f32.mrf.mxu0
      %v677 = vadd.f32 %v547, %v676
      %v678 = vpop.f32.mrf.mxu0
      %v679 = vadd.f32 %v551, %v678
      %680 = vmatprep.mubr.f32.mxu0 0.0
      %681 = vmatmul.mubr.f32.gmra.mxu0 %v497
      %v682 = vpop.f32.mrf.mxu0
      %v683 = vadd.f32 %v547, %v682
      %v684 = vpop.f32.mrf.mxu0
      %v685 = vadd.f32 %v551, %v684
      %686 = vmatprep.mubr.f32.mxu0 0.0
      %687 = vmatmul.mubr.f32.gmra.mxu0 %v498
      %v688 = vpop.f32.mrf.mxu0
      %v689 = vadd.f32 %v547, %v688
      %v690 = vpop.f32.mrf.mxu0
      %v691 = vadd.f32 %v551, %v690
      %692 = vmatprep.mubr.f32.mxu0 0.0
      %693 = vmatmul.mubr.f32.gmra.mxu0 %v499
      %v694 = vpop.f32.mrf.mxu0
      %v695 = vadd.f32 %v547, %v694
      %v696 = vpop.f32.mrf.mxu0
      %v697 = vadd.f32 %v551, %v696
      %698 = vmatprep.mubr.f32.mxu0 0.0
      %699 = vmatmul.mubr.f32.gmra.mxu0 %v500
      %v700 = vpop.f32.mrf.mxu0
      %v701 = vadd.f32 %v547, %v700
      %v702 = vpop.f32.mrf.mxu0
      %v703 = vadd.f32 %v551, %v702
      %704 = vmatprep.mubr.f32.mxu0 0.0
      %705 = vmatmul.mubr.f32.gmra.mxu0 %v501
      %v706 = vpop.f32.mrf.mxu0
      %v707 = vadd.f32 %v547, %v706
      %v708 = vpop.f32.mrf.mxu0
      %v709 = vadd.f32 %v551, %v708
      %710 = vmatprep.mubr.f32.mxu0 0.0
      %711 = vmatmul.mubr.f32.gmra.mxu0 %v502
      %v712 = vpop.f32.mrf.mxu0
      %v713 = vadd.f32 %v547, %v712
      %v714 = vpop.f32.mrf.mxu0
      %v715 = vadd.f32 %v551, %v714
      %716 = vmatprep.mubr.f32.mxu0 0.0
      %717 = vmatmul.mubr.f32.gmra.mxu0 %v503
      %v718 = vpop.f32.mrf.mxu0
      %v719 = vadd.f32 %v547, %v718
      %v720 = vpop.f32.mrf.mxu0
      %v721 = vadd.f32 %v551, %v720
      %722 = vmatprep.mubr.f32.mxu0 0.0
      %723 = vmatmul.mubr.f32.gmra.mxu0 %v504
      %v724 = vpop.f32.mrf.mxu0
      %v725 = vadd.f32 %v547, %v724
      %v726 = vpop.f32.mrf.mxu0
      %v727 = vadd.f32 %v551, %v726
      %728 = vmatprep.mubr.f32.mxu0 0.0
      %729 = vmatmul.mubr.f32.gmra.mxu0 %v505
      %v730 = vpop.f32.mrf.mxu0
      %v731 = vadd.f32 %v547, %v730
      %v732 = vpop.f32.mrf.mxu0
      %v733 = vadd.f32 %v551, %v732
      %734 = vmatprep.mubr.f32.mxu0 0.0
      %735 = vmatmul.mubr.f32.gmra.mxu0 %v506
      %v736 = vpop.f32.mrf.mxu0
      %v737 = vpop.f32.mrf.mxu0
      %v738 = vadd.f32 %v551, %v737
      %739 = vmatprep.mubr.f32.mxu0 0.0
      %740 = vmatmul.mubr.f32.gmra.mxu0 %v507
      %v741 = vpop.f32.mrf.mxu0
      %v742 = vpop.f32.mrf.mxu0
      %v743 = vadd.f32 %v551, %v742
      %744 = vmatprep.mubr.f32.mxu0 0.0
      %745 = vmatmul.mubr.f32.gmra.mxu0 %v508
      %v746 = vpop.f32.mrf.mxu0
      %v747 = vpop.f32.mrf.mxu0
      %v748 = vadd.f32 %v551, %v747
      %749 = vmatprep.mubr.f32.mxu0 0.0
      %750 = vmatmul.mubr.f32.gmra.mxu0 %v509
      %v751 = vpop.f32.mrf.mxu0
      %v752 = vpop.f32.mrf.mxu0
      %v753 = vadd.f32 %v551, %v752
      %754 = vdwg.mxu0
      %v755 = vxor.u32 %v622, 2147483648
      %v756 = vxor.u32 %v627, 2147483648
      %v757 = vxor.u32 %v632, 2147483648
      %v758 = vxor.u32 %v637, 2147483648
      %v759 = vxor.u32 %v641, 2147483648
      %v760 = vxor.u32 %v643, 2147483648
      %v761 = vxor.u32 %v647, 2147483648
      %v762 = vxor.u32 %v649, 2147483648
      %v763 = vxor.u32 %v653, 2147483648
      %v764 = vxor.u32 %v655, 2147483648
      %v765 = vxor.u32 %v659, 2147483648
      %v766 = vxor.u32 %v661, 2147483648
      %v767 = vxor.u32 %v665, 2147483648
      %v768 = vxor.u32 %v667, 2147483648
      %v769 = vxor.u32 %v671, 2147483648
      %v770 = vxor.u32 %v673, 2147483648
      %v771 = vxor.u32 %v677, 2147483648
      %v772 = vxor.u32 %v679, 2147483648
      %v773 = vxor.u32 %v683, 2147483648
      %v774 = vxor.u32 %v685, 2147483648
      %v775 = vxor.u32 %v689, 2147483648
      %v776 = vxor.u32 %v691, 2147483648
      %v777 = vxor.u32 %v695, 2147483648
      %v778 = vxor.u32 %v697, 2147483648
      %v779 = vxor.u32 %v701, 2147483648
      %v780 = vxor.u32 %v703, 2147483648
      %v781 = vxor.u32 %v707, 2147483648
      %v782 = vxor.u32 %v709, 2147483648
      %v783 = vxor.u32 %v713, 2147483648
      %v784 = vxor.u32 %v715, 2147483648
      %v785 = vxor.u32 %v719, 2147483648
      %v786 = vxor.u32 %v721, 2147483648
      %v787 = vxor.u32 %v725, 2147483648
      %v788 = vxor.u32 %v727, 2147483648
      %v789 = vxor.u32 %v731, 2147483648
      %v790 = vxor.u32 %v733, 2147483648
      %v791 = vxor.u32 %v738, 2147483648
      %v792 = vxor.u32 %v743, 2147483648
      %v793 = vxor.u32 %v748, 2147483648
      %v794 = vxor.u32 %v753, 2147483648
      %v795 = vmul.f32 %v755, 1.442695
      %v796 = vpow.pop %v795
      %v797 = vmul.f32 %v756, 1.442695
      %v798 = vpow.pop %v797
      %v799 = vmul.f32 %v757, 1.442695
      %v800 = vpow.pop %v799
      %v801 = vmul.f32 %v758, 1.442695
      %v802 = vpow.pop %v801
      %v803 = vmul.f32 %v759, 1.442695
      %v804 = vpow.pop %v803
      %v805 = vmul.f32 %v760, 1.442695
      %v806 = vpow.pop %v805
      %v807 = vmul.f32 %v761, 1.442695
      %v808 = vpow.pop %v807
      %v809 = vmul.f32 %v762, 1.442695
      %v810 = vpow.pop %v809
      %v811 = vmul.f32 %v763, 1.442695
      %v812 = vpow.pop %v811
      %v813 = vmul.f32 %v764, 1.442695
      %v814 = vpow.pop %v813
      %v815 = vmul.f32 %v765, 1.442695
      %v816 = vpow.pop %v815
      %v817 = vmul.f32 %v766, 1.442695
      %v818 = vpow.pop %v817
      %v819 = vmul.f32 %v767, 1.442695
      %v820 = vpow.pop %v819
      %v821 = vmul.f32 %v768, 1.442695
      %v822 = vpow.pop %v821
      %v823 = vmul.f32 %v769, 1.442695
      %v824 = vpow.pop %v823
      %v825 = vmul.f32 %v770, 1.442695
      %v826 = vpow.pop %v825
      %v827 = vmul.f32 %v771, 1.442695
      %v828 = vpow.pop %v827
      %v829 = vmul.f32 %v772, 1.442695
      %v830 = vpow.pop %v829
      %v831 = vmul.f32 %v773, 1.442695
      %v832 = vpow.pop %v831
      %v833 = vmul.f32 %v774, 1.442695
      %v834 = vpow.pop %v833
      %v835 = vmul.f32 %v775, 1.442695
      %v836 = vpow.pop %v835
      %v837 = vmul.f32 %v776, 1.442695
      %v838 = vpow.pop %v837
      %v839 = vmul.f32 %v777, 1.442695
      %v840 = vpow.pop %v839
      %v841 = vmul.f32 %v778, 1.442695
      %v842 = vpow.pop %v841
      %v843 = vmul.f32 %v779, 1.442695
      %v844 = vpow.pop %v843
      %v845 = vmul.f32 %v780, 1.442695
      %v846 = vpow.pop %v845
      %v847 = vmul.f32 %v781, 1.442695
      %v848 = vpow.pop %v847
      %v849 = vmul.f32 %v782, 1.442695
      %v850 = vpow.pop %v849
      %v851 = vmul.f32 %v783, 1.442695
      %v852 = vpow.pop %v851
      %v853 = vmul.f32 %v784, 1.442695
      %v854 = vpow.pop %v853
      %v855 = vmul.f32 %v785, 1.442695
      %v856 = vpow.pop %v855
      %v857 = vmul.f32 %v786, 1.442695
      %v858 = vpow.pop %v857
      %v859 = vmul.f32 %v787, 1.442695
      %v860 = vpow.pop %v859
      %v861 = vmul.f32 %v788, 1.442695
      %v862 = vpow.pop %v861
      %v863 = vmul.f32 %v789, 1.442695
      %v864 = vpow.pop %v863
      %v865 = vmul.f32 %v790, 1.442695
      %v866 = vpow.pop %v865
      %v867 = vmul.f32 %v791, 1.442695
      %v868 = vpow.pop %v867
      %v869 = vmul.f32 %v792, 1.442695
      %v870 = vpow.pop %v869
      %v871 = vmul.f32 %v793, 1.442695
      %v872 = vpow.pop %v871
      %v873 = vmul.f32 %v794, 1.442695
      %v874 = vpow.pop %v873
      %v875 = vadd.f32 %v796, 1.0
      %v876 = vadd.f32 %v798, 1.0
      %v877 = vadd.f32 %v800, 1.0
      %v878 = vadd.f32 %v802, 1.0
      %v879 = vadd.f32 %v804, 1.0
      %v880 = vadd.f32 %v806, 1.0
      %v881 = vadd.f32 %v808, 1.0
      %v882 = vadd.f32 %v810, 1.0
      %v883 = vadd.f32 %v812, 1.0
      %v884 = vadd.f32 %v814, 1.0
      %v885 = vadd.f32 %v816, 1.0
      %v886 = vadd.f32 %v818, 1.0
      %v887 = vadd.f32 %v820, 1.0
      %v888 = vadd.f32 %v822, 1.0
      %v889 = vadd.f32 %v824, 1.0
      %v890 = vadd.f32 %v826, 1.0
      %v891 = vadd.f32 %v828, 1.0
      %v892 = vadd.f32 %v830, 1.0
      %v893 = vadd.f32 %v832, 1.0
      %v894 = vadd.f32 %v834, 1.0
      %v895 = vadd.f32 %v836, 1.0
      %v896 = vadd.f32 %v838, 1.0
      %v897 = vadd.f32 %v840, 1.0
      %v898 = vadd.f32 %v842, 1.0
      %v899 = vadd.f32 %v844, 1.0
      %v900 = vadd.f32 %v846, 1.0
      %v901 = vadd.f32 %v848, 1.0
      %v902 = vadd.f32 %v850, 1.0
      %v903 = vadd.f32 %v852, 1.0
      %v904 = vadd.f32 %v854, 1.0
      %v905 = vadd.f32 %v856, 1.0
      %v906 = vadd.f32 %v858, 1.0
      %v907 = vadd.f32 %v860, 1.0
      %v908 = vadd.f32 %v862, 1.0
      %v909 = vadd.f32 %v864, 1.0
      %v910 = vadd.f32 %v866, 1.0
      %v911 = vadd.f32 %v868, 1.0
      %v912 = vadd.f32 %v870, 1.0
      %v913 = vadd.f32 %v872, 1.0
      %v914 = vadd.f32 %v874, 1.0
      %v915 = vrcp.pop %v875
      %v916 = vmul.f32 1.0, %v915
      %v917 = vrcp.pop %v876
      %v918 = vmul.f32 1.0, %v917
      %v919 = vrcp.pop %v877
      %v920 = vmul.f32 1.0, %v919
      %v921 = vrcp.pop %v878
      %v922 = vmul.f32 1.0, %v921
      %v923 = vrcp.pop %v879
      %v924 = vmul.f32 1.0, %v923
      %v925 = vrcp.pop %v880
      %v926 = vmul.f32 1.0, %v925
      %v927 = vrcp.pop %v881
      %v928 = vmul.f32 1.0, %v927
      %v929 = vrcp.pop %v882
      %v930 = vmul.f32 1.0, %v929
      %v931 = vrcp.pop %v883
      %v932 = vmul.f32 1.0, %v931
      %v933 = vrcp.pop %v884
      %v934 = vmul.f32 1.0, %v933
      %v935 = vrcp.pop %v885
      %v936 = vmul.f32 1.0, %v935
      %v937 = vrcp.pop %v886
      %v938 = vmul.f32 1.0, %v937
      %v939 = vrcp.pop %v887
      %v940 = vmul.f32 1.0, %v939
      %v941 = vrcp.pop %v888
      %v942 = vmul.f32 1.0, %v941
      %v943 = vrcp.pop %v889
      %v944 = vmul.f32 1.0, %v943
      %v945 = vrcp.pop %v890
      %v946 = vmul.f32 1.0, %v945
      %v947 = vrcp.pop %v891
      %v948 = vmul.f32 1.0, %v947
      %v949 = vrcp.pop %v892
      %v950 = vmul.f32 1.0, %v949
      %v951 = vrcp.pop %v893
      %v952 = vmul.f32 1.0, %v951
      %v953 = vrcp.pop %v894
      %v954 = vmul.f32 1.0, %v953
      %v955 = vrcp.pop %v895
      %v956 = vmul.f32 1.0, %v955
      %v957 = vrcp.pop %v896
      %v958 = vmul.f32 1.0, %v957
      %v959 = vrcp.pop %v897
      %v960 = vmul.f32 1.0, %v959
      %v961 = vrcp.pop %v898
      %v962 = vmul.f32 1.0, %v961
      %v963 = vrcp.pop %v899
      %v964 = vmul.f32 1.0, %v963
      %v965 = vrcp.pop %v900
      %v966 = vmul.f32 1.0, %v965
      %v967 = vrcp.pop %v901
      %v968 = vmul.f32 1.0, %v967
      %v969 = vrcp.pop %v902
      %v970 = vmul.f32 1.0, %v969
      %v971 = vrcp.pop %v903
      %v972 = vmul.f32 1.0, %v971
      %v973 = vrcp.pop %v904
      %v974 = vmul.f32 1.0, %v973
      %v975 = vrcp.pop %v905
      %v976 = vmul.f32 1.0, %v975
      %v977 = vrcp.pop %v906
      %v978 = vmul.f32 1.0, %v977
      %v979 = vrcp.pop %v907
      %v980 = vmul.f32 1.0, %v979
      %v981 = vrcp.pop %v908
      %v982 = vmul.f32 1.0, %v981
      %v983 = vrcp.pop %v909
      %v984 = vmul.f32 1.0, %v983
      %v985 = vrcp.pop %v910
      %v986 = vmul.f32 1.0, %v985
      %v987 = vrcp.pop %v911
      %v988 = vmul.f32 1.0, %v987
      %v989 = vrcp.pop %v912
      %v990 = vmul.f32 1.0, %v989
      %v991 = vrcp.pop %v913
      %v992 = vmul.f32 1.0, %v991
      %v993 = vrcp.pop %v914
      %v994 = vmul.f32 1.0, %v993
      %v995 = vmul.f32 %v622, %v916
      %v996 = vmul.f32 %v627, %v918
      %v997 = vmul.f32 %v632, %v920
      %v998 = vmul.f32 %v637, %v922
      %v999 = vmul.f32 %v641, %v924
      %v1000 = vmul.f32 %v643, %v926
      %v1001 = vmul.f32 %v647, %v928
      %v1002 = vmul.f32 %v649, %v930
      %v1003 = vmul.f32 %v653, %v932
      %v1004 = vmul.f32 %v655, %v934
      %v1005 = vmul.f32 %v659, %v936
      %v1006 = vmul.f32 %v661, %v938
      %v1007 = vmul.f32 %v665, %v940
      %v1008 = vmul.f32 %v667, %v942
      %v1009 = vmul.f32 %v671, %v944
      %v1010 = vmul.f32 %v673, %v946
      %v1011 = vmul.f32 %v677, %v948
      %v1012 = vmul.f32 %v679, %v950
      %v1013 = vmul.f32 %v683, %v952
      %v1014 = vmul.f32 %v685, %v954
      %v1015 = vmul.f32 %v689, %v956
      %v1016 = vmul.f32 %v691, %v958
      %v1017 = vmul.f32 %v695, %v960
      %v1018 = vmul.f32 %v697, %v962
      %v1019 = vmul.f32 %v701, %v964
      %v1020 = vmul.f32 %v703, %v966
      %v1021 = vmul.f32 %v707, %v968
      %v1022 = vmul.f32 %v709, %v970
      %v1023 = vmul.f32 %v713, %v972
      %v1024 = vmul.f32 %v715, %v974
      %v1025 = vmul.f32 %v719, %v976
      %v1026 = vmul.f32 %v721, %v978
      %v1027 = vmul.f32 %v725, %v980
      %v1028 = vmul.f32 %v727, %v982
      %v1029 = vmul.f32 %v731, %v984
      %v1030 = vmul.f32 %v733, %v986
      %v1031 = vmul.f32 %v738, %v988
      %v1032 = vmul.f32 %v743, %v990
      %v1033 = vmul.f32 %v748, %v992
      %v1034 = vmul.f32 %v753, %v994
      %v1035 = vld [vmem:[%s7] sm:$0xff]
      %v1036 = vld [vmem:[%s7 + $0x8] sm:$0xff]
      %v1037 = vld [vmem:[%s7 + $0x10] sm:$0xff]
      %v1038 = vld [vmem:[%s7 + $0x18] sm:$0xff]
      %v1039 = vld [vmem:[%s7 + $0x20] sm:$0xff]
      %v1040 = vld [vmem:[%s7 + $0x28] sm:$0xff]
      %v1041 = vld [vmem:[%s7 + $0x30] sm:$0xff]
      %v1042 = vld [vmem:[%s7 + $0x38] sm:$0xff]
      %v1043 = vld [vmem:[%s7 + $0x40] sm:$0xff]
      %v1044 = vld [vmem:[%s7 + $0x48] sm:$0xff]
      %v1045 = vld [vmem:[%s7 + $0x50] sm:$0xff]
      %v1046 = vld [vmem:[%s7 + $0x58] sm:$0xff]
      %v1047 = vld [vmem:[%s7 + $0x60] sm:$0xff]
      %v1048 = vld [vmem:[%s7 + $0x68] sm:$0xff]
      %v1049 = vld [vmem:[%s7 + $0x70] sm:$0xff]
      %v1050 = vld [vmem:[%s7 + $0x78] sm:$0xff]
      %v1051 = vld [vmem:[%s7 + $0x80] sm:$0xff]
      %v1052 = vld [vmem:[%s7 + $0x88] sm:$0xff]
      %v1053 = vld [vmem:[%s7 + $0x90] sm:$0xff]
      %v1054 = vld [vmem:[%s7 + $0x98] sm:$0xff]
      %v1055 = vld [vmem:[%s7 + $0xa0] sm:$0xff]
      %v1056 = vld [vmem:[%s7 + $0xa8] sm:$0xff]
      %v1057 = vld [vmem:[%s7 + $0xb0] sm:$0xff]
      %v1058 = vld [vmem:[%s7 + $0xb8] sm:$0xff]
      %v1059 = vld [vmem:[%s7 + $0xc0] sm:$0xff]
      %v1060 = vld [vmem:[%s7 + $0xc8] sm:$0xff]
      %v1061 = vld [vmem:[%s7 + $0xd0] sm:$0xff]
      %v1062 = vld [vmem:[%s7 + $0xd8] sm:$0xff]
      %v1063 = vld [vmem:[%s7 + $0xe0] sm:$0xff]
      %v1064 = vld [vmem:[%s7 + $0xe8] sm:$0xff]
      %v1065 = vld [vmem:[%s7 + $0xf0] sm:$0xff]
      %v1066 = vld [vmem:[%s7 + $0xf8] sm:$0xff]
      %1067 = vmatprep.subr.mxu0 0.0
      %1068 = vmatpush1.msra.mxu0 %v1066
      %1069 = vmatprep.subr.mxu0 0.0
      %1070 = vmatpush1.msra.mxu0 %v1065
      %1071 = vmatprep.subr.mxu0 0.0
      %1072 = vmatpush1.msra.mxu0 %v1064
      %1073 = vmatprep.subr.mxu0 0.0
      %1074 = vmatpush1.msra.mxu0 %v1063
      %1075 = vmatprep.subr.mxu0 0.0
      %1076 = vmatpush1.msra.mxu0 %v1062
      %1077 = vmatprep.subr.mxu0 0.0
      %1078 = vmatpush1.msra.mxu0 %v1061
      %1079 = vmatprep.subr.mxu0 0.0
      %1080 = vmatpush1.msra.mxu0 %v1060
      %1081 = vmatprep.subr.mxu0 0.0
      %1082 = vmatpush1.msra.mxu0 %v1059
      %1083 = vmatprep.subr.mxu0 0.0
      %1084 = vmatpush1.msra.mxu0 %v1058
      %1085 = vmatprep.subr.mxu0 0.0
      %1086 = vmatpush1.msra.mxu0 %v1057
      %1087 = vmatprep.subr.mxu0 0.0
      %1088 = vmatpush1.msra.mxu0 %v1056
      %1089 = vmatprep.subr.mxu0 0.0
      %1090 = vmatpush1.msra.mxu0 %v1055
      %1091 = vmatprep.subr.mxu0 0.0
      %1092 = vmatpush1.msra.mxu0 %v1054
      %1093 = vmatprep.subr.mxu0 0.0
      %1094 = vmatpush1.msra.mxu0 %v1053
      %1095 = vmatprep.subr.mxu0 0.0
      %1096 = vmatpush1.msra.mxu0 %v1052
      %1097 = vmatprep.subr.mxu0 0.0
      %1098 = vmatpush1.msra.mxu0 %v1051
      %1099 = vmatprep.subr.mxu0 0.0
      %1100 = vmatpush2.msra.mxu0 0.0
      %1101 = vmatprep.subr.mxu0 0.0
      %1102 = vmatpush2.msra.mxu0 0.0
      %1103 = vmatprep.subr.mxu0 0.0
      %1104 = vmatpush2.msra.mxu0 0.0
      %1105 = vmatprep.subr.mxu0 0.0
      %1106 = vmatpush2.msra.mxu0 0.0
      %1107 = vmatprep.subr.mxu0 0.0
      %1108 = vmatpush2.msra.mxu0 0.0
      %1109 = vmatprep.subr.mxu0 0.0
      %1110 = vmatpush2.msra.mxu0 0.0
      %1111 = vmatprep.subr.mxu0 0.0
      %1112 = vmatpush2.msra.mxu0 0.0
      %1113 = vmatprep.subr.mxu0 0.0
      %1114 = vmatpush2.msra.mxu0 0.0
      %1115 = vmatprep.subr.mxu0 0.0
      %1116 = vmatpush2.msra.mxu0 0.0
      %1117 = vmatprep.subr.mxu0 0.0
      %1118 = vmatpush2.msra.mxu0 0.0
      %1119 = vmatprep.subr.mxu0 0.0
      %1120 = vmatpush2.msra.mxu0 0.0
      %1121 = vmatprep.subr.mxu0 0.0
      %1122 = vmatpush2.msra.mxu0 0.0
      %1123 = vmatprep.subr.mxu0 0.0
      %1124 = vmatpush2.msra.mxu0 0.0
      %1125 = vmatprep.subr.mxu0 0.0
      %1126 = vmatpush2.msra.mxu0 0.0
      %1127 = vmatprep.subr.mxu0 0.0
      %1128 = vmatpush2.msra.mxu0 0.0
      %1129 = vmatprep.subr.mxu0 0.0
      %1130 = vmatpush2.msra.mxu0 0.0
      %1131 = vmatprep.mubr.f32.mxu0 0.0
      %1132 = vmatmul.mubr.f32.gmra.mxu0 %v1000
      %v1133 = vpop.f32.mrf.mxu0
      %v1134 = vadd.f32 0.0, %v1133
      %v1135 = vpop.f32.mrf.mxu0
      %1136 = vmatprep.mubr.f32.mxu0 0.0
      %1137 = vmatmul.mubr.f32.gmra.mxu0 %v1002
      %v1138 = vpop.f32.mrf.mxu0
      %v1139 = vadd.f32 0.0, %v1138
      %v1140 = vpop.f32.mrf.mxu0
      %1141 = vmatprep.mubr.f32.mxu0 0.0
      %1142 = vmatmul.mubr.f32.gmra.mxu0 %v1004
      %v1143 = vpop.f32.mrf.mxu0
      %v1144 = vadd.f32 0.0, %v1143
      %v1145 = vpop.f32.mrf.mxu0
      %1146 = vmatprep.mubr.f32.mxu0 0.0
      %1147 = vmatmul.mubr.f32.gmra.mxu0 %v1006
      %v1148 = vpop.f32.mrf.mxu0
      %v1149 = vadd.f32 0.0, %v1148
      %v1150 = vpop.f32.mrf.mxu0
      %1151 = vmatprep.mubr.f32.mxu0 0.0
      %1152 = vmatmul.mubr.f32.gmra.mxu0 %v1008
      %v1153 = vpop.f32.mrf.mxu0
      %v1154 = vadd.f32 0.0, %v1153
      %v1155 = vpop.f32.mrf.mxu0
      %1156 = vmatprep.mubr.f32.mxu0 0.0
      %1157 = vmatmul.mubr.f32.gmra.mxu0 %v1010
      %v1158 = vpop.f32.mrf.mxu0
      %v1159 = vadd.f32 0.0, %v1158
      %v1160 = vpop.f32.mrf.mxu0
      %1161 = vmatprep.mubr.f32.mxu0 0.0
      %1162 = vmatmul.mubr.f32.gmra.mxu0 %v1012
      %v1163 = vpop.f32.mrf.mxu0
      %v1164 = vadd.f32 0.0, %v1163
      %v1165 = vpop.f32.mrf.mxu0
      %1166 = vmatprep.mubr.f32.mxu0 0.0
      %1167 = vmatmul.mubr.f32.gmra.mxu0 %v1014
      %v1168 = vpop.f32.mrf.mxu0
      %v1169 = vadd.f32 0.0, %v1168
      %v1170 = vpop.f32.mrf.mxu0
      %1171 = vmatprep.mubr.f32.mxu0 0.0
      %1172 = vmatmul.mubr.f32.gmra.mxu0 %v1016
      %v1173 = vpop.f32.mrf.mxu0
      %v1174 = vadd.f32 0.0, %v1173
      %v1175 = vpop.f32.mrf.mxu0
      %1176 = vmatprep.mubr.f32.mxu0 0.0
      %1177 = vmatmul.mubr.f32.gmra.mxu0 %v1018
      %v1178 = vpop.f32.mrf.mxu0
      %v1179 = vadd.f32 0.0, %v1178
      %v1180 = vpop.f32.mrf.mxu0
      %1181 = vmatprep.mubr.f32.mxu0 0.0
      %1182 = vmatmul.mubr.f32.gmra.mxu0 %v1020
      %v1183 = vpop.f32.mrf.mxu0
      %v1184 = vadd.f32 0.0, %v1183
      %v1185 = vpop.f32.mrf.mxu0
      %1186 = vmatprep.mubr.f32.mxu0 0.0
      %1187 = vmatmul.mubr.f32.gmra.mxu0 %v1022
      %v1188 = vpop.f32.mrf.mxu0
      %v1189 = vadd.f32 0.0, %v1188
      %v1190 = vpop.f32.mrf.mxu0
      %1191 = vmatprep.mubr.f32.mxu0 0.0
      %1192 = vmatmul.mubr.f32.gmra.mxu0 %v1024
      %v1193 = vpop.f32.mrf.mxu0
      %v1194 = vadd.f32 0.0, %v1193
      %v1195 = vpop.f32.mrf.mxu0
      %1196 = vmatprep.mubr.f32.mxu0 0.0
      %1197 = vmatmul.mubr.f32.gmra.mxu0 %v1026
      %v1198 = vpop.f32.mrf.mxu0
      %v1199 = vadd.f32 0.0, %v1198
      %v1200 = vpop.f32.mrf.mxu0
      %1201 = vmatprep.mubr.f32.mxu0 0.0
      %1202 = vmatmul.mubr.f32.gmra.mxu0 %v1028
      %v1203 = vpop.f32.mrf.mxu0
      %v1204 = vadd.f32 0.0, %v1203
      %v1205 = vpop.f32.mrf.mxu0
      %1206 = vmatprep.mubr.f32.mxu0 0.0
      %1207 = vmatmul.mubr.f32.gmra.mxu0 %v1030
      %v1208 = vpop.f32.mrf.mxu0
      %v1209 = vadd.f32 0.0, %v1208
      %v1210 = vpop.f32.mrf.mxu0
      %1211 = vdwg.mxu0
      %1212 = vmatprep.subr.mxu0 0.0
      %1213 = vmatpush1.msra.mxu0 %v1050
      %1214 = vmatprep.subr.mxu0 0.0
      %1215 = vmatpush1.msra.mxu0 %v1049
      %1216 = vmatprep.subr.mxu0 0.0
      %1217 = vmatpush1.msra.mxu0 %v1048
      %1218 = vmatprep.subr.mxu0 0.0
      %1219 = vmatpush1.msra.mxu0 %v1047
      %1220 = vmatprep.subr.mxu0 0.0
      %1221 = vmatpush1.msra.mxu0 %v1046
      %1222 = vmatprep.subr.mxu0 0.0
      %1223 = vmatpush1.msra.mxu0 %v1045
      %1224 = vmatprep.subr.mxu0 0.0
      %1225 = vmatpush1.msra.mxu0 %v1044
      %1226 = vmatprep.subr.mxu0 0.0
      %1227 = vmatpush1.msra.mxu0 %v1043
      %1228 = vmatprep.subr.mxu0 0.0
      %1229 = vmatpush1.msra.mxu0 %v1042
      %1230 = vmatprep.subr.mxu0 0.0
      %1231 = vmatpush1.msra.mxu0 %v1041
      %1232 = vmatprep.subr.mxu0 0.0
      %1233 = vmatpush1.msra.mxu0 %v1040
      %1234 = vmatprep.subr.mxu0 0.0
      %1235 = vmatpush1.msra.mxu0 %v1039
      %1236 = vmatprep.subr.mxu0 0.0
      %1237 = vmatpush1.msra.mxu0 %v1038
      %1238 = vmatprep.subr.mxu0 0.0
      %1239 = vmatpush1.msra.mxu0 %v1037
      %1240 = vmatprep.subr.mxu0 0.0
      %1241 = vmatpush1.msra.mxu0 %v1036
      %1242 = vmatprep.subr.mxu0 0.0
      %1243 = vmatpush1.msra.mxu0 %v1035
      %1244 = vmatprep.subr.mxu0 0.0
      %1245 = vmatpush2.msra.mxu0 0.0
      %1246 = vmatprep.subr.mxu0 0.0
      %1247 = vmatpush2.msra.mxu0 0.0
      %1248 = vmatprep.subr.mxu0 0.0
      %1249 = vmatpush2.msra.mxu0 0.0
      %1250 = vmatprep.subr.mxu0 0.0
      %1251 = vmatpush2.msra.mxu0 0.0
      %1252 = vmatprep.subr.mxu0 0.0
      %1253 = vmatpush2.msra.mxu0 0.0
      %1254 = vmatprep.subr.mxu0 0.0
      %1255 = vmatpush2.msra.mxu0 0.0
      %1256 = vmatprep.subr.mxu0 0.0
      %1257 = vmatpush2.msra.mxu0 0.0
      %1258 = vmatprep.subr.mxu0 0.0
      %1259 = vmatpush2.msra.mxu0 0.0
      %1260 = vmatprep.subr.mxu0 0.0
      %1261 = vmatpush2.msra.mxu0 0.0
      %1262 = vmatprep.subr.mxu0 0.0
      %1263 = vmatpush2.msra.mxu0 0.0
      %1264 = vmatprep.subr.mxu0 0.0
      %1265 = vmatpush2.msra.mxu0 0.0
      %1266 = vmatprep.subr.mxu0 0.0
      %1267 = vmatpush2.msra.mxu0 0.0
      %1268 = vmatprep.subr.mxu0 0.0
      %1269 = vmatpush2.msra.mxu0 0.0
      %1270 = vmatprep.subr.mxu0 0.0
      %1271 = vmatpush2.msra.mxu0 0.0
      %1272 = vmatprep.subr.mxu0 0.0
      %1273 = vmatpush2.msra.mxu0 0.0
      %1274 = vmatprep.subr.mxu0 0.0
      %1275 = vmatpush2.msra.mxu0 0.0
      %1276 = vmatprep.mubr.f32.mxu0 0.0
      %1277 = vmatmul.mubr.f32.gmra.mxu0 %v999
      %v1278 = vpop.f32.mrf.mxu0
      %v1279 = vadd.f32 %v1134, %v1278
      %v1280 = vpop.f32.mrf.mxu0
      %1281 = vmatprep.mubr.f32.mxu0 0.0
      %1282 = vmatmul.mubr.f32.gmra.mxu0 %v1001
      %v1283 = vpop.f32.mrf.mxu0
      %v1284 = vadd.f32 %v1139, %v1283
      %v1285 = vpop.f32.mrf.mxu0
      %1286 = vmatprep.mubr.f32.mxu0 0.0
      %1287 = vmatmul.mubr.f32.gmra.mxu0 %v1003
      %v1288 = vpop.f32.mrf.mxu0
      %v1289 = vadd.f32 %v1144, %v1288
      %v1290 = vpop.f32.mrf.mxu0
      %1291 = vmatprep.mubr.f32.mxu0 0.0
      %1292 = vmatmul.mubr.f32.gmra.mxu0 %v1005
      %v1293 = vpop.f32.mrf.mxu0
      %v1294 = vadd.f32 %v1149, %v1293
      %v1295 = vpop.f32.mrf.mxu0
      %1296 = vmatprep.mubr.f32.mxu0 0.0
      %1297 = vmatmul.mubr.f32.gmra.mxu0 %v1007
      %v1298 = vpop.f32.mrf.mxu0
      %v1299 = vadd.f32 %v1154, %v1298
      %v1300 = vpop.f32.mrf.mxu0
      %1301 = vmatprep.mubr.f32.mxu0 0.0
      %1302 = vmatmul.mubr.f32.gmra.mxu0 %v1009
      %v1303 = vpop.f32.mrf.mxu0
      %v1304 = vadd.f32 %v1159, %v1303
      %v1305 = vpop.f32.mrf.mxu0
      %1306 = vmatprep.mubr.f32.mxu0 0.0
      %1307 = vmatmul.mubr.f32.gmra.mxu0 %v1011
      %v1308 = vpop.f32.mrf.mxu0
      %v1309 = vadd.f32 %v1164, %v1308
      %v1310 = vpop.f32.mrf.mxu0
      %1311 = vmatprep.mubr.f32.mxu0 0.0
      %1312 = vmatmul.mubr.f32.gmra.mxu0 %v1013
      %v1313 = vpop.f32.mrf.mxu0
      %v1314 = vadd.f32 %v1169, %v1313
      %v1315 = vpop.f32.mrf.mxu0
      %1316 = vmatprep.mubr.f32.mxu0 0.0
      %1317 = vmatmul.mubr.f32.gmra.mxu0 %v1015
      %v1318 = vpop.f32.mrf.mxu0
      %v1319 = vadd.f32 %v1174, %v1318
      %v1320 = vpop.f32.mrf.mxu0
      %1321 = vmatprep.mubr.f32.mxu0 0.0
      %1322 = vmatmul.mubr.f32.gmra.mxu0 %v1017
      %v1323 = vpop.f32.mrf.mxu0
      %v1324 = vadd.f32 %v1179, %v1323
      %v1325 = vpop.f32.mrf.mxu0
      %1326 = vmatprep.mubr.f32.mxu0 0.0
      %1327 = vmatmul.mubr.f32.gmra.mxu0 %v1019
      %v1328 = vpop.f32.mrf.mxu0
      %v1329 = vadd.f32 %v1184, %v1328
      %v1330 = vpop.f32.mrf.mxu0
      %1331 = vmatprep.mubr.f32.mxu0 0.0
      %1332 = vmatmul.mubr.f32.gmra.mxu0 %v1021
      %v1333 = vpop.f32.mrf.mxu0
      %v1334 = vadd.f32 %v1189, %v1333
      %v1335 = vpop.f32.mrf.mxu0
      %1336 = vmatprep.mubr.f32.mxu0 0.0
      %1337 = vmatmul.mubr.f32.gmra.mxu0 %v1023
      %v1338 = vpop.f32.mrf.mxu0
      %v1339 = vadd.f32 %v1194, %v1338
      %v1340 = vpop.f32.mrf.mxu0
      %1341 = vmatprep.mubr.f32.mxu0 0.0
      %1342 = vmatmul.mubr.f32.gmra.mxu0 %v1025
      %v1343 = vpop.f32.mrf.mxu0
      %v1344 = vadd.f32 %v1199, %v1343
      %v1345 = vpop.f32.mrf.mxu0
      %1346 = vmatprep.mubr.f32.mxu0 0.0
      %1347 = vmatmul.mubr.f32.gmra.mxu0 %v1027
      %v1348 = vpop.f32.mrf.mxu0
      %v1349 = vadd.f32 %v1204, %v1348
      %v1350 = vpop.f32.mrf.mxu0
      %1351 = vmatprep.mubr.f32.mxu0 0.0
      %1352 = vmatmul.mubr.f32.gmra.mxu0 %v1029
      %v1353 = vpop.f32.mrf.mxu0
      %v1354 = vadd.f32 %v1209, %v1353
      %v1355 = vpop.f32.mrf.mxu0
      %1356 = vdwg.mxu0
      %v1357 = vld [vmem:[%s3] sm:$0xff]
      %v1358 = vld [vmem:[%s3 + $0x8] sm:$0xff]
      %v1359 = vld [vmem:[%s3 + $0x10] sm:$0xff]
      %v1360 = vld [vmem:[%s3 + $0x18] sm:$0xff]
      %v1361 = vld [vmem:[%s3 + $0x20] sm:$0xff]
      %v1362 = vld [vmem:[%s3 + $0x28] sm:$0xff]
      %v1363 = vld [vmem:[%s3 + $0x30] sm:$0xff]
      %v1364 = vld [vmem:[%s3 + $0x38] sm:$0xff]
      %v1365 = vld [vmem:[%s3 + $0x40] sm:$0xff]
      %v1366 = vld [vmem:[%s3 + $0x48] sm:$0xff]
      %v1367 = vld [vmem:[%s3 + $0x50] sm:$0xff]
      %v1368 = vld [vmem:[%s3 + $0x58] sm:$0xff]
      %v1369 = vld [vmem:[%s3 + $0x60] sm:$0xff]
      %v1370 = vld [vmem:[%s3 + $0x68] sm:$0xff]
      %v1371 = vld [vmem:[%s3 + $0x70] sm:$0xff]
      %v1372 = vld [vmem:[%s3 + $0x78] sm:$0xff]
      %v1373 = vld [vmem:[%s3 + $0x80] sm:$0xff]
      %v1374 = vld [vmem:[%s3 + $0x88] sm:$0xff]
      %v1375 = vld [vmem:[%s3 + $0x90] sm:$0xff]
      %v1376 = vld [vmem:[%s3 + $0x98] sm:$0xff]
      %v1377 = vld [vmem:[%s3 + $0xa0] sm:$0xff]
      %v1378 = vld [vmem:[%s3 + $0xa8] sm:$0xff]
      %v1379 = vld [vmem:[%s3 + $0xb0] sm:$0xff]
      %v1380 = vld [vmem:[%s3 + $0xb8] sm:$0xff]
      %v1381 = vld [vmem:[%s3 + $0xc0] sm:$0xff]
      %v1382 = vld [vmem:[%s3 + $0xc8] sm:$0xff]
      %v1383 = vld [vmem:[%s3 + $0xd0] sm:$0xff]
      %v1384 = vld [vmem:[%s3 + $0xd8] sm:$0xff]
      %v1385 = vld [vmem:[%s3 + $0xe0] sm:$0xff]
      %v1386 = vld [vmem:[%s3 + $0xe8] sm:$0xff]
      %v1387 = vld [vmem:[%s3 + $0xf0] sm:$0xff]
      %v1388 = vld [vmem:[%s3 + $0xf8] sm:$0xff]
      %v1389 = vld [vmem:[%s3 + $0x100] sm:$0xff]
      %v1390 = vld [vmem:[%s3 + $0x108] sm:$0xff]
      %v1391 = vld [vmem:[%s3 + $0x110] sm:$0xff]
      %v1392 = vld [vmem:[%s3 + $0x118] sm:$0xff]
      %v1393 = vld [vmem:[%s3 + $0x120] sm:$0xff]
      %v1394 = vld [vmem:[%s3 + $0x128] sm:$0xff]
      %v1395 = vld [vmem:[%s3 + $0x130] sm:$0xff]
      %v1396 = vld [vmem:[%s3 + $0x138] sm:$0xff]
      %v1397 = vld [vmem:[%s3 + $0x140] sm:$0xff]
      %v1398 = vld [vmem:[%s3 + $0x148] sm:$0xff]
      %v1399 = vld [vmem:[%s3 + $0x150] sm:$0xff]
      %v1400 = vld [vmem:[%s3 + $0x158] sm:$0xff]
      %v1401 = vld [vmem:[%s3 + $0x160] sm:$0xff]
      %v1402 = vld [vmem:[%s3 + $0x168] sm:$0xff]
      %v1403 = vld [vmem:[%s3 + $0x170] sm:$0xff]
      %v1404 = vld [vmem:[%s3 + $0x178] sm:$0xff]
      %v1405 = vld [vmem:[%s3 + $0x180] sm:$0xff]
      %v1406 = vld [vmem:[%s3 + $0x188] sm:$0xff]
      %v1407 = vld [vmem:[%s3 + $0x190] sm:$0xff]
      %v1408 = vld [vmem:[%s3 + $0x198] sm:$0xff]
      %v1409 = vld [vmem:[%s3 + $0x1a0] sm:$0xff]
      %v1410 = vld [vmem:[%s3 + $0x1a8] sm:$0xff]
      %v1411 = vld [vmem:[%s3 + $0x1b0] sm:$0xff]
      %v1412 = vld [vmem:[%s3 + $0x1b8] sm:$0xff]
      %v1413 = vld [vmem:[%s3 + $0x1c0] sm:$0xff]
      %v1414 = vld [vmem:[%s3 + $0x1c8] sm:$0xff]
      %v1415 = vld [vmem:[%s3 + $0x1d0] sm:$0xff]
      %v1416 = vld [vmem:[%s3 + $0x1d8] sm:$0xff]
      %v1417 = vld [vmem:[%s3 + $0x1e0] sm:$0xff]
      %v1418 = vld [vmem:[%s3 + $0x1e8] sm:$0xff]
      %v1419 = vld [vmem:[%s3 + $0x1f0] sm:$0xff]
      %v1420 = vld [vmem:[%s3 + $0x1f8] sm:$0xff]
      %v1421 = vld [vmem:[%s3 + $0x200] sm:$0xff]
      %v1422 = vld [vmem:[%s3 + $0x208] sm:$0xff]
      %v1423 = vld [vmem:[%s3 + $0x210] sm:$0xff]
      %v1424 = vld [vmem:[%s3 + $0x218] sm:$0xff]
      %v1425 = vld [vmem:[%s3 + $0x220] sm:$0xff]
      %v1426 = vld [vmem:[%s3 + $0x228] sm:$0xff]
      %v1427 = vld [vmem:[%s3 + $0x230] sm:$0xff]
      %v1428 = vld [vmem:[%s3 + $0x238] sm:$0xff]
      %v1429 = vld [vmem:[%s3 + $0x240] sm:$0xff]
      %v1430 = vld [vmem:[%s3 + $0x248] sm:$0xff]
      %v1431 = vld [vmem:[%s3 + $0x250] sm:$0xff]
      %v1432 = vld [vmem:[%s3 + $0x258] sm:$0xff]
      %v1433 = vld [vmem:[%s3 + $0x260] sm:$0xff]
      %v1434 = vld [vmem:[%s3 + $0x268] sm:$0xff]
      %v1435 = vld [vmem:[%s3 + $0x270] sm:$0xff]
      %v1436 = vld [vmem:[%s3 + $0x278] sm:$0xff]
      %v1437 = vld [vmem:[%s3 + $0x280] sm:$0xff]
      %v1438 = vld [vmem:[%s3 + $0x288] sm:$0xff]
      %v1439 = vld [vmem:[%s3 + $0x290] sm:$0xff]
      %v1440 = vld [vmem:[%s3 + $0x298] sm:$0xff]
      %v1441 = vld [vmem:[%s3 + $0x2a0] sm:$0xff]
      %v1442 = vld [vmem:[%s3 + $0x2a8] sm:$0xff]
      %v1443 = vld [vmem:[%s3 + $0x2b0] sm:$0xff]
      %v1444 = vld [vmem:[%s3 + $0x2b8] sm:$0xff]
      %v1445 = vld [vmem:[%s3 + $0x2c0] sm:$0xff]
      %v1446 = vld [vmem:[%s3 + $0x2c8] sm:$0xff]
      %v1447 = vld [vmem:[%s3 + $0x2d0] sm:$0xff]
      %v1448 = vld [vmem:[%s3 + $0x2d8] sm:$0xff]
      %v1449 = vld [vmem:[%s3 + $0x2e0] sm:$0xff]
      %v1450 = vld [vmem:[%s3 + $0x2e8] sm:$0xff]
      %v1451 = vld [vmem:[%s3 + $0x2f0] sm:$0xff]
      %v1452 = vld [vmem:[%s3 + $0x2f8] sm:$0xff]
      %v1453 = vld [vmem:[%s3 + $0x300] sm:$0xff]
      %v1454 = vld [vmem:[%s3 + $0x308] sm:$0xff]
      %v1455 = vld [vmem:[%s3 + $0x310] sm:$0xff]
      %v1456 = vld [vmem:[%s3 + $0x318] sm:$0xff]
      %v1457 = vld [vmem:[%s3 + $0x320] sm:$0xff]
      %v1458 = vld [vmem:[%s3 + $0x328] sm:$0xff]
      %v1459 = vld [vmem:[%s3 + $0x330] sm:$0xff]
      %v1460 = vld [vmem:[%s3 + $0x338] sm:$0xff]
      %v1461 = vld [vmem:[%s3 + $0x340] sm:$0xff]
      %v1462 = vld [vmem:[%s3 + $0x348] sm:$0xff]
      %v1463 = vld [vmem:[%s3 + $0x350] sm:$0xff]
      %v1464 = vld [vmem:[%s3 + $0x358] sm:$0xff]
      %v1465 = vld [vmem:[%s3 + $0x360] sm:$0xff]
      %v1466 = vld [vmem:[%s3 + $0x368] sm:$0xff]
      %v1467 = vld [vmem:[%s3 + $0x370] sm:$0xff]
      %v1468 = vld [vmem:[%s3 + $0x378] sm:$0xff]
      %v1469 = vld [vmem:[%s3 + $0x380] sm:$0xff]
      %v1470 = vld [vmem:[%s3 + $0x388] sm:$0xff]
      %v1471 = vld [vmem:[%s3 + $0x390] sm:$0xff]
      %v1472 = vld [vmem:[%s3 + $0x398] sm:$0xff]
      %v1473 = vld [vmem:[%s3 + $0x3a0] sm:$0xff]
      %v1474 = vld [vmem:[%s3 + $0x3a8] sm:$0xff]
      %v1475 = vld [vmem:[%s3 + $0x3b0] sm:$0xff]
      %v1476 = vld [vmem:[%s3 + $0x3b8] sm:$0xff]
      %v1477 = vld [vmem:[%s3 + $0x3c0] sm:$0xff]
      %v1478 = vld [vmem:[%s3 + $0x3c8] sm:$0xff]
      %v1479 = vld [vmem:[%s3 + $0x3d0] sm:$0xff]
      %v1480 = vld [vmem:[%s3 + $0x3d8] sm:$0xff]
      %v1481 = vld [vmem:[%s3 + $0x3e0] sm:$0xff]
      %v1482 = vld [vmem:[%s3 + $0x3e8] sm:$0xff]
      %v1483 = vld [vmem:[%s3 + $0x3f0] sm:$0xff]
      %v1484 = vld [vmem:[%s3 + $0x3f8] sm:$0xff]
      %v1485 = vld [vmem:[%s3 + $0x400] sm:$0xff]
      %v1486 = vld [vmem:[%s3 + $0x408] sm:$0xff]
      %v1487 = vld [vmem:[%s3 + $0x410] sm:$0xff]
      %v1488 = vld [vmem:[%s3 + $0x418] sm:$0xff]
      %v1489 = vld [vmem:[%s3 + $0x420] sm:$0xff]
      %v1490 = vld [vmem:[%s3 + $0x428] sm:$0xff]
      %v1491 = vld [vmem:[%s3 + $0x430] sm:$0xff]
      %v1492 = vld [vmem:[%s3 + $0x438] sm:$0xff]
      %v1493 = vld [vmem:[%s3 + $0x440] sm:$0xff]
      %v1494 = vld [vmem:[%s3 + $0x448] sm:$0xff]
      %v1495 = vld [vmem:[%s3 + $0x450] sm:$0xff]
      %v1496 = vld [vmem:[%s3 + $0x458] sm:$0xff]
      %v1497 = vld [vmem:[%s3 + $0x460] sm:$0xff]
      %v1498 = vld [vmem:[%s3 + $0x468] sm:$0xff]
      %v1499 = vld [vmem:[%s3 + $0x470] sm:$0xff]
      %v1500 = vld [vmem:[%s3 + $0x478] sm:$0xff]
      %v1501 = vld [vmem:[%s4] sm:$0x1]
      %v1502 = vmul.f32 %v995, %v429
      %v1503 = vmul.f32 %v996, %v429
      %v1504 = vmul.f32 %v997, %v433
      %v1505 = vmul.f32 %v998, %v433
      %v1506 = vmul.f32 %v1000, %v437
      %v1507 = vmul.f32 %v1002, %v437
      %v1508 = vmul.f32 %v1004, %v441
      %v1509 = vmul.f32 %v1006, %v441
      %v1510 = vmul.f32 %v1008, %v445
      %v1511 = vmul.f32 %v1010, %v445
      %v1512 = vmul.f32 %v1012, %v449
      %v1513 = vmul.f32 %v1014, %v449
      %v1514 = vmul.f32 %v1016, %v453
      %v1515 = vmul.f32 %v1018, %v453
      %v1516 = vmul.f32 %v1020, %v457
      %v1517 = vmul.f32 %v1022, %v457
      %v1518 = vmul.f32 %v1024, %v461
      %v1519 = vmul.f32 %v1026, %v461
      %v1520 = vmul.f32 %v1028, %v465
      %v1521 = vmul.f32 %v1030, %v465
      %v1522 = vmul.f32 %v1031, %v469
      %v1523 = vmul.f32 %v1032, %v469
      %v1524 = vmul.f32 %v1033, %v473
      %v1525 = vmul.f32 %v1034, %v473
      %s1526 = scalar_lea.vmem [#allocation2], 32
      %1527 = vst [vmem:[%s1526 + $0x8] sm:$0xff] %v1502
      %1528 = vst [vmem:[%s1526 + $0x10] sm:$0xff] %v1503
      %1529 = vst [vmem:[%s1526 + $0x28] sm:$0xff] %v1504
      %1530 = vst [vmem:[%s1526 + $0x30] sm:$0xff] %v1505
      %1531 = vst [vmem:[%s1526 + $0x48] sm:$0xff] %v1506
      %1532 = vst [vmem:[%s1526 + $0x50] sm:$0xff] %v1507
      %1533 = vst [vmem:[%s1526 + $0x68] sm:$0xff] %v1508
      %1534 = vst [vmem:[%s1526 + $0x70] sm:$0xff] %v1509
      %1535 = vst [vmem:[%s1526 + $0x88] sm:$0xff] %v1510
      %1536 = vst [vmem:[%s1526 + $0x90] sm:$0xff] %v1511
      %1537 = vst [vmem:[%s1526 + $0xa8] sm:$0xff] %v1512
      %1538 = vst [vmem:[%s1526 + $0xb0] sm:$0xff] %v1513
      %1539 = vst [vmem:[%s1526 + $0xc8] sm:$0xff] %v1514
      %1540 = vst [vmem:[%s1526 + $0xd0] sm:$0xff] %v1515
      %1541 = vst [vmem:[%s1526 + $0xe8] sm:$0xff] %v1516
      %1542 = vst [vmem:[%s1526 + $0xf0] sm:$0xff] %v1517
      %1543 = vst [vmem:[%s1526 + $0x108] sm:$0xff] %v1518
      %1544 = vst [vmem:[%s1526 + $0x110] sm:$0xff] %v1519
      %1545 = vst [vmem:[%s1526 + $0x128] sm:$0xff] %v1520
      %1546 = vst [vmem:[%s1526 + $0x130] sm:$0xff] %v1521
      %1547 = vst [vmem:[%s1526 + $0x148] sm:$0xff] %v1522
      %1548 = vst [vmem:[%s1526 + $0x150] sm:$0xff] %v1523
      %1549 = vst [vmem:[%s1526 + $0x168] sm:$0xff] %v1524
      %1550 = vst [vmem:[%s1526 + $0x170] sm:$0xff] %v1525
      %v1551 = vld [vmem:[#allocation2 + $0x7] sm:$0xff]
      %v1552 = vld [vmem:[#allocation2 + $0xf] sm:$0xff]
      %v1553 = vld [vmem:[#allocation2 + $0x27] sm:$0xff]
      %v1554 = vld [vmem:[#allocation2 + $0x2f] sm:$0xff]
      %v1555 = vld [vmem:[#allocation2 + $0x47] sm:$0xff]
      %v1556 = vld [vmem:[#allocation2 + $0x4f] sm:$0xff]
      %v1557 = vld [vmem:[#allocation2 + $0x67] sm:$0xff]
      %v1558 = vld [vmem:[#allocation2 + $0x6f] sm:$0xff]
      %v1559 = vld [vmem:[#allocation2 + $0x87] sm:$0xff]
      %v1560 = vld [vmem:[#allocation2 + $0x8f] sm:$0xff]
      %v1561 = vld [vmem:[#allocation2 + $0xa7] sm:$0xff]
      %v1562 = vld [vmem:[#allocation2 + $0xaf] sm:$0xff]
      %v1563 = vld [vmem:[#allocation2 + $0xc7] sm:$0xff]
      %v1564 = vld [vmem:[#allocation2 + $0xcf] sm:$0xff]
      %v1565 = vld [vmem:[#allocation2 + $0xe7] sm:$0xff]
      %v1566 = vld [vmem:[#allocation2 + $0xef] sm:$0xff]
      %v1567 = vld [vmem:[#allocation2 + $0x107] sm:$0xff]
      %v1568 = vld [vmem:[#allocation2 + $0x10f] sm:$0xff]
      %v1569 = vld [vmem:[#allocation2 + $0x127] sm:$0xff]
      %v1570 = vld [vmem:[#allocation2 + $0x12f] sm:$0xff]
      %v1571 = vld [vmem:[#allocation2 + $0x147] sm:$0xff]
      %v1572 = vld [vmem:[#allocation2 + $0x14f] sm:$0xff]
      %v1573 = vld [vmem:[#allocation2 + $0x167] sm:$0xff]
      %v1574 = vld [vmem:[#allocation2 + $0x16f] sm:$0xff]
      %v1575 = vld [vmem:[#allocation2 + $0x8] sm:$0xff]
      %v1576 = vld [vmem:[#allocation2 + $0x10] sm:$0xff]
      %v1577 = vld [vmem:[#allocation2 + $0x28] sm:$0xff]
      %v1578 = vld [vmem:[#allocation2 + $0x30] sm:$0xff]
      %v1579 = vld [vmem:[#allocation2 + $0x48] sm:$0xff]
      %v1580 = vld [vmem:[#allocation2 + $0x50] sm:$0xff]
      %v1581 = vld [vmem:[#allocation2 + $0x68] sm:$0xff]
      %v1582 = vld [vmem:[#allocation2 + $0x70] sm:$0xff]
      %v1583 = vld [vmem:[#allocation2 + $0x88] sm:$0xff]
      %v1584 = vld [vmem:[#allocation2 + $0x90] sm:$0xff]
      %v1585 = vld [vmem:[#allocation2 + $0xa8] sm:$0xff]
      %v1586 = vld [vmem:[#allocation2 + $0xb0] sm:$0xff]
      %v1587 = vld [vmem:[#allocation2 + $0xc8] sm:$0xff]
      %v1588 = vld [vmem:[#allocation2 + $0xd0] sm:$0xff]
      %v1589 = vld [vmem:[#allocation2 + $0xe8] sm:$0xff]
      %v1590 = vld [vmem:[#allocation2 + $0xf0] sm:$0xff]
      %v1591 = vld [vmem:[#allocation2 + $0x108] sm:$0xff]
      %v1592 = vld [vmem:[#allocation2 + $0x110] sm:$0xff]
      %v1593 = vld [vmem:[#allocation2 + $0x128] sm:$0xff]
      %v1594 = vld [vmem:[#allocation2 + $0x130] sm:$0xff]
      %v1595 = vld [vmem:[#allocation2 + $0x148] sm:$0xff]
      %v1596 = vld [vmem:[#allocation2 + $0x150] sm:$0xff]
      %v1597 = vld [vmem:[#allocation2 + $0x168] sm:$0xff]
      %v1598 = vld [vmem:[#allocation2 + $0x170] sm:$0xff]
      %v1599 = vld [vmem:[#allocation2 + $0x9] sm:$0xff]
      %v1600 = vld [vmem:[#allocation2 + $0x11] sm:$0xff]
      %v1601 = vld [vmem:[#allocation2 + $0x29] sm:$0xff]
      %v1602 = vld [vmem:[#allocation2 + $0x31] sm:$0xff]
      %v1603 = vld [vmem:[#allocation2 + $0x49] sm:$0xff]
      %v1604 = vld [vmem:[#allocation2 + $0x51] sm:$0xff]
      %v1605 = vld [vmem:[#allocation2 + $0x69] sm:$0xff]
      %v1606 = vld [vmem:[#allocation2 + $0x71] sm:$0xff]
      %v1607 = vld [vmem:[#allocation2 + $0x89] sm:$0xff]
      %v1608 = vld [vmem:[#allocation2 + $0x91] sm:$0xff]
      %v1609 = vld [vmem:[#allocation2 + $0xa9] sm:$0xff]
      %v1610 = vld [vmem:[#allocation2 + $0xb1] sm:$0xff]
      %v1611 = vld [vmem:[#allocation2 + $0xc9] sm:$0xff]
      %v1612 = vld [vmem:[#allocation2 + $0xd1] sm:$0xff]
      %v1613 = vld [vmem:[#allocation2 + $0xe9] sm:$0xff]
      %v1614 = vld [vmem:[#allocation2 + $0xf1] sm:$0xff]
      %v1615 = vld [vmem:[#allocation2 + $0x109] sm:$0xff]
      %v1616 = vld [vmem:[#allocation2 + $0x111] sm:$0xff]
      %v1617 = vld [vmem:[#allocation2 + $0x129] sm:$0xff]
      %v1618 = vld [vmem:[#allocation2 + $0x131] sm:$0xff]
      %v1619 = vld [vmem:[#allocation2 + $0x149] sm:$0xff]
      %v1620 = vld [vmem:[#allocation2 + $0x151] sm:$0xff]
      %v1621 = vld [vmem:[#allocation2 + $0x169] sm:$0xff]
      %v1622 = vld [vmem:[#allocation2 + $0x171] sm:$0xff]
      %v1623 = vld [vmem:[%s1526 + $0x7] sm:$0xff]
      %v1624 = vld [vmem:[%s1526 + $0xf] sm:$0xff]
      %v1625 = vld [vmem:[%s1526 + $0x27] sm:$0xff]
      %v1626 = vld [vmem:[%s1526 + $0x2f] sm:$0xff]
      %v1627 = vld [vmem:[%s1526 + $0x47] sm:$0xff]
      %v1628 = vld [vmem:[%s1526 + $0x4f] sm:$0xff]
      %v1629 = vld [vmem:[%s1526 + $0x67] sm:$0xff]
      %v1630 = vld [vmem:[%s1526 + $0x6f] sm:$0xff]
      %v1631 = vld [vmem:[%s1526 + $0x87] sm:$0xff]
      %v1632 = vld [vmem:[%s1526 + $0x8f] sm:$0xff]
      %v1633 = vld [vmem:[%s1526 + $0xa7] sm:$0xff]
      %v1634 = vld [vmem:[%s1526 + $0xaf] sm:$0xff]
      %v1635 = vld [vmem:[%s1526 + $0xc7] sm:$0xff]
      %v1636 = vld [vmem:[%s1526 + $0xcf] sm:$0xff]
      %v1637 = vld [vmem:[%s1526 + $0xe7] sm:$0xff]
      %v1638 = vld [vmem:[%s1526 + $0xef] sm:$0xff]
      %v1639 = vld [vmem:[%s1526 + $0x107] sm:$0xff]
      %v1640 = vld [vmem:[%s1526 + $0x10f] sm:$0xff]
      %v1641 = vld [vmem:[%s1526 + $0x127] sm:$0xff]
      %v1642 = vld [vmem:[%s1526 + $0x12f] sm:$0xff]
      %v1643 = vld [vmem:[%s1526 + $0x147] sm:$0xff]
      %v1644 = vld [vmem:[%s1526 + $0x14f] sm:$0xff]
      %v1645 = vld [vmem:[%s1526 + $0x167] sm:$0xff]
      %v1646 = vld [vmem:[%s1526 + $0x16f] sm:$0xff]
      %v1647 = vld [vmem:[%s1526 + $0x8] sm:$0xff]
      %v1648 = vld [vmem:[%s1526 + $0x10] sm:$0xff]
      %v1649 = vld [vmem:[%s1526 + $0x28] sm:$0xff]
      %v1650 = vld [vmem:[%s1526 + $0x30] sm:$0xff]
      %v1651 = vld [vmem:[%s1526 + $0x48] sm:$0xff]
      %v1652 = vld [vmem:[%s1526 + $0x50] sm:$0xff]
      %v1653 = vld [vmem:[%s1526 + $0x68] sm:$0xff]
      %v1654 = vld [vmem:[%s1526 + $0x70] sm:$0xff]
      %v1655 = vld [vmem:[%s1526 + $0x88] sm:$0xff]
      %v1656 = vld [vmem:[%s1526 + $0x90] sm:$0xff]
      %v1657 = vld [vmem:[%s1526 + $0xa8] sm:$0xff]
      %v1658 = vld [vmem:[%s1526 + $0xb0] sm:$0xff]
      %v1659 = vld [vmem:[%s1526 + $0xc8] sm:$0xff]
      %v1660 = vld [vmem:[%s1526 + $0xd0] sm:$0xff]
      %v1661 = vld [vmem:[%s1526 + $0xe8] sm:$0xff]
      %v1662 = vld [vmem:[%s1526 + $0xf0] sm:$0xff]
      %v1663 = vld [vmem:[%s1526 + $0x108] sm:$0xff]
      %v1664 = vld [vmem:[%s1526 + $0x110] sm:$0xff]
      %v1665 = vld [vmem:[%s1526 + $0x128] sm:$0xff]
      %v1666 = vld [vmem:[%s1526 + $0x130] sm:$0xff]
      %v1667 = vld [vmem:[%s1526 + $0x148] sm:$0xff]
      %v1668 = vld [vmem:[%s1526 + $0x150] sm:$0xff]
      %v1669 = vld [vmem:[%s1526 + $0x168] sm:$0xff]
      %v1670 = vld [vmem:[%s1526 + $0x170] sm:$0xff]
      %v1671 = vld [vmem:[%s1526 + $0x9] sm:$0xff]
      %v1672 = vld [vmem:[%s1526 + $0x11] sm:$0xff]
      %v1673 = vld [vmem:[%s1526 + $0x29] sm:$0xff]
      %v1674 = vld [vmem:[%s1526 + $0x31] sm:$0xff]
      %v1675 = vld [vmem:[%s1526 + $0x49] sm:$0xff]
      %v1676 = vld [vmem:[%s1526 + $0x51] sm:$0xff]
      %v1677 = vld [vmem:[%s1526 + $0x69] sm:$0xff]
      %v1678 = vld [vmem:[%s1526 + $0x71] sm:$0xff]
      %v1679 = vld [vmem:[%s1526 + $0x89] sm:$0xff]
      %v1680 = vld [vmem:[%s1526 + $0x91] sm:$0xff]
      %v1681 = vld [vmem:[%s1526 + $0xa9] sm:$0xff]
      %v1682 = vld [vmem:[%s1526 + $0xb1] sm:$0xff]
      %v1683 = vld [vmem:[%s1526 + $0xc9] sm:$0xff]
      %v1684 = vld [vmem:[%s1526 + $0xd1] sm:$0xff]
      %v1685 = vld [vmem:[%s1526 + $0xe9] sm:$0xff]
      %v1686 = vld [vmem:[%s1526 + $0xf1] sm:$0xff]
      %v1687 = vld [vmem:[%s1526 + $0x109] sm:$0xff]
      %v1688 = vld [vmem:[%s1526 + $0x111] sm:$0xff]
      %v1689 = vld [vmem:[%s1526 + $0x129] sm:$0xff]
      %v1690 = vld [vmem:[%s1526 + $0x131] sm:$0xff]
      %v1691 = vld [vmem:[%s1526 + $0x149] sm:$0xff]
      %v1692 = vld [vmem:[%s1526 + $0x151] sm:$0xff]
      %v1693 = vld [vmem:[%s1526 + $0x169] sm:$0xff]
      %v1694 = vld [vmem:[%s1526 + $0x171] sm:$0xff]
      %s1695 = scalar_lea.vmem [#allocation2], 64
      %v1696 = vld [vmem:[%s1695 + $0x7] sm:$0xff]
      %v1697 = vld [vmem:[%s1695 + $0xf] sm:$0xff]
      %v1698 = vld [vmem:[%s1695 + $0x27] sm:$0xff]
      %v1699 = vld [vmem:[%s1695 + $0x2f] sm:$0xff]
      %v1700 = vld [vmem:[%s1695 + $0x47] sm:$0xff]
      %v1701 = vld [vmem:[%s1695 + $0x4f] sm:$0xff]
      %v1702 = vld [vmem:[%s1695 + $0x67] sm:$0xff]
      %v1703 = vld [vmem:[%s1695 + $0x6f] sm:$0xff]
      %v1704 = vld [vmem:[%s1695 + $0x87] sm:$0xff]
      %v1705 = vld [vmem:[%s1695 + $0x8f] sm:$0xff]
      %v1706 = vld [vmem:[%s1695 + $0xa7] sm:$0xff]
      %v1707 = vld [vmem:[%s1695 + $0xaf] sm:$0xff]
      %v1708 = vld [vmem:[%s1695 + $0xc7] sm:$0xff]
      %v1709 = vld [vmem:[%s1695 + $0xcf] sm:$0xff]
      %v1710 = vld [vmem:[%s1695 + $0xe7] sm:$0xff]
      %v1711 = vld [vmem:[%s1695 + $0xef] sm:$0xff]
      %v1712 = vld [vmem:[%s1695 + $0x107] sm:$0xff]
      %v1713 = vld [vmem:[%s1695 + $0x10f] sm:$0xff]
      %v1714 = vld [vmem:[%s1695 + $0x127] sm:$0xff]
      %v1715 = vld [vmem:[%s1695 + $0x12f] sm:$0xff]
      %v1716 = vld [vmem:[%s1695 + $0x147] sm:$0xff]
      %v1717 = vld [vmem:[%s1695 + $0x14f] sm:$0xff]
      %v1718 = vld [vmem:[%s1695 + $0x167] sm:$0xff]
      %v1719 = vld [vmem:[%s1695 + $0x16f] sm:$0xff]
      %v1720 = vld [vmem:[%s1695 + $0x8] sm:$0xff]
      %v1721 = vld [vmem:[%s1695 + $0x10] sm:$0xff]
      %v1722 = vld [vmem:[%s1695 + $0x28] sm:$0xff]
      %v1723 = vld [vmem:[%s1695 + $0x30] sm:$0xff]
      %v1724 = vld [vmem:[%s1695 + $0x48] sm:$0xff]
      %v1725 = vld [vmem:[%s1695 + $0x50] sm:$0xff]
      %v1726 = vld [vmem:[%s1695 + $0x68] sm:$0xff]
      %v1727 = vld [vmem:[%s1695 + $0x70] sm:$0xff]
      %v1728 = vld [vmem:[%s1695 + $0x88] sm:$0xff]
      %v1729 = vld [vmem:[%s1695 + $0x90] sm:$0xff]
      %v1730 = vld [vmem:[%s1695 + $0xa8] sm:$0xff]
      %v1731 = vld [vmem:[%s1695 + $0xb0] sm:$0xff]
      %v1732 = vld [vmem:[%s1695 + $0xc8] sm:$0xff]
      %v1733 = vld [vmem:[%s1695 + $0xd0] sm:$0xff]
      %v1734 = vld [vmem:[%s1695 + $0xe8] sm:$0xff]
      %v1735 = vld [vmem:[%s1695 + $0xf0] sm:$0xff]
      %v1736 = vld [vmem:[%s1695 + $0x108] sm:$0xff]
      %v1737 = vld [vmem:[%s1695 + $0x110] sm:$0xff]
      %v1738 = vld [vmem:[%s1695 + $0x128] sm:$0xff]
      %v1739 = vld [vmem:[%s1695 + $0x130] sm:$0xff]
      %v1740 = vld [vmem:[%s1695 + $0x148] sm:$0xff]
      %v1741 = vld [vmem:[%s1695 + $0x150] sm:$0xff]
      %v1742 = vld [vmem:[%s1695 + $0x168] sm:$0xff]
      %v1743 = vld [vmem:[%s1695 + $0x170] sm:$0xff]
      %v1744 = vld [vmem:[%s1695 + $0x9] sm:$0xff]
      %v1745 = vld [vmem:[%s1695 + $0x11] sm:$0xff]
      %v1746 = vld [vmem:[%s1695 + $0x29] sm:$0xff]
      %v1747 = vld [vmem:[%s1695 + $0x31] sm:$0xff]
      %v1748 = vld [vmem:[%s1695 + $0x49] sm:$0xff]
      %v1749 = vld [vmem:[%s1695 + $0x51] sm:$0xff]
      %v1750 = vld [vmem:[%s1695 + $0x69] sm:$0xff]
      %v1751 = vld [vmem:[%s1695 + $0x71] sm:$0xff]
      %v1752 = vld [vmem:[%s1695 + $0x89] sm:$0xff]
      %v1753 = vld [vmem:[%s1695 + $0x91] sm:$0xff]
      %v1754 = vld [vmem:[%s1695 + $0xa9] sm:$0xff]
      %v1755 = vld [vmem:[%s1695 + $0xb1] sm:$0xff]
      %v1756 = vld [vmem:[%s1695 + $0xc9] sm:$0xff]
      %v1757 = vld [vmem:[%s1695 + $0xd1] sm:$0xff]
      %v1758 = vld [vmem:[%s1695 + $0xe9] sm:$0xff]
      %v1759 = vld [vmem:[%s1695 + $0xf1] sm:$0xff]
      %v1760 = vld [vmem:[%s1695 + $0x109] sm:$0xff]
      %v1761 = vld [vmem:[%s1695 + $0x111] sm:$0xff]
      %v1762 = vld [vmem:[%s1695 + $0x129] sm:$0xff]
      %v1763 = vld [vmem:[%s1695 + $0x131] sm:$0xff]
      %v1764 = vld [vmem:[%s1695 + $0x149] sm:$0xff]
      %v1765 = vld [vmem:[%s1695 + $0x151] sm:$0xff]
      %v1766 = vld [vmem:[%s1695 + $0x169] sm:$0xff]
      %v1767 = vld [vmem:[%s1695 + $0x171] sm:$0xff]
      %v1769 = vlaneseq
      %v1770 = vshrl.u32 %v1769, 7
      %v1771 = vsub.s32 0, %v1770
      %v1772 = vrot.slane %v1501, %v1771
      %1774 = vmatprep.subr.mxu0 0.0
      %1775 = vmatpush1.msra.mxu0 %v1372
      %1776 = vmatprep.subr.mxu0 0.0
      %1777 = vmatpush1.msra.mxu0 %v1371
      %1778 = vmatprep.subr.mxu0 0.0
      %1779 = vmatpush1.msra.mxu0 %v1370
      %1780 = vmatprep.subr.mxu0 0.0
      %1781 = vmatpush1.msra.mxu0 %v1369
      %1782 = vmatprep.subr.mxu0 0.0
      %1783 = vmatpush1.msra.mxu0 %v1368
      %1784 = vmatprep.subr.mxu0 0.0
      %1785 = vmatpush1.msra.mxu0 %v1367
      %1786 = vmatprep.subr.mxu0 0.0
      %1787 = vmatpush1.msra.mxu0 %v1366
      %1788 = vmatprep.subr.mxu0 0.0
      %1789 = vmatpush1.msra.mxu0 %v1365
      %1790 = vmatprep.subr.mxu0 0.0
      %1791 = vmatpush1.msra.mxu0 %v1364
      %1792 = vmatprep.subr.mxu0 0.0
      %1793 = vmatpush1.msra.mxu0 %v1363
      %1794 = vmatprep.subr.mxu0 0.0
      %1795 = vmatpush1.msra.mxu0 %v1362
      %1796 = vmatprep.subr.mxu0 0.0
      %1797 = vmatpush1.msra.mxu0 %v1361
      %1798 = vmatprep.subr.mxu0 0.0
      %1799 = vmatpush1.msra.mxu0 %v1360
      %1800 = vmatprep.subr.mxu0 0.0
      %1801 = vmatpush1.msra.mxu0 %v1359
      %1802 = vmatprep.subr.mxu0 0.0
      %1803 = vmatpush1.msra.mxu0 %v1358
      %1804 = vmatprep.subr.mxu0 0.0
      %1805 = vmatpush1.msra.mxu0 %v1357
      %1806 = vmatprep.subr.mxu0 0.0
      %1807 = vmatpush2.msra.mxu0 %v1388
      %1808 = vmatprep.subr.mxu0 0.0
      %1809 = vmatpush2.msra.mxu0 %v1387
      %1810 = vmatprep.subr.mxu0 0.0
      %1811 = vmatpush2.msra.mxu0 %v1386
      %1812 = vmatprep.subr.mxu0 0.0
      %1813 = vmatpush2.msra.mxu0 %v1385
      %1814 = vmatprep.subr.mxu0 0.0
      %1815 = vmatpush2.msra.mxu0 %v1384
      %1816 = vmatprep.subr.mxu0 0.0
      %1817 = vmatpush2.msra.mxu0 %v1383
      %1818 = vmatprep.subr.mxu0 0.0
      %1819 = vmatpush2.msra.mxu0 %v1382
      %1820 = vmatprep.subr.mxu0 0.0
      %1821 = vmatpush2.msra.mxu0 %v1381
      %1822 = vmatprep.subr.mxu0 0.0
      %1823 = vmatpush2.msra.mxu0 %v1380
      %1824 = vmatprep.subr.mxu0 0.0
      %1825 = vmatpush2.msra.mxu0 %v1379
      %1826 = vmatprep.subr.mxu0 0.0
      %1827 = vmatpush2.msra.mxu0 %v1378
      %1828 = vmatprep.subr.mxu0 0.0
      %1829 = vmatpush2.msra.mxu0 %v1377
      %1830 = vmatprep.subr.mxu0 0.0
      %1831 = vmatpush2.msra.mxu0 %v1376
      %1832 = vmatprep.subr.mxu0 0.0
      %1833 = vmatpush2.msra.mxu0 %v1375
      %1834 = vmatprep.subr.mxu0 0.0
      %1835 = vmatpush2.msra.mxu0 %v1374
      %1836 = vmatprep.subr.mxu0 0.0
      %1837 = vmatpush2.msra.mxu0 %v1373
      %1838 = vmatprep.mubr.f32.mxu0 %v1575
      %1839 = vmatmul.mubr.f32.gmra.mxu0 %v1551
      %v1840 = vpop.f32.mrf.mxu0
      %v1841 = vadd.f32 %v1772, %v1840
      %v1842 = vpop.f32.mrf.mxu0
      %1843 = vmatprep.mubr.f32.mxu0 %v1576
      %1844 = vmatmul.mubr.f32.gmra.mxu0 %v1552
      %v1845 = vpop.f32.mrf.mxu0
      %v1846 = vadd.f32 %v1772, %v1845
      %v1847 = vpop.f32.mrf.mxu0
      %1848 = vmatprep.mubr.f32.mxu0 %v1577
      %1849 = vmatmul.mubr.f32.gmra.mxu0 %v1553
      %v1850 = vpop.f32.mrf.mxu0
      %v1851 = vadd.f32 %v1772, %v1850
      %v1852 = vpop.f32.mrf.mxu0
      %1853 = vmatprep.mubr.f32.mxu0 %v1578
      %1854 = vmatmul.mubr.f32.gmra.mxu0 %v1554
      %v1855 = vpop.f32.mrf.mxu0
      %v1856 = vadd.f32 %v1772, %v1855
      %v1857 = vpop.f32.mrf.mxu0
      %1858 = vmatprep.mubr.f32.mxu0 %v1579
      %1859 = vmatmul.mubr.f32.gmra.mxu0 %v1555
      %v1860 = vpop.f32.mrf.mxu0
      %v1861 = vadd.f32 %v1772, %v1860
      %v1862 = vpop.f32.mrf.mxu0
      %1863 = vmatprep.mubr.f32.mxu0 %v1580
      %1864 = vmatmul.mubr.f32.gmra.mxu0 %v1556
      %v1865 = vpop.f32.mrf.mxu0
      %v1866 = vadd.f32 %v1772, %v1865
      %v1867 = vpop.f32.mrf.mxu0
      %1868 = vmatprep.mubr.f32.mxu0 %v1581
      %1869 = vmatmul.mubr.f32.gmra.mxu0 %v1557
      %v1870 = vpop.f32.mrf.mxu0
      %v1871 = vadd.f32 %v1772, %v1870
      %v1872 = vpop.f32.mrf.mxu0
      %1873 = vmatprep.mubr.f32.mxu0 %v1582
      %1874 = vmatmul.mubr.f32.gmra.mxu0 %v1558
      %v1875 = vpop.f32.mrf.mxu0
      %v1876 = vadd.f32 %v1772, %v1875
      %v1877 = vpop.f32.mrf.mxu0
      %1878 = vmatprep.mubr.f32.mxu0 %v1583
      %1879 = vmatmul.mubr.f32.gmra.mxu0 %v1559
      %v1880 = vpop.f32.mrf.mxu0
      %v1881 = vadd.f32 %v1772, %v1880
      %v1882 = vpop.f32.mrf.mxu0
      %1883 = vmatprep.mubr.f32.mxu0 %v1584
      %1884 = vmatmul.mubr.f32.gmra.mxu0 %v1560
      %v1885 = vpop.f32.mrf.mxu0
      %v1886 = vadd.f32 %v1772, %v1885
      %v1887 = vpop.f32.mrf.mxu0
      %1888 = vmatprep.mubr.f32.mxu0 %v1585
      %1889 = vmatmul.mubr.f32.gmra.mxu0 %v1561
      %v1890 = vpop.f32.mrf.mxu0
      %v1891 = vadd.f32 %v1772, %v1890
      %v1892 = vpop.f32.mrf.mxu0
      %1893 = vmatprep.mubr.f32.mxu0 %v1586
      %1894 = vmatmul.mubr.f32.gmra.mxu0 %v1562
      %v1895 = vpop.f32.mrf.mxu0
      %v1896 = vadd.f32 %v1772, %v1895
      %v1897 = vpop.f32.mrf.mxu0
      %1898 = vmatprep.mubr.f32.mxu0 %v1587
      %1899 = vmatmul.mubr.f32.gmra.mxu0 %v1563
      %v1900 = vpop.f32.mrf.mxu0
      %v1901 = vadd.f32 %v1772, %v1900
      %v1902 = vpop.f32.mrf.mxu0
      %1903 = vmatprep.mubr.f32.mxu0 %v1588
      %1904 = vmatmul.mubr.f32.gmra.mxu0 %v1564
      %v1905 = vpop.f32.mrf.mxu0
      %v1906 = vadd.f32 %v1772, %v1905
      %v1907 = vpop.f32.mrf.mxu0
      %1908 = vmatprep.mubr.f32.mxu0 %v1589
      %1909 = vmatmul.mubr.f32.gmra.mxu0 %v1565
      %v1910 = vpop.f32.mrf.mxu0
      %v1911 = vadd.f32 %v1772, %v1910
      %v1912 = vpop.f32.mrf.mxu0
      %1913 = vmatprep.mubr.f32.mxu0 %v1590
      %1914 = vmatmul.mubr.f32.gmra.mxu0 %v1566
      %v1915 = vpop.f32.mrf.mxu0
      %v1916 = vadd.f32 %v1772, %v1915
      %v1917 = vpop.f32.mrf.mxu0
      %1918 = vmatprep.mubr.f32.mxu0 %v1591
      %1919 = vmatmul.mubr.f32.gmra.mxu0 %v1567
      %v1920 = vpop.f32.mrf.mxu0
      %v1921 = vadd.f32 %v1772, %v1920
      %v1922 = vpop.f32.mrf.mxu0
      %1923 = vmatprep.mubr.f32.mxu0 %v1592
      %1924 = vmatmul.mubr.f32.gmra.mxu0 %v1568
      %v1925 = vpop.f32.mrf.mxu0
      %v1926 = vadd.f32 %v1772, %v1925
      %v1927 = vpop.f32.mrf.mxu0
      %1928 = vmatprep.mubr.f32.mxu0 %v1593
      %1929 = vmatmul.mubr.f32.gmra.mxu0 %v1569
      %v1930 = vpop.f32.mrf.mxu0
      %v1931 = vadd.f32 %v1772, %v1930
      %v1932 = vpop.f32.mrf.mxu0
      %1933 = vmatprep.mubr.f32.mxu0 %v1594
      %1934 = vmatmul.mubr.f32.gmra.mxu0 %v1570
      %v1935 = vpop.f32.mrf.mxu0
      %v1936 = vadd.f32 %v1772, %v1935
      %v1937 = vpop.f32.mrf.mxu0
      %1938 = vmatprep.mubr.f32.mxu0 %v1595
      %1939 = vmatmul.mubr.f32.gmra.mxu0 %v1571
      %v1940 = vpop.f32.mrf.mxu0
      %v1941 = vadd.f32 %v1772, %v1940
      %v1942 = vpop.f32.mrf.mxu0
      %1943 = vmatprep.mubr.f32.mxu0 %v1596
      %1944 = vmatmul.mubr.f32.gmra.mxu0 %v1572
      %v1945 = vpop.f32.mrf.mxu0
      %v1946 = vadd.f32 %v1772, %v1945
      %v1947 = vpop.f32.mrf.mxu0
      %1948 = vmatprep.mubr.f32.mxu0 %v1597
      %1949 = vmatmul.mubr.f32.gmra.mxu0 %v1573
      %v1950 = vpop.f32.mrf.mxu0
      %v1951 = vadd.f32 %v1772, %v1950
      %v1952 = vpop.f32.mrf.mxu0
      %1953 = vmatprep.mubr.f32.mxu0 %v1598
      %1954 = vmatmul.mubr.f32.gmra.mxu0 %v1574
      %v1955 = vpop.f32.mrf.mxu0
      %v1956 = vadd.f32 %v1772, %v1955
      %v1957 = vpop.f32.mrf.mxu0
      %1958 = vdwg.mxu0
      %1959 = vmatprep.subr.mxu0 0.0
      %1960 = vmatpush1.msra.mxu0 %v1404
      %1961 = vmatprep.subr.mxu0 0.0
      %1962 = vmatpush1.msra.mxu0 %v1403
      %1963 = vmatprep.subr.mxu0 0.0
      %1964 = vmatpush1.msra.mxu0 %v1402
      %1965 = vmatprep.subr.mxu0 0.0
      %1966 = vmatpush1.msra.mxu0 %v1401
      %1967 = vmatprep.subr.mxu0 0.0
      %1968 = vmatpush1.msra.mxu0 %v1400
      %1969 = vmatprep.subr.mxu0 0.0
      %1970 = vmatpush1.msra.mxu0 %v1399
      %1971 = vmatprep.subr.mxu0 0.0
      %1972 = vmatpush1.msra.mxu0 %v1398
      %1973 = vmatprep.subr.mxu0 0.0
      %1974 = vmatpush1.msra.mxu0 %v1397
      %1975 = vmatprep.subr.mxu0 0.0
      %1976 = vmatpush1.msra.mxu0 %v1396
      %1977 = vmatprep.subr.mxu0 0.0
      %1978 = vmatpush1.msra.mxu0 %v1395
      %1979 = vmatprep.subr.mxu0 0.0
      %1980 = vmatpush1.msra.mxu0 %v1394
      %1981 = vmatprep.subr.mxu0 0.0
      %1982 = vmatpush1.msra.mxu0 %v1393
      %1983 = vmatprep.subr.mxu0 0.0
      %1984 = vmatpush1.msra.mxu0 %v1392
      %1985 = vmatprep.subr.mxu0 0.0
      %1986 = vmatpush1.msra.mxu0 %v1391
      %1987 = vmatprep.subr.mxu0 0.0
      %1988 = vmatpush1.msra.mxu0 %v1390
      %1989 = vmatprep.subr.mxu0 0.0
      %1990 = vmatpush1.msra.mxu0 %v1389
      %1991 = vmatprep.subr.mxu0 0.0
      %1992 = vmatpush2.msra.mxu0 %v1420
      %1993 = vmatprep.subr.mxu0 0.0
      %1994 = vmatpush2.msra.mxu0 %v1419
      %1995 = vmatprep.subr.mxu0 0.0
      %1996 = vmatpush2.msra.mxu0 %v1418
      %1997 = vmatprep.subr.mxu0 0.0
      %1998 = vmatpush2.msra.mxu0 %v1417
      %1999 = vmatprep.subr.mxu0 0.0
      %2000 = vmatpush2.msra.mxu0 %v1416
      %2001 = vmatprep.subr.mxu0 0.0
      %2002 = vmatpush2.msra.mxu0 %v1415
      %2003 = vmatprep.subr.mxu0 0.0
      %2004 = vmatpush2.msra.mxu0 %v1414
      %2005 = vmatprep.subr.mxu0 0.0
      %2006 = vmatpush2.msra.mxu0 %v1413
      %2007 = vmatprep.subr.mxu0 0.0
      %2008 = vmatpush2.msra.mxu0 %v1412
      %2009 = vmatprep.subr.mxu0 0.0
      %2010 = vmatpush2.msra.mxu0 %v1411
      %2011 = vmatprep.subr.mxu0 0.0
      %2012 = vmatpush2.msra.mxu0 %v1410
      %2013 = vmatprep.subr.mxu0 0.0
      %2014 = vmatpush2.msra.mxu0 %v1409
      %2015 = vmatprep.subr.mxu0 0.0
      %2016 = vmatpush2.msra.mxu0 %v1408
      %2017 = vmatprep.subr.mxu0 0.0
      %2018 = vmatpush2.msra.mxu0 %v1407
      %2019 = vmatprep.subr.mxu0 0.0
      %2020 = vmatpush2.msra.mxu0 %v1406
      %2021 = vmatprep.subr.mxu0 0.0
      %2022 = vmatpush2.msra.mxu0 %v1405
      %2023 = vmatprep.mubr.f32.mxu0 %v1623
      %2024 = vmatmul.mubr.f32.gmra.mxu0 %v1599
      %v2025 = vpop.f32.mrf.mxu0
      %v2026 = vadd.f32 %v1841, %v2025
      %v2027 = vpop.f32.mrf.mxu0
      %2028 = vmatprep.mubr.f32.mxu0 %v1624
      %2029 = vmatmul.mubr.f32.gmra.mxu0 %v1600
      %v2030 = vpop.f32.mrf.mxu0
      %v2031 = vadd.f32 %v1846, %v2030
      %v2032 = vpop.f32.mrf.mxu0
      %2033 = vmatprep.mubr.f32.mxu0 %v1625
      %2034 = vmatmul.mubr.f32.gmra.mxu0 %v1601
      %v2035 = vpop.f32.mrf.mxu0
      %v2036 = vadd.f32 %v1851, %v2035
      %v2037 = vpop.f32.mrf.mxu0
      %2038 = vmatprep.mubr.f32.mxu0 %v1626
      %2039 = vmatmul.mubr.f32.gmra.mxu0 %v1602
      %v2040 = vpop.f32.mrf.mxu0
      %v2041 = vadd.f32 %v1856, %v2040
      %v2042 = vpop.f32.mrf.mxu0
      %2043 = vmatprep.mubr.f32.mxu0 %v1627
      %2044 = vmatmul.mubr.f32.gmra.mxu0 %v1603
      %v2045 = vpop.f32.mrf.mxu0
      %v2046 = vadd.f32 %v1861, %v2045
      %v2047 = vpop.f32.mrf.mxu0
      %2048 = vmatprep.mubr.f32.mxu0 %v1628
      %2049 = vmatmul.mubr.f32.gmra.mxu0 %v1604
      %v2050 = vpop.f32.mrf.mxu0
      %v2051 = vadd.f32 %v1866, %v2050
      %v2052 = vpop.f32.mrf.mxu0
      %2053 = vmatprep.mubr.f32.mxu0 %v1629
      %2054 = vmatmul.mubr.f32.gmra.mxu0 %v1605
      %v2055 = vpop.f32.mrf.mxu0
      %v2056 = vadd.f32 %v1871, %v2055
      %v2057 = vpop.f32.mrf.mxu0
      %2058 = vmatprep.mubr.f32.mxu0 %v1630
      %2059 = vmatmul.mubr.f32.gmra.mxu0 %v1606
      %v2060 = vpop.f32.mrf.mxu0
      %v2061 = vadd.f32 %v1876, %v2060
      %v2062 = vpop.f32.mrf.mxu0
      %2063 = vmatprep.mubr.f32.mxu0 %v1631
      %2064 = vmatmul.mubr.f32.gmra.mxu0 %v1607
      %v2065 = vpop.f32.mrf.mxu0
      %v2066 = vadd.f32 %v1881, %v2065
      %v2067 = vpop.f32.mrf.mxu0
      %2068 = vmatprep.mubr.f32.mxu0 %v1632
      %2069 = vmatmul.mubr.f32.gmra.mxu0 %v1608
      %v2070 = vpop.f32.mrf.mxu0
      %v2071 = vadd.f32 %v1886, %v2070
      %v2072 = vpop.f32.mrf.mxu0
      %2073 = vmatprep.mubr.f32.mxu0 %v1633
      %2074 = vmatmul.mubr.f32.gmra.mxu0 %v1609
      %v2075 = vpop.f32.mrf.mxu0
      %v2076 = vadd.f32 %v1891, %v2075
      %v2077 = vpop.f32.mrf.mxu0
      %2078 = vmatprep.mubr.f32.mxu0 %v1634
      %2079 = vmatmul.mubr.f32.gmra.mxu0 %v1610
      %v2080 = vpop.f32.mrf.mxu0
      %v2081 = vadd.f32 %v1896, %v2080
      %v2082 = vpop.f32.mrf.mxu0
      %2083 = vmatprep.mubr.f32.mxu0 %v1635
      %2084 = vmatmul.mubr.f32.gmra.mxu0 %v1611
      %v2085 = vpop.f32.mrf.mxu0
      %v2086 = vadd.f32 %v1901, %v2085
      %v2087 = vpop.f32.mrf.mxu0
      %2088 = vmatprep.mubr.f32.mxu0 %v1636
      %2089 = vmatmul.mubr.f32.gmra.mxu0 %v1612
      %v2090 = vpop.f32.mrf.mxu0
      %v2091 = vadd.f32 %v1906, %v2090
      %v2092 = vpop.f32.mrf.mxu0
      %2093 = vmatprep.mubr.f32.mxu0 %v1637
      %2094 = vmatmul.mubr.f32.gmra.mxu0 %v1613
      %v2095 = vpop.f32.mrf.mxu0
      %v2096 = vadd.f32 %v1911, %v2095
      %v2097 = vpop.f32.mrf.mxu0
      %2098 = vmatprep.mubr.f32.mxu0 %v1638
      %2099 = vmatmul.mubr.f32.gmra.mxu0 %v1614
      %v2100 = vpop.f32.mrf.mxu0
      %v2101 = vadd.f32 %v1916, %v2100
      %v2102 = vpop.f32.mrf.mxu0
      %2103 = vmatprep.mubr.f32.mxu0 %v1639
      %2104 = vmatmul.mubr.f32.gmra.mxu0 %v1615
      %v2105 = vpop.f32.mrf.mxu0
      %v2106 = vadd.f32 %v1921, %v2105
      %v2107 = vpop.f32.mrf.mxu0
      %2108 = vmatprep.mubr.f32.mxu0 %v1640
      %2109 = vmatmul.mubr.f32.gmra.mxu0 %v1616
      %v2110 = vpop.f32.mrf.mxu0
      %v2111 = vadd.f32 %v1926, %v2110
      %v2112 = vpop.f32.mrf.mxu0
      %2113 = vmatprep.mubr.f32.mxu0 %v1641
      %2114 = vmatmul.mubr.f32.gmra.mxu0 %v1617
      %v2115 = vpop.f32.mrf.mxu0
      %v2116 = vadd.f32 %v1931, %v2115
      %v2117 = vpop.f32.mrf.mxu0
      %2118 = vmatprep.mubr.f32.mxu0 %v1642
      %2119 = vmatmul.mubr.f32.gmra.mxu0 %v1618
      %v2120 = vpop.f32.mrf.mxu0
      %v2121 = vadd.f32 %v1936, %v2120
      %v2122 = vpop.f32.mrf.mxu0
      %2123 = vmatprep.mubr.f32.mxu0 %v1643
      %2124 = vmatmul.mubr.f32.gmra.mxu0 %v1619
      %v2125 = vpop.f32.mrf.mxu0
      %v2126 = vadd.f32 %v1941, %v2125
      %v2127 = vpop.f32.mrf.mxu0
      %2128 = vmatprep.mubr.f32.mxu0 %v1644
      %2129 = vmatmul.mubr.f32.gmra.mxu0 %v1620
      %v2130 = vpop.f32.mrf.mxu0
      %v2131 = vadd.f32 %v1946, %v2130
      %v2132 = vpop.f32.mrf.mxu0
      %2133 = vmatprep.mubr.f32.mxu0 %v1645
      %2134 = vmatmul.mubr.f32.gmra.mxu0 %v1621
      %v2135 = vpop.f32.mrf.mxu0
      %v2136 = vadd.f32 %v1951, %v2135
      %v2137 = vpop.f32.mrf.mxu0
      %2138 = vmatprep.mubr.f32.mxu0 %v1646
      %2139 = vmatmul.mubr.f32.gmra.mxu0 %v1622
      %v2140 = vpop.f32.mrf.mxu0
      %v2141 = vadd.f32 %v1956, %v2140
      %v2142 = vpop.f32.mrf.mxu0
      %2143 = vdwg.mxu0
      %2144 = vmatprep.subr.mxu0 0.0
      %2145 = vmatpush1.msra.mxu0 %v1436
      %2146 = vmatprep.subr.mxu0 0.0
      %2147 = vmatpush1.msra.mxu0 %v1435
      %2148 = vmatprep.subr.mxu0 0.0
      %2149 = vmatpush1.msra.mxu0 %v1434
      %2150 = vmatprep.subr.mxu0 0.0
      %2151 = vmatpush1.msra.mxu0 %v1433
      %2152 = vmatprep.subr.mxu0 0.0
      %2153 = vmatpush1.msra.mxu0 %v1432
      %2154 = vmatprep.subr.mxu0 0.0
      %2155 = vmatpush1.msra.mxu0 %v1431
      %2156 = vmatprep.subr.mxu0 0.0
      %2157 = vmatpush1.msra.mxu0 %v1430
      %2158 = vmatprep.subr.mxu0 0.0
      %2159 = vmatpush1.msra.mxu0 %v1429
      %2160 = vmatprep.subr.mxu0 0.0
      %2161 = vmatpush1.msra.mxu0 %v1428
      %2162 = vmatprep.subr.mxu0 0.0
      %2163 = vmatpush1.msra.mxu0 %v1427
      %2164 = vmatprep.subr.mxu0 0.0
      %2165 = vmatpush1.msra.mxu0 %v1426
      %2166 = vmatprep.subr.mxu0 0.0
      %2167 = vmatpush1.msra.mxu0 %v1425
      %2168 = vmatprep.subr.mxu0 0.0
      %2169 = vmatpush1.msra.mxu0 %v1424
      %2170 = vmatprep.subr.mxu0 0.0
      %2171 = vmatpush1.msra.mxu0 %v1423
      %2172 = vmatprep.subr.mxu0 0.0
      %2173 = vmatpush1.msra.mxu0 %v1422
      %2174 = vmatprep.subr.mxu0 0.0
      %2175 = vmatpush1.msra.mxu0 %v1421
      %2176 = vmatprep.subr.mxu0 0.0
      %2177 = vmatpush2.msra.mxu0 %v1452
      %2178 = vmatprep.subr.mxu0 0.0
      %2179 = vmatpush2.msra.mxu0 %v1451
      %2180 = vmatprep.subr.mxu0 0.0
      %2181 = vmatpush2.msra.mxu0 %v1450
      %2182 = vmatprep.subr.mxu0 0.0
      %2183 = vmatpush2.msra.mxu0 %v1449
      %2184 = vmatprep.subr.mxu0 0.0
      %2185 = vmatpush2.msra.mxu0 %v1448
      %2186 = vmatprep.subr.mxu0 0.0
      %2187 = vmatpush2.msra.mxu0 %v1447
      %2188 = vmatprep.subr.mxu0 0.0
      %2189 = vmatpush2.msra.mxu0 %v1446
      %2190 = vmatprep.subr.mxu0 0.0
      %2191 = vmatpush2.msra.mxu0 %v1445
      %2192 = vmatprep.subr.mxu0 0.0
      %2193 = vmatpush2.msra.mxu0 %v1444
      %2194 = vmatprep.subr.mxu0 0.0
      %2195 = vmatpush2.msra.mxu0 %v1443
      %2196 = vmatprep.subr.mxu0 0.0
      %2197 = vmatpush2.msra.mxu0 %v1442
      %2198 = vmatprep.subr.mxu0 0.0
      %2199 = vmatpush2.msra.mxu0 %v1441
      %2200 = vmatprep.subr.mxu0 0.0
      %2201 = vmatpush2.msra.mxu0 %v1440
      %2202 = vmatprep.subr.mxu0 0.0
      %2203 = vmatpush2.msra.mxu0 %v1439
      %2204 = vmatprep.subr.mxu0 0.0
      %2205 = vmatpush2.msra.mxu0 %v1438
      %2206 = vmatprep.subr.mxu0 0.0
      %2207 = vmatpush2.msra.mxu0 %v1437
      %2208 = vmatprep.mubr.f32.mxu0 %v1671
      %2209 = vmatmul.mubr.f32.gmra.mxu0 %v1647
      %v2210 = vpop.f32.mrf.mxu0
      %v2211 = vadd.f32 %v2026, %v2210
      %v2212 = vpop.f32.mrf.mxu0
      %2213 = vmatprep.mubr.f32.mxu0 %v1672
      %2214 = vmatmul.mubr.f32.gmra.mxu0 %v1648
      %v2215 = vpop.f32.mrf.mxu0
      %v2216 = vadd.f32 %v2031, %v2215
      %v2217 = vpop.f32.mrf.mxu0
      %2218 = vmatprep.mubr.f32.mxu0 %v1673
      %2219 = vmatmul.mubr.f32.gmra.mxu0 %v1649
      %v2220 = vpop.f32.mrf.mxu0
      %v2221 = vadd.f32 %v2036, %v2220
      %v2222 = vpop.f32.mrf.mxu0
      %2223 = vmatprep.mubr.f32.mxu0 %v1674
      %2224 = vmatmul.mubr.f32.gmra.mxu0 %v1650
      %v2225 = vpop.f32.mrf.mxu0
      %v2226 = vadd.f32 %v2041, %v2225
      %v2227 = vpop.f32.mrf.mxu0
      %2228 = vmatprep.mubr.f32.mxu0 %v1675
      %2229 = vmatmul.mubr.f32.gmra.mxu0 %v1651
      %v2230 = vpop.f32.mrf.mxu0
      %v2231 = vadd.f32 %v2046, %v2230
      %v2232 = vpop.f32.mrf.mxu0
      %2233 = vmatprep.mubr.f32.mxu0 %v1676
      %2234 = vmatmul.mubr.f32.gmra.mxu0 %v1652
      %v2235 = vpop.f32.mrf.mxu0
      %v2236 = vadd.f32 %v2051, %v2235
      %v2237 = vpop.f32.mrf.mxu0
      %2238 = vmatprep.mubr.f32.mxu0 %v1677
      %2239 = vmatmul.mubr.f32.gmra.mxu0 %v1653
      %v2240 = vpop.f32.mrf.mxu0
      %v2241 = vadd.f32 %v2056, %v2240
      %v2242 = vpop.f32.mrf.mxu0
      %2243 = vmatprep.mubr.f32.mxu0 %v1678
      %2244 = vmatmul.mubr.f32.gmra.mxu0 %v1654
      %v2245 = vpop.f32.mrf.mxu0
      %v2246 = vadd.f32 %v2061, %v2245
      %v2247 = vpop.f32.mrf.mxu0
      %2248 = vmatprep.mubr.f32.mxu0 %v1679
      %2249 = vmatmul.mubr.f32.gmra.mxu0 %v1655
      %v2250 = vpop.f32.mrf.mxu0
      %v2251 = vadd.f32 %v2066, %v2250
      %v2252 = vpop.f32.mrf.mxu0
      %2253 = vmatprep.mubr.f32.mxu0 %v1680
      %2254 = vmatmul.mubr.f32.gmra.mxu0 %v1656
      %v2255 = vpop.f32.mrf.mxu0
      %v2256 = vadd.f32 %v2071, %v2255
      %v2257 = vpop.f32.mrf.mxu0
      %2258 = vmatprep.mubr.f32.mxu0 %v1681
      %2259 = vmatmul.mubr.f32.gmra.mxu0 %v1657
      %v2260 = vpop.f32.mrf.mxu0
      %v2261 = vadd.f32 %v2076, %v2260
      %v2262 = vpop.f32.mrf.mxu0
      %2263 = vmatprep.mubr.f32.mxu0 %v1682
      %2264 = vmatmul.mubr.f32.gmra.mxu0 %v1658
      %v2265 = vpop.f32.mrf.mxu0
      %v2266 = vadd.f32 %v2081, %v2265
      %v2267 = vpop.f32.mrf.mxu0
      %2268 = vmatprep.mubr.f32.mxu0 %v1683
      %2269 = vmatmul.mubr.f32.gmra.mxu0 %v1659
      %v2270 = vpop.f32.mrf.mxu0
      %v2271 = vadd.f32 %v2086, %v2270
      %v2272 = vpop.f32.mrf.mxu0
      %2273 = vmatprep.mubr.f32.mxu0 %v1684
      %2274 = vmatmul.mubr.f32.gmra.mxu0 %v1660
      %v2275 = vpop.f32.mrf.mxu0
      %v2276 = vadd.f32 %v2091, %v2275
      %v2277 = vpop.f32.mrf.mxu0
      %2278 = vmatprep.mubr.f32.mxu0 %v1685
      %2279 = vmatmul.mubr.f32.gmra.mxu0 %v1661
      %v2280 = vpop.f32.mrf.mxu0
      %v2281 = vadd.f32 %v2096, %v2280
      %v2282 = vpop.f32.mrf.mxu0
      %2283 = vmatprep.mubr.f32.mxu0 %v1686
      %2284 = vmatmul.mubr.f32.gmra.mxu0 %v1662
      %v2285 = vpop.f32.mrf.mxu0
      %v2286 = vadd.f32 %v2101, %v2285
      %v2287 = vpop.f32.mrf.mxu0
      %2288 = vmatprep.mubr.f32.mxu0 %v1687
      %2289 = vmatmul.mubr.f32.gmra.mxu0 %v1663
      %v2290 = vpop.f32.mrf.mxu0
      %v2291 = vadd.f32 %v2106, %v2290
      %v2292 = vpop.f32.mrf.mxu0
      %2293 = vmatprep.mubr.f32.mxu0 %v1688
      %2294 = vmatmul.mubr.f32.gmra.mxu0 %v1664
      %v2295 = vpop.f32.mrf.mxu0
      %v2296 = vadd.f32 %v2111, %v2295
      %v2297 = vpop.f32.mrf.mxu0
      %2298 = vmatprep.mubr.f32.mxu0 %v1689
      %2299 = vmatmul.mubr.f32.gmra.mxu0 %v1665
      %v2300 = vpop.f32.mrf.mxu0
      %v2301 = vadd.f32 %v2116, %v2300
      %v2302 = vpop.f32.mrf.mxu0
      %2303 = vmatprep.mubr.f32.mxu0 %v1690
      %2304 = vmatmul.mubr.f32.gmra.mxu0 %v1666
      %v2305 = vpop.f32.mrf.mxu0
      %v2306 = vadd.f32 %v2121, %v2305
      %v2307 = vpop.f32.mrf.mxu0
      %2308 = vmatprep.mubr.f32.mxu0 %v1691
      %2309 = vmatmul.mubr.f32.gmra.mxu0 %v1667
      %v2310 = vpop.f32.mrf.mxu0
      %v2311 = vadd.f32 %v2126, %v2310
      %v2312 = vpop.f32.mrf.mxu0
      %2313 = vmatprep.mubr.f32.mxu0 %v1692
      %2314 = vmatmul.mubr.f32.gmra.mxu0 %v1668
      %v2315 = vpop.f32.mrf.mxu0
      %v2316 = vadd.f32 %v2131, %v2315
      %v2317 = vpop.f32.mrf.mxu0
      %2318 = vmatprep.mubr.f32.mxu0 %v1693
      %2319 = vmatmul.mubr.f32.gmra.mxu0 %v1669
      %v2320 = vpop.f32.mrf.mxu0
      %v2321 = vadd.f32 %v2136, %v2320
      %v2322 = vpop.f32.mrf.mxu0
      %2323 = vmatprep.mubr.f32.mxu0 %v1694
      %2324 = vmatmul.mubr.f32.gmra.mxu0 %v1670
      %v2325 = vpop.f32.mrf.mxu0
      %v2326 = vadd.f32 %v2141, %v2325
      %v2327 = vpop.f32.mrf.mxu0
      %2328 = vdwg.mxu0
      %2329 = vmatprep.subr.mxu0 0.0
      %2330 = vmatpush1.msra.mxu0 %v1468
      %2331 = vmatprep.subr.mxu0 0.0
      %2332 = vmatpush1.msra.mxu0 %v1467
      %2333 = vmatprep.subr.mxu0 0.0
      %2334 = vmatpush1.msra.mxu0 %v1466
      %2335 = vmatprep.subr.mxu0 0.0
      %2336 = vmatpush1.msra.mxu0 %v1465
      %2337 = vmatprep.subr.mxu0 0.0
      %2338 = vmatpush1.msra.mxu0 %v1464
      %2339 = vmatprep.subr.mxu0 0.0
      %2340 = vmatpush1.msra.mxu0 %v1463
      %2341 = vmatprep.subr.mxu0 0.0
      %2342 = vmatpush1.msra.mxu0 %v1462
      %2343 = vmatprep.subr.mxu0 0.0
      %2344 = vmatpush1.msra.mxu0 %v1461
      %2345 = vmatprep.subr.mxu0 0.0
      %2346 = vmatpush1.msra.mxu0 %v1460
      %2347 = vmatprep.subr.mxu0 0.0
      %2348 = vmatpush1.msra.mxu0 %v1459
      %2349 = vmatprep.subr.mxu0 0.0
      %2350 = vmatpush1.msra.mxu0 %v1458
      %2351 = vmatprep.subr.mxu0 0.0
      %2352 = vmatpush1.msra.mxu0 %v1457
      %2353 = vmatprep.subr.mxu0 0.0
      %2354 = vmatpush1.msra.mxu0 %v1456
      %2355 = vmatprep.subr.mxu0 0.0
      %2356 = vmatpush1.msra.mxu0 %v1455
      %2357 = vmatprep.subr.mxu0 0.0
      %2358 = vmatpush1.msra.mxu0 %v1454
      %2359 = vmatprep.subr.mxu0 0.0
      %2360 = vmatpush1.msra.mxu0 %v1453
      %2361 = vmatprep.subr.mxu0 0.0
      %2362 = vmatpush2.msra.mxu0 %v1484
      %2363 = vmatprep.subr.mxu0 0.0
      %2364 = vmatpush2.msra.mxu0 %v1483
      %2365 = vmatprep.subr.mxu0 0.0
      %2366 = vmatpush2.msra.mxu0 %v1482
      %2367 = vmatprep.subr.mxu0 0.0
      %2368 = vmatpush2.msra.mxu0 %v1481
      %2369 = vmatprep.subr.mxu0 0.0
      %2370 = vmatpush2.msra.mxu0 %v1480
      %2371 = vmatprep.subr.mxu0 0.0
      %2372 = vmatpush2.msra.mxu0 %v1479
      %2373 = vmatprep.subr.mxu0 0.0
      %2374 = vmatpush2.msra.mxu0 %v1478
      %2375 = vmatprep.subr.mxu0 0.0
      %2376 = vmatpush2.msra.mxu0 %v1477
      %2377 = vmatprep.subr.mxu0 0.0
      %2378 = vmatpush2.msra.mxu0 %v1476
      %2379 = vmatprep.subr.mxu0 0.0
      %2380 = vmatpush2.msra.mxu0 %v1475
      %2381 = vmatprep.subr.mxu0 0.0
      %2382 = vmatpush2.msra.mxu0 %v1474
      %2383 = vmatprep.subr.mxu0 0.0
      %2384 = vmatpush2.msra.mxu0 %v1473
      %2385 = vmatprep.subr.mxu0 0.0
      %2386 = vmatpush2.msra.mxu0 %v1472
      %2387 = vmatprep.subr.mxu0 0.0
      %2388 = vmatpush2.msra.mxu0 %v1471
      %2389 = vmatprep.subr.mxu0 0.0
      %2390 = vmatpush2.msra.mxu0 %v1470
      %2391 = vmatprep.subr.mxu0 0.0
      %2392 = vmatpush2.msra.mxu0 %v1469
      %2393 = vmatprep.mubr.f32.mxu0 %v1720
      %2394 = vmatmul.mubr.f32.gmra.mxu0 %v1696
      %v2395 = vpop.f32.mrf.mxu0
      %v2396 = vadd.f32 %v2211, %v2395
      %v2397 = vpop.f32.mrf.mxu0
      %2398 = vmatprep.mubr.f32.mxu0 %v1721
      %2399 = vmatmul.mubr.f32.gmra.mxu0 %v1697
      %v2400 = vpop.f32.mrf.mxu0
      %v2401 = vadd.f32 %v2216, %v2400
      %v2402 = vpop.f32.mrf.mxu0
      %2403 = vmatprep.mubr.f32.mxu0 %v1722
      %2404 = vmatmul.mubr.f32.gmra.mxu0 %v1698
      %v2405 = vpop.f32.mrf.mxu0
      %v2406 = vadd.f32 %v2221, %v2405
      %v2407 = vpop.f32.mrf.mxu0
      %2408 = vmatprep.mubr.f32.mxu0 %v1723
      %2409 = vmatmul.mubr.f32.gmra.mxu0 %v1699
      %v2410 = vpop.f32.mrf.mxu0
      %v2411 = vadd.f32 %v2226, %v2410
      %v2412 = vpop.f32.mrf.mxu0
      %2413 = vmatprep.mubr.f32.mxu0 %v1724
      %2414 = vmatmul.mubr.f32.gmra.mxu0 %v1700
      %v2415 = vpop.f32.mrf.mxu0
      %v2416 = vadd.f32 %v2231, %v2415
      %v2417 = vpop.f32.mrf.mxu0
      %2418 = vmatprep.mubr.f32.mxu0 %v1725
      %2419 = vmatmul.mubr.f32.gmra.mxu0 %v1701
      %v2420 = vpop.f32.mrf.mxu0
      %v2421 = vadd.f32 %v2236, %v2420
      %v2422 = vpop.f32.mrf.mxu0
      %2423 = vmatprep.mubr.f32.mxu0 %v1726
      %2424 = vmatmul.mubr.f32.gmra.mxu0 %v1702
      %v2425 = vpop.f32.mrf.mxu0
      %v2426 = vadd.f32 %v2241, %v2425
      %v2427 = vpop.f32.mrf.mxu0
      %2428 = vmatprep.mubr.f32.mxu0 %v1727
      %2429 = vmatmul.mubr.f32.gmra.mxu0 %v1703
      %v2430 = vpop.f32.mrf.mxu0
      %v2431 = vadd.f32 %v2246, %v2430
      %v2432 = vpop.f32.mrf.mxu0
      %2433 = vmatprep.mubr.f32.mxu0 %v1728
      %2434 = vmatmul.mubr.f32.gmra.mxu0 %v1704
      %v2435 = vpop.f32.mrf.mxu0
      %v2436 = vadd.f32 %v2251, %v2435
      %v2437 = vpop.f32.mrf.mxu0
      %2438 = vmatprep.mubr.f32.mxu0 %v1729
      %2439 = vmatmul.mubr.f32.gmra.mxu0 %v1705
      %v2440 = vpop.f32.mrf.mxu0
      %v2441 = vadd.f32 %v2256, %v2440
      %v2442 = vpop.f32.mrf.mxu0
      %2443 = vmatprep.mubr.f32.mxu0 %v1730
      %2444 = vmatmul.mubr.f32.gmra.mxu0 %v1706
      %v2445 = vpop.f32.mrf.mxu0
      %v2446 = vadd.f32 %v2261, %v2445
      %v2447 = vpop.f32.mrf.mxu0
      %2448 = vmatprep.mubr.f32.mxu0 %v1731
      %2449 = vmatmul.mubr.f32.gmra.mxu0 %v1707
      %v2450 = vpop.f32.mrf.mxu0
      %v2451 = vadd.f32 %v2266, %v2450
      %v2452 = vpop.f32.mrf.mxu0
      %2453 = vmatprep.mubr.f32.mxu0 %v1732
      %2454 = vmatmul.mubr.f32.gmra.mxu0 %v1708
      %v2455 = vpop.f32.mrf.mxu0
      %v2456 = vadd.f32 %v2271, %v2455
      %v2457 = vpop.f32.mrf.mxu0
      %2458 = vmatprep.mubr.f32.mxu0 %v1733
      %2459 = vmatmul.mubr.f32.gmra.mxu0 %v1709
      %v2460 = vpop.f32.mrf.mxu0
      %v2461 = vadd.f32 %v2276, %v2460
      %v2462 = vpop.f32.mrf.mxu0
      %2463 = vmatprep.mubr.f32.mxu0 %v1734
      %2464 = vmatmul.mubr.f32.gmra.mxu0 %v1710
      %v2465 = vpop.f32.mrf.mxu0
      %v2466 = vadd.f32 %v2281, %v2465
      %v2467 = vpop.f32.mrf.mxu0
      %2468 = vmatprep.mubr.f32.mxu0 %v1735
      %2469 = vmatmul.mubr.f32.gmra.mxu0 %v1711
      %v2470 = vpop.f32.mrf.mxu0
      %v2471 = vadd.f32 %v2286, %v2470
      %v2472 = vpop.f32.mrf.mxu0
      %2473 = vmatprep.mubr.f32.mxu0 %v1736
      %2474 = vmatmul.mubr.f32.gmra.mxu0 %v1712
      %v2475 = vpop.f32.mrf.mxu0
      %v2476 = vadd.f32 %v2291, %v2475
      %v2477 = vpop.f32.mrf.mxu0
      %2478 = vmatprep.mubr.f32.mxu0 %v1737
      %2479 = vmatmul.mubr.f32.gmra.mxu0 %v1713
      %v2480 = vpop.f32.mrf.mxu0
      %v2481 = vadd.f32 %v2296, %v2480
      %v2482 = vpop.f32.mrf.mxu0
      %2483 = vmatprep.mubr.f32.mxu0 %v1738
      %2484 = vmatmul.mubr.f32.gmra.mxu0 %v1714
      %v2485 = vpop.f32.mrf.mxu0
      %v2486 = vadd.f32 %v2301, %v2485
      %v2487 = vpop.f32.mrf.mxu0
      %2488 = vmatprep.mubr.f32.mxu0 %v1739
      %2489 = vmatmul.mubr.f32.gmra.mxu0 %v1715
      %v2490 = vpop.f32.mrf.mxu0
      %v2491 = vadd.f32 %v2306, %v2490
      %v2492 = vpop.f32.mrf.mxu0
      %2493 = vmatprep.mubr.f32.mxu0 %v1740
      %2494 = vmatmul.mubr.f32.gmra.mxu0 %v1716
      %v2495 = vpop.f32.mrf.mxu0
      %v2496 = vadd.f32 %v2311, %v2495
      %v2497 = vpop.f32.mrf.mxu0
      %2498 = vmatprep.mubr.f32.mxu0 %v1741
      %2499 = vmatmul.mubr.f32.gmra.mxu0 %v1717
      %v2500 = vpop.f32.mrf.mxu0
      %v2501 = vadd.f32 %v2316, %v2500
      %v2502 = vpop.f32.mrf.mxu0
      %2503 = vmatprep.mubr.f32.mxu0 %v1742
      %2504 = vmatmul.mubr.f32.gmra.mxu0 %v1718
      %v2505 = vpop.f32.mrf.mxu0
      %v2506 = vadd.f32 %v2321, %v2505
      %v2507 = vpop.f32.mrf.mxu0
      %2508 = vmatprep.mubr.f32.mxu0 %v1743
      %2509 = vmatmul.mubr.f32.gmra.mxu0 %v1719
      %v2510 = vpop.f32.mrf.mxu0
      %v2511 = vadd.f32 %v2326, %v2510
      %v2512 = vpop.f32.mrf.mxu0
      %2513 = vdwg.mxu0
      %2514 = vmatprep.subr.mxu0 0.0
      %2515 = vmatpush1.msra.mxu0 %v1500
      %2516 = vmatprep.subr.mxu0 0.0
      %2517 = vmatpush1.msra.mxu0 %v1499
      %2518 = vmatprep.subr.mxu0 0.0
      %2519 = vmatpush1.msra.mxu0 %v1498
      %2520 = vmatprep.subr.mxu0 0.0
      %2521 = vmatpush1.msra.mxu0 %v1497
      %2522 = vmatprep.subr.mxu0 0.0
      %2523 = vmatpush1.msra.mxu0 %v1496
      %2524 = vmatprep.subr.mxu0 0.0
      %2525 = vmatpush1.msra.mxu0 %v1495
      %2526 = vmatprep.subr.mxu0 0.0
      %2527 = vmatpush1.msra.mxu0 %v1494
      %2528 = vmatprep.subr.mxu0 0.0
      %2529 = vmatpush1.msra.mxu0 %v1493
      %2530 = vmatprep.subr.mxu0 0.0
      %2531 = vmatpush1.msra.mxu0 %v1492
      %2532 = vmatprep.subr.mxu0 0.0
      %2533 = vmatpush1.msra.mxu0 %v1491
      %2534 = vmatprep.subr.mxu0 0.0
      %2535 = vmatpush1.msra.mxu0 %v1490
      %2536 = vmatprep.subr.mxu0 0.0
      %2537 = vmatpush1.msra.mxu0 %v1489
      %2538 = vmatprep.subr.mxu0 0.0
      %2539 = vmatpush1.msra.mxu0 %v1488
      %2540 = vmatprep.subr.mxu0 0.0
      %2541 = vmatpush1.msra.mxu0 %v1487
      %2542 = vmatprep.subr.mxu0 0.0
      %2543 = vmatpush1.msra.mxu0 %v1486
      %2544 = vmatprep.subr.mxu0 0.0
      %2545 = vmatpush1.msra.mxu0 %v1485
      %2546 = vmatprep.subr.mxu0 0.0
      %2547 = vmatpush2.msra.mxu0 0.0
      %2548 = vmatprep.subr.mxu0 0.0
      %2549 = vmatpush2.msra.mxu0 0.0
      %2550 = vmatprep.subr.mxu0 0.0
      %2551 = vmatpush2.msra.mxu0 0.0
      %2552 = vmatprep.subr.mxu0 0.0
      %2553 = vmatpush2.msra.mxu0 0.0
      %2554 = vmatprep.subr.mxu0 0.0
      %2555 = vmatpush2.msra.mxu0 0.0
      %2556 = vmatprep.subr.mxu0 0.0
      %2557 = vmatpush2.msra.mxu0 0.0
      %2558 = vmatprep.subr.mxu0 0.0
      %2559 = vmatpush2.msra.mxu0 0.0
      %2560 = vmatprep.subr.mxu0 0.0
      %2561 = vmatpush2.msra.mxu0 0.0
      %2562 = vmatprep.subr.mxu0 0.0
      %2563 = vmatpush2.msra.mxu0 0.0
      %2564 = vmatprep.subr.mxu0 0.0
      %2565 = vmatpush2.msra.mxu0 0.0
      %2566 = vmatprep.subr.mxu0 0.0
      %2567 = vmatpush2.msra.mxu0 0.0
      %2568 = vmatprep.subr.mxu0 0.0
      %2569 = vmatpush2.msra.mxu0 0.0
      %2570 = vmatprep.subr.mxu0 0.0
      %2571 = vmatpush2.msra.mxu0 0.0
      %2572 = vmatprep.subr.mxu0 0.0
      %2573 = vmatpush2.msra.mxu0 0.0
      %2574 = vmatprep.subr.mxu0 0.0
      %2575 = vmatpush2.msra.mxu0 0.0
      %2576 = vmatprep.subr.mxu0 0.0
      %2577 = vmatpush2.msra.mxu0 0.0
      %2578 = vmatprep.mubr.f32.mxu0 0.0
      %2579 = vmatmul.mubr.f32.gmra.mxu0 %v1744
      %v2580 = vpop.f32.mrf.mxu0
      %v2581 = vadd.f32 %v2396, %v2580
      %v2582 = vpop.f32.mrf.mxu0
      %2583 = vmatprep.mubr.f32.mxu0 0.0
      %2584 = vmatmul.mubr.f32.gmra.mxu0 %v1745
      %v2585 = vpop.f32.mrf.mxu0
      %v2586 = vadd.f32 %v2401, %v2585
      %v2587 = vpop.f32.mrf.mxu0
      %2588 = vmatprep.mubr.f32.mxu0 0.0
      %2589 = vmatmul.mubr.f32.gmra.mxu0 %v1746
      %v2590 = vpop.f32.mrf.mxu0
      %v2591 = vadd.f32 %v2406, %v2590
      %v2592 = vpop.f32.mrf.mxu0
      %2593 = vmatprep.mubr.f32.mxu0 0.0
      %2594 = vmatmul.mubr.f32.gmra.mxu0 %v1747
      %v2595 = vpop.f32.mrf.mxu0
      %v2596 = vadd.f32 %v2411, %v2595
      %v2597 = vpop.f32.mrf.mxu0
      %2598 = vmatprep.mubr.f32.mxu0 0.0
      %2599 = vmatmul.mubr.f32.gmra.mxu0 %v1748
      %v2600 = vpop.f32.mrf.mxu0
      %v2601 = vadd.f32 %v2416, %v2600
      %v2602 = vpop.f32.mrf.mxu0
      %2603 = vmatprep.mubr.f32.mxu0 0.0
      %2604 = vmatmul.mubr.f32.gmra.mxu0 %v1749
      %v2605 = vpop.f32.mrf.mxu0
      %v2606 = vadd.f32 %v2421, %v2605
      %v2607 = vpop.f32.mrf.mxu0
      %2608 = vmatprep.mubr.f32.mxu0 0.0
      %2609 = vmatmul.mubr.f32.gmra.mxu0 %v1750
      %v2610 = vpop.f32.mrf.mxu0
      %v2611 = vadd.f32 %v2426, %v2610
      %v2612 = vpop.f32.mrf.mxu0
      %2613 = vmatprep.mubr.f32.mxu0 0.0
      %2614 = vmatmul.mubr.f32.gmra.mxu0 %v1751
      %v2615 = vpop.f32.mrf.mxu0
      %v2616 = vadd.f32 %v2431, %v2615
      %v2617 = vpop.f32.mrf.mxu0
      %2618 = vmatprep.mubr.f32.mxu0 0.0
      %2619 = vmatmul.mubr.f32.gmra.mxu0 %v1752
      %v2620 = vpop.f32.mrf.mxu0
      %v2621 = vadd.f32 %v2436, %v2620
      %v2622 = vpop.f32.mrf.mxu0
      %2623 = vmatprep.mubr.f32.mxu0 0.0
      %2624 = vmatmul.mubr.f32.gmra.mxu0 %v1753
      %v2625 = vpop.f32.mrf.mxu0
      %v2626 = vadd.f32 %v2441, %v2625
      %v2627 = vpop.f32.mrf.mxu0
      %2628 = vmatprep.mubr.f32.mxu0 0.0
      %2629 = vmatmul.mubr.f32.gmra.mxu0 %v1754
      %v2630 = vpop.f32.mrf.mxu0
      %v2631 = vadd.f32 %v2446, %v2630
      %v2632 = vpop.f32.mrf.mxu0
      %2633 = vmatprep.mubr.f32.mxu0 0.0
      %2634 = vmatmul.mubr.f32.gmra.mxu0 %v1755
      %v2635 = vpop.f32.mrf.mxu0
      %v2636 = vadd.f32 %v2451, %v2635
      %v2637 = vpop.f32.mrf.mxu0
      %2638 = vmatprep.mubr.f32.mxu0 0.0
      %2639 = vmatmul.mubr.f32.gmra.mxu0 %v1756
      %v2640 = vpop.f32.mrf.mxu0
      %v2641 = vadd.f32 %v2456, %v2640
      %v2642 = vpop.f32.mrf.mxu0
      %2643 = vmatprep.mubr.f32.mxu0 0.0
      %2644 = vmatmul.mubr.f32.gmra.mxu0 %v1757
      %v2645 = vpop.f32.mrf.mxu0
      %v2646 = vadd.f32 %v2461, %v2645
      %v2647 = vpop.f32.mrf.mxu0
      %2648 = vmatprep.mubr.f32.mxu0 0.0
      %2649 = vmatmul.mubr.f32.gmra.mxu0 %v1758
      %v2650 = vpop.f32.mrf.mxu0
      %v2651 = vadd.f32 %v2466, %v2650
      %v2652 = vpop.f32.mrf.mxu0
      %2653 = vmatprep.mubr.f32.mxu0 0.0
      %2654 = vmatmul.mubr.f32.gmra.mxu0 %v1759
      %v2655 = vpop.f32.mrf.mxu0
      %v2656 = vadd.f32 %v2471, %v2655
      %v2657 = vpop.f32.mrf.mxu0
      %2658 = vmatprep.mubr.f32.mxu0 0.0
      %2659 = vmatmul.mubr.f32.gmra.mxu0 %v1760
      %v2660 = vpop.f32.mrf.mxu0
      %v2661 = vadd.f32 %v2476, %v2660
      %v2662 = vpop.f32.mrf.mxu0
      %2663 = vmatprep.mubr.f32.mxu0 0.0
      %2664 = vmatmul.mubr.f32.gmra.mxu0 %v1761
      %v2665 = vpop.f32.mrf.mxu0
      %v2666 = vadd.f32 %v2481, %v2665
      %v2667 = vpop.f32.mrf.mxu0
      %2668 = vmatprep.mubr.f32.mxu0 0.0
      %2669 = vmatmul.mubr.f32.gmra.mxu0 %v1762
      %v2670 = vpop.f32.mrf.mxu0
      %v2671 = vadd.f32 %v2486, %v2670
      %v2672 = vpop.f32.mrf.mxu0
      %2673 = vmatprep.mubr.f32.mxu0 0.0
      %2674 = vmatmul.mubr.f32.gmra.mxu0 %v1763
      %v2675 = vpop.f32.mrf.mxu0
      %v2676 = vadd.f32 %v2491, %v2675
      %v2677 = vpop.f32.mrf.mxu0
      %2678 = vmatprep.mubr.f32.mxu0 0.0
      %2679 = vmatmul.mubr.f32.gmra.mxu0 %v1764
      %v2680 = vpop.f32.mrf.mxu0
      %v2681 = vadd.f32 %v2496, %v2680
      %v2682 = vpop.f32.mrf.mxu0
      %2683 = vmatprep.mubr.f32.mxu0 0.0
      %2684 = vmatmul.mubr.f32.gmra.mxu0 %v1765
      %v2685 = vpop.f32.mrf.mxu0
      %v2686 = vadd.f32 %v2501, %v2685
      %v2687 = vpop.f32.mrf.mxu0
      %2688 = vmatprep.mubr.f32.mxu0 0.0
      %2689 = vmatmul.mubr.f32.gmra.mxu0 %v1766
      %v2690 = vpop.f32.mrf.mxu0
      %v2691 = vadd.f32 %v2506, %v2690
      %v2692 = vpop.f32.mrf.mxu0
      %2693 = vmatprep.mubr.f32.mxu0 0.0
      %2694 = vmatmul.mubr.f32.gmra.mxu0 %v1767
      %v2695 = vpop.f32.mrf.mxu0
      %v2696 = vadd.f32 %v2511, %v2695
      %v2697 = vpop.f32.mrf.mxu0
      %2698 = vdwg.mxu0
      %v2699 = vxor.u32 %v2581, 2147483648
      %v2700 = vxor.u32 %v2586, 2147483648
      %v2701 = vxor.u32 %v2591, 2147483648
      %v2702 = vxor.u32 %v2596, 2147483648
      %v2703 = vxor.u32 %v2601, 2147483648
      %v2704 = vxor.u32 %v2606, 2147483648
      %v2705 = vxor.u32 %v2611, 2147483648
      %v2706 = vxor.u32 %v2616, 2147483648
      %v2707 = vxor.u32 %v2621, 2147483648
      %v2708 = vxor.u32 %v2626, 2147483648
      %v2709 = vxor.u32 %v2631, 2147483648
      %v2710 = vxor.u32 %v2636, 2147483648
      %v2711 = vxor.u32 %v2641, 2147483648
      %v2712 = vxor.u32 %v2646, 2147483648
      %v2713 = vxor.u32 %v2651, 2147483648
      %v2714 = vxor.u32 %v2656, 2147483648
      %v2715 = vxor.u32 %v2661, 2147483648
      %v2716 = vxor.u32 %v2666, 2147483648
      %v2717 = vxor.u32 %v2671, 2147483648
      %v2718 = vxor.u32 %v2676, 2147483648
      %v2719 = vxor.u32 %v2681, 2147483648
      %v2720 = vxor.u32 %v2686, 2147483648
      %v2721 = vxor.u32 %v2691, 2147483648
      %v2722 = vxor.u32 %v2696, 2147483648
      %v2723 = vmul.f32 %v2699, 1.442695
      %v2724 = vpow.pop %v2723
      %v2725 = vmul.f32 %v2700, 1.442695
      %v2726 = vpow.pop %v2725
      %v2727 = vmul.f32 %v2701, 1.442695
      %v2728 = vpow.pop %v2727
      %v2729 = vmul.f32 %v2702, 1.442695
      %v2730 = vpow.pop %v2729
      %v2731 = vmul.f32 %v2703, 1.442695
      %v2732 = vpow.pop %v2731
      %v2733 = vmul.f32 %v2704, 1.442695
      %v2734 = vpow.pop %v2733
      %v2735 = vmul.f32 %v2705, 1.442695
      %v2736 = vpow.pop %v2735
      %v2737 = vmul.f32 %v2706, 1.442695
      %v2738 = vpow.pop %v2737
      %v2739 = vmul.f32 %v2707, 1.442695
      %v2740 = vpow.pop %v2739
      %v2741 = vmul.f32 %v2708, 1.442695
      %v2742 = vpow.pop %v2741
      %v2743 = vmul.f32 %v2709, 1.442695
      %v2744 = vpow.pop %v2743
      %v2745 = vmul.f32 %v2710, 1.442695
      %v2746 = vpow.pop %v2745
      %v2747 = vmul.f32 %v2711, 1.442695
      %v2748 = vpow.pop %v2747
      %v2749 = vmul.f32 %v2712, 1.442695
      %v2750 = vpow.pop %v2749
      %v2751 = vmul.f32 %v2713, 1.442695
      %v2752 = vpow.pop %v2751
      %v2753 = vmul.f32 %v2714, 1.442695
      %v2754 = vpow.pop %v2753
      %v2755 = vmul.f32 %v2715, 1.442695
      %v2756 = vpow.pop %v2755
      %v2757 = vmul.f32 %v2716, 1.442695
      %v2758 = vpow.pop %v2757
      %v2759 = vmul.f32 %v2717, 1.442695
      %v2760 = vpow.pop %v2759
      %v2761 = vmul.f32 %v2718, 1.442695
      %v2762 = vpow.pop %v2761
      %v2763 = vmul.f32 %v2719, 1.442695
      %v2764 = vpow.pop %v2763
      %v2765 = vmul.f32 %v2720, 1.442695
      %v2766 = vpow.pop %v2765
      %v2767 = vmul.f32 %v2721, 1.442695
      %v2768 = vpow.pop %v2767
      %v2769 = vmul.f32 %v2722, 1.442695
      %v2770 = vpow.pop %v2769
      %v2771 = vadd.f32 %v2724, 1.0
      %v2772 = vadd.f32 %v2726, 1.0
      %v2773 = vadd.f32 %v2728, 1.0
      %v2774 = vadd.f32 %v2730, 1.0
      %v2775 = vadd.f32 %v2732, 1.0
      %v2776 = vadd.f32 %v2734, 1.0
      %v2777 = vadd.f32 %v2736, 1.0
      %v2778 = vadd.f32 %v2738, 1.0
      %v2779 = vadd.f32 %v2740, 1.0
      %v2780 = vadd.f32 %v2742, 1.0
      %v2781 = vadd.f32 %v2744, 1.0
      %v2782 = vadd.f32 %v2746, 1.0
      %v2783 = vadd.f32 %v2748, 1.0
      %v2784 = vadd.f32 %v2750, 1.0
      %v2785 = vadd.f32 %v2752, 1.0
      %v2786 = vadd.f32 %v2754, 1.0
      %v2787 = vadd.f32 %v2756, 1.0
      %v2788 = vadd.f32 %v2758, 1.0
      %v2789 = vadd.f32 %v2760, 1.0
      %v2790 = vadd.f32 %v2762, 1.0
      %v2791 = vadd.f32 %v2764, 1.0
      %v2792 = vadd.f32 %v2766, 1.0
      %v2793 = vadd.f32 %v2768, 1.0
      %v2794 = vadd.f32 %v2770, 1.0
      %v2795 = vrcp.pop %v2771
      %v2796 = vmul.f32 1.0, %v2795
      %v2797 = vrcp.pop %v2772
      %v2798 = vmul.f32 1.0, %v2797
      %v2799 = vrcp.pop %v2773
      %v2800 = vmul.f32 1.0, %v2799
      %v2801 = vrcp.pop %v2774
      %v2802 = vmul.f32 1.0, %v2801
      %v2803 = vrcp.pop %v2775
      %v2804 = vmul.f32 1.0, %v2803
      %v2805 = vrcp.pop %v2776
      %v2806 = vmul.f32 1.0, %v2805
      %v2807 = vrcp.pop %v2777
      %v2808 = vmul.f32 1.0, %v2807
      %v2809 = vrcp.pop %v2778
      %v2810 = vmul.f32 1.0, %v2809
      %v2811 = vrcp.pop %v2779
      %v2812 = vmul.f32 1.0, %v2811
      %v2813 = vrcp.pop %v2780
      %v2814 = vmul.f32 1.0, %v2813
      %v2815 = vrcp.pop %v2781
      %v2816 = vmul.f32 1.0, %v2815
      %v2817 = vrcp.pop %v2782
      %v2818 = vmul.f32 1.0, %v2817
      %v2819 = vrcp.pop %v2783
      %v2820 = vmul.f32 1.0, %v2819
      %v2821 = vrcp.pop %v2784
      %v2822 = vmul.f32 1.0, %v2821
      %v2823 = vrcp.pop %v2785
      %v2824 = vmul.f32 1.0, %v2823
      %v2825 = vrcp.pop %v2786
      %v2826 = vmul.f32 1.0, %v2825
      %v2827 = vrcp.pop %v2787
      %v2828 = vmul.f32 1.0, %v2827
      %v2829 = vrcp.pop %v2788
      %v2830 = vmul.f32 1.0, %v2829
      %v2831 = vrcp.pop %v2789
      %v2832 = vmul.f32 1.0, %v2831
      %v2833 = vrcp.pop %v2790
      %v2834 = vmul.f32 1.0, %v2833
      %v2835 = vrcp.pop %v2791
      %v2836 = vmul.f32 1.0, %v2835
      %v2837 = vrcp.pop %v2792
      %v2838 = vmul.f32 1.0, %v2837
      %v2839 = vrcp.pop %v2793
      %v2840 = vmul.f32 1.0, %v2839
      %v2841 = vrcp.pop %v2794
      %v2842 = vmul.f32 1.0, %v2841
      %v2843 = vmul.f32 %v2581, %v2796
      %v2844 = vmul.f32 %v2586, %v2798
      %v2845 = vmul.f32 %v2591, %v2800
      %v2846 = vmul.f32 %v2596, %v2802
      %v2847 = vmul.f32 %v2601, %v2804
      %v2848 = vmul.f32 %v2606, %v2806
      %v2849 = vmul.f32 %v2611, %v2808
      %v2850 = vmul.f32 %v2616, %v2810
      %v2851 = vmul.f32 %v2621, %v2812
      %v2852 = vmul.f32 %v2626, %v2814
      %v2853 = vmul.f32 %v2631, %v2816
      %v2854 = vmul.f32 %v2636, %v2818
      %v2855 = vmul.f32 %v2641, %v2820
      %v2856 = vmul.f32 %v2646, %v2822
      %v2857 = vmul.f32 %v2651, %v2824
      %v2858 = vmul.f32 %v2656, %v2826
      %v2859 = vmul.f32 %v2661, %v2828
      %v2860 = vmul.f32 %v2666, %v2830
      %v2861 = vmul.f32 %v2671, %v2832
      %v2862 = vmul.f32 %v2676, %v2834
      %v2863 = vmul.f32 %v2681, %v2836
      %v2864 = vmul.f32 %v2686, %v2838
      %v2865 = vmul.f32 %v2691, %v2840
      %v2866 = vmul.f32 %v2696, %v2842
      %v2867 = vld [vmem:[%s5] sm:$0xff]
      %v2868 = vld [vmem:[%s5 + $0x8] sm:$0xff]
      %v2869 = vld [vmem:[%s5 + $0x10] sm:$0xff]
      %v2870 = vld [vmem:[%s5 + $0x18] sm:$0xff]
      %v2871 = vld [vmem:[%s5 + $0x20] sm:$0xff]
      %v2872 = vld [vmem:[%s5 + $0x28] sm:$0xff]
      %v2873 = vld [vmem:[%s5 + $0x30] sm:$0xff]
      %v2874 = vld [vmem:[%s5 + $0x38] sm:$0xff]
      %v2875 = vld [vmem:[%s5 + $0x40] sm:$0xff]
      %v2876 = vld [vmem:[%s5 + $0x48] sm:$0xff]
      %v2877 = vld [vmem:[%s5 + $0x50] sm:$0xff]
      %v2878 = vld [vmem:[%s5 + $0x58] sm:$0xff]
      %v2879 = vld [vmem:[%s5 + $0x60] sm:$0xff]
      %v2880 = vld [vmem:[%s5 + $0x68] sm:$0xff]
      %v2881 = vld [vmem:[%s5 + $0x70] sm:$0xff]
      %v2882 = vld [vmem:[%s5 + $0x78] sm:$0xff]
      %v2883 = vld [vmem:[%s5 + $0x80] sm:$0xff]
      %v2884 = vld [vmem:[%s5 + $0x88] sm:$0xff]
      %v2885 = vld [vmem:[%s5 + $0x90] sm:$0xff]
      %v2886 = vld [vmem:[%s5 + $0x98] sm:$0xff]
      %v2887 = vld [vmem:[%s5 + $0xa0] sm:$0xff]
      %v2888 = vld [vmem:[%s5 + $0xa8] sm:$0xff]
      %v2889 = vld [vmem:[%s5 + $0xb0] sm:$0xff]
      %v2890 = vld [vmem:[%s5 + $0xb8] sm:$0xff]
      %v2891 = vld [vmem:[%s5 + $0xc0] sm:$0xff]
      %v2892 = vld [vmem:[%s5 + $0xc8] sm:$0xff]
      %v2893 = vld [vmem:[%s5 + $0xd0] sm:$0xff]
      %v2894 = vld [vmem:[%s5 + $0xd8] sm:$0xff]
      %v2895 = vld [vmem:[%s5 + $0xe0] sm:$0xff]
      %v2896 = vld [vmem:[%s5 + $0xe8] sm:$0xff]
      %v2897 = vld [vmem:[%s5 + $0xf0] sm:$0xff]
      %v2898 = vld [vmem:[%s5 + $0xf8] sm:$0xff]
      %v2899 = vld [vmem:[%s5 + $0x100] sm:$0xff]
      %v2900 = vld [vmem:[%s5 + $0x108] sm:$0xff]
      %v2901 = vld [vmem:[%s5 + $0x110] sm:$0xff]
      %v2902 = vld [vmem:[%s5 + $0x118] sm:$0xff]
      %v2903 = vld [vmem:[%s5 + $0x120] sm:$0xff]
      %v2904 = vld [vmem:[%s5 + $0x128] sm:$0xff]
      %v2905 = vld [vmem:[%s5 + $0x130] sm:$0xff]
      %v2906 = vld [vmem:[%s5 + $0x138] sm:$0xff]
      %v2907 = vld [vmem:[%s5 + $0x140] sm:$0xff]
      %v2908 = vld [vmem:[%s5 + $0x148] sm:$0xff]
      %v2909 = vld [vmem:[%s5 + $0x150] sm:$0xff]
      %v2910 = vld [vmem:[%s5 + $0x158] sm:$0xff]
      %v2911 = vld [vmem:[%s5 + $0x160] sm:$0xff]
      %v2912 = vld [vmem:[%s5 + $0x168] sm:$0xff]
      %v2913 = vld [vmem:[%s5 + $0x170] sm:$0xff]
      %v2914 = vld [vmem:[%s5 + $0x178] sm:$0xff]
      %v2915 = vld [vmem:[%s5 + $0x180] sm:$0xff]
      %v2916 = vld [vmem:[%s5 + $0x188] sm:$0xff]
      %v2917 = vld [vmem:[%s5 + $0x190] sm:$0xff]
      %v2918 = vld [vmem:[%s5 + $0x198] sm:$0xff]
      %v2919 = vld [vmem:[%s5 + $0x1a0] sm:$0xff]
      %v2920 = vld [vmem:[%s5 + $0x1a8] sm:$0xff]
      %v2921 = vld [vmem:[%s5 + $0x1b0] sm:$0xff]
      %v2922 = vld [vmem:[%s5 + $0x1b8] sm:$0xff]
      %v2923 = vld [vmem:[%s5 + $0x1c0] sm:$0xff]
      %v2924 = vld [vmem:[%s5 + $0x1c8] sm:$0xff]
      %v2925 = vld [vmem:[%s5 + $0x1d0] sm:$0xff]
      %v2926 = vld [vmem:[%s5 + $0x1d8] sm:$0xff]
      %v2927 = vld [vmem:[%s5 + $0x1e0] sm:$0xff]
      %v2928 = vld [vmem:[%s5 + $0x1e8] sm:$0xff]
      %v2929 = vld [vmem:[%s5 + $0x1f0] sm:$0xff]
      %v2930 = vld [vmem:[%s5 + $0x1f8] sm:$0xff]
      %v2931 = vld [vmem:[%s5 + $0x200] sm:$0xff]
      %v2932 = vld [vmem:[%s5 + $0x208] sm:$0xff]
      %v2933 = vld [vmem:[%s5 + $0x210] sm:$0xff]
      %v2934 = vld [vmem:[%s5 + $0x218] sm:$0xff]
      %v2935 = vld [vmem:[%s5 + $0x220] sm:$0xff]
      %v2936 = vld [vmem:[%s5 + $0x228] sm:$0xff]
      %v2937 = vld [vmem:[%s5 + $0x230] sm:$0xff]
      %v2938 = vld [vmem:[%s5 + $0x238] sm:$0xff]
      %v2939 = vld [vmem:[%s5 + $0x240] sm:$0xff]
      %v2940 = vld [vmem:[%s5 + $0x248] sm:$0xff]
      %v2941 = vld [vmem:[%s5 + $0x250] sm:$0xff]
      %v2942 = vld [vmem:[%s5 + $0x258] sm:$0xff]
      %v2943 = vld [vmem:[%s5 + $0x260] sm:$0xff]
      %v2944 = vld [vmem:[%s5 + $0x268] sm:$0xff]
      %v2945 = vld [vmem:[%s5 + $0x270] sm:$0xff]
      %v2946 = vld [vmem:[%s5 + $0x278] sm:$0xff]
      %v2947 = vld [vmem:[%s5 + $0x280] sm:$0xff]
      %v2948 = vld [vmem:[%s5 + $0x288] sm:$0xff]
      %v2949 = vld [vmem:[%s5 + $0x290] sm:$0xff]
      %v2950 = vld [vmem:[%s5 + $0x298] sm:$0xff]
      %v2951 = vld [vmem:[%s5 + $0x2a0] sm:$0xff]
      %v2952 = vld [vmem:[%s5 + $0x2a8] sm:$0xff]
      %v2953 = vld [vmem:[%s5 + $0x2b0] sm:$0xff]
      %v2954 = vld [vmem:[%s5 + $0x2b8] sm:$0xff]
      %v2955 = vld [vmem:[%s5 + $0x2c0] sm:$0xff]
      %v2956 = vld [vmem:[%s5 + $0x2c8] sm:$0xff]
      %v2957 = vld [vmem:[%s5 + $0x2d0] sm:$0xff]
      %v2958 = vld [vmem:[%s5 + $0x2d8] sm:$0xff]
      %v2959 = vld [vmem:[%s5 + $0x2e0] sm:$0xff]
      %v2960 = vld [vmem:[%s5 + $0x2e8] sm:$0xff]
      %v2961 = vld [vmem:[%s5 + $0x2f0] sm:$0xff]
      %v2962 = vld [vmem:[%s5 + $0x2f8] sm:$0xff]
      %v2963 = vld [vmem:[%s5 + $0x300] sm:$0xff]
      %v2964 = vld [vmem:[%s5 + $0x308] sm:$0xff]
      %v2965 = vld [vmem:[%s5 + $0x310] sm:$0xff]
      %v2966 = vld [vmem:[%s5 + $0x318] sm:$0xff]
      %v2967 = vld [vmem:[%s5 + $0x320] sm:$0xff]
      %v2968 = vld [vmem:[%s5 + $0x328] sm:$0xff]
      %v2969 = vld [vmem:[%s5 + $0x330] sm:$0xff]
      %v2970 = vld [vmem:[%s5 + $0x338] sm:$0xff]
      %v2971 = vld [vmem:[%s5 + $0x340] sm:$0xff]
      %v2972 = vld [vmem:[%s5 + $0x348] sm:$0xff]
      %v2973 = vld [vmem:[%s5 + $0x350] sm:$0xff]
      %v2974 = vld [vmem:[%s5 + $0x358] sm:$0xff]
      %v2975 = vld [vmem:[%s5 + $0x360] sm:$0xff]
      %v2976 = vld [vmem:[%s5 + $0x368] sm:$0xff]
      %v2977 = vld [vmem:[%s5 + $0x370] sm:$0xff]
      %v2978 = vld [vmem:[%s5 + $0x378] sm:$0xff]
      %v2979 = vld [vmem:[%s5 + $0x380] sm:$0xff]
      %v2980 = vld [vmem:[%s5 + $0x388] sm:$0xff]
      %v2981 = vld [vmem:[%s5 + $0x390] sm:$0xff]
      %v2982 = vld [vmem:[%s5 + $0x398] sm:$0xff]
      %v2983 = vld [vmem:[%s5 + $0x3a0] sm:$0xff]
      %v2984 = vld [vmem:[%s5 + $0x3a8] sm:$0xff]
      %v2985 = vld [vmem:[%s5 + $0x3b0] sm:$0xff]
      %v2986 = vld [vmem:[%s5 + $0x3b8] sm:$0xff]
      %v2987 = vld [vmem:[%s5 + $0x3c0] sm:$0xff]
      %v2988 = vld [vmem:[%s5 + $0x3c8] sm:$0xff]
      %v2989 = vld [vmem:[%s5 + $0x3d0] sm:$0xff]
      %v2990 = vld [vmem:[%s5 + $0x3d8] sm:$0xff]
      %v2991 = vld [vmem:[%s5 + $0x3e0] sm:$0xff]
      %v2992 = vld [vmem:[%s5 + $0x3e8] sm:$0xff]
      %v2993 = vld [vmem:[%s5 + $0x3f0] sm:$0xff]
      %v2994 = vld [vmem:[%s5 + $0x3f8] sm:$0xff]
      %v2995 = vld [vmem:[%s5 + $0x400] sm:$0xff]
      %v2996 = vld [vmem:[%s5 + $0x408] sm:$0xff]
      %v2997 = vld [vmem:[%s5 + $0x410] sm:$0xff]
      %v2998 = vld [vmem:[%s5 + $0x418] sm:$0xff]
      %v2999 = vld [vmem:[%s5 + $0x420] sm:$0xff]
      %v3000 = vld [vmem:[%s5 + $0x428] sm:$0xff]
      %v3001 = vld [vmem:[%s5 + $0x430] sm:$0xff]
      %v3002 = vld [vmem:[%s5 + $0x438] sm:$0xff]
      %v3003 = vld [vmem:[%s5 + $0x440] sm:$0xff]
      %v3004 = vld [vmem:[%s5 + $0x448] sm:$0xff]
      %v3005 = vld [vmem:[%s5 + $0x450] sm:$0xff]
      %v3006 = vld [vmem:[%s5 + $0x458] sm:$0xff]
      %v3007 = vld [vmem:[%s5 + $0x460] sm:$0xff]
      %v3008 = vld [vmem:[%s5 + $0x468] sm:$0xff]
      %v3009 = vld [vmem:[%s5 + $0x470] sm:$0xff]
      %v3010 = vld [vmem:[%s5 + $0x478] sm:$0xff]
      %v3011 = vld [vmem:[%s6] sm:$0x1]
      %v3012 = vmul.f32 %v2843, %v429
      %v3013 = vmul.f32 %v2844, %v429
      %v3014 = vmul.f32 %v2845, %v433
      %v3015 = vmul.f32 %v2846, %v433
      %v3016 = vmul.f32 %v2847, %v437
      %v3017 = vmul.f32 %v2848, %v437
      %v3018 = vmul.f32 %v2849, %v441
      %v3019 = vmul.f32 %v2850, %v441
      %v3020 = vmul.f32 %v2851, %v445
      %v3021 = vmul.f32 %v2852, %v445
      %v3022 = vmul.f32 %v2853, %v449
      %v3023 = vmul.f32 %v2854, %v449
      %v3024 = vmul.f32 %v2855, %v453
      %v3025 = vmul.f32 %v2856, %v453
      %v3026 = vmul.f32 %v2857, %v457
      %v3027 = vmul.f32 %v2858, %v457
      %v3028 = vmul.f32 %v2859, %v461
      %v3029 = vmul.f32 %v2860, %v461
      %v3030 = vmul.f32 %v2861, %v465
      %v3031 = vmul.f32 %v2862, %v465
      %v3032 = vmul.f32 %v2863, %v469
      %v3033 = vmul.f32 %v2864, %v469
      %v3034 = vmul.f32 %v2865, %v473
      %v3035 = vmul.f32 %v2866, %v473
      %3036 = vst [vmem:[%s1526 + $0x8] sm:$0xff] %v3012
      %3037 = vst [vmem:[%s1526 + $0x10] sm:$0xff] %v3013
      %3038 = vst [vmem:[%s1526 + $0x28] sm:$0xff] %v3014
      %3039 = vst [vmem:[%s1526 + $0x30] sm:$0xff] %v3015
      %3040 = vst [vmem:[%s1526 + $0x48] sm:$0xff] %v3016
      %3041 = vst [vmem:[%s1526 + $0x50] sm:$0xff] %v3017
      %3042 = vst [vmem:[%s1526 + $0x68] sm:$0xff] %v3018
      %3043 = vst [vmem:[%s1526 + $0x70] sm:$0xff] %v3019
      %3044 = vst [vmem:[%s1526 + $0x88] sm:$0xff] %v3020
      %3045 = vst [vmem:[%s1526 + $0x90] sm:$0xff] %v3021
      %3046 = vst [vmem:[%s1526 + $0xa8] sm:$0xff] %v3022
      %3047 = vst [vmem:[%s1526 + $0xb0] sm:$0xff] %v3023
      %3048 = vst [vmem:[%s1526 + $0xc8] sm:$0xff] %v3024
      %3049 = vst [vmem:[%s1526 + $0xd0] sm:$0xff] %v3025
      %3050 = vst [vmem:[%s1526 + $0xe8] sm:$0xff] %v3026
      %3051 = vst [vmem:[%s1526 + $0xf0] sm:$0xff] %v3027
      %3052 = vst [vmem:[%s1526 + $0x108] sm:$0xff] %v3028
      %3053 = vst [vmem:[%s1526 + $0x110] sm:$0xff] %v3029
      %3054 = vst [vmem:[%s1526 + $0x128] sm:$0xff] %v3030
      %3055 = vst [vmem:[%s1526 + $0x130] sm:$0xff] %v3031
      %3056 = vst [vmem:[%s1526 + $0x148] sm:$0xff] %v3032
      %3057 = vst [vmem:[%s1526 + $0x150] sm:$0xff] %v3033
      %3058 = vst [vmem:[%s1526 + $0x168] sm:$0xff] %v3034
      %3059 = vst [vmem:[%s1526 + $0x170] sm:$0xff] %v3035
      %v3060 = vld [vmem:[#allocation2 + $0x7] sm:$0xff]
      %v3061 = vld [vmem:[#allocation2 + $0xf] sm:$0xff]
      %v3062 = vld [vmem:[#allocation2 + $0x27] sm:$0xff]
      %v3063 = vld [vmem:[#allocation2 + $0x2f] sm:$0xff]
      %v3064 = vld [vmem:[#allocation2 + $0x47] sm:$0xff]
      %v3065 = vld [vmem:[#allocation2 + $0x4f] sm:$0xff]
      %v3066 = vld [vmem:[#allocation2 + $0x67] sm:$0xff]
      %v3067 = vld [vmem:[#allocation2 + $0x6f] sm:$0xff]
      %v3068 = vld [vmem:[#allocation2 + $0x87] sm:$0xff]
      %v3069 = vld [vmem:[#allocation2 + $0x8f] sm:$0xff]
      %v3070 = vld [vmem:[#allocation2 + $0xa7] sm:$0xff]
      %v3071 = vld [vmem:[#allocation2 + $0xaf] sm:$0xff]
      %v3072 = vld [vmem:[#allocation2 + $0xc7] sm:$0xff]
      %v3073 = vld [vmem:[#allocation2 + $0xcf] sm:$0xff]
      %v3074 = vld [vmem:[#allocation2 + $0xe7] sm:$0xff]
      %v3075 = vld [vmem:[#allocation2 + $0xef] sm:$0xff]
      %v3076 = vld [vmem:[#allocation2 + $0x107] sm:$0xff]
      %v3077 = vld [vmem:[#allocation2 + $0x10f] sm:$0xff]
      %v3078 = vld [vmem:[#allocation2 + $0x127] sm:$0xff]
      %v3079 = vld [vmem:[#allocation2 + $0x12f] sm:$0xff]
      %v3080 = vld [vmem:[#allocation2 + $0x147] sm:$0xff]
      %v3081 = vld [vmem:[#allocation2 + $0x14f] sm:$0xff]
      %v3082 = vld [vmem:[#allocation2 + $0x167] sm:$0xff]
      %v3083 = vld [vmem:[#allocation2 + $0x16f] sm:$0xff]
      %v3084 = vld [vmem:[#allocation2 + $0x8] sm:$0xff]
      %v3085 = vld [vmem:[#allocation2 + $0x10] sm:$0xff]
      %v3086 = vld [vmem:[#allocation2 + $0x28] sm:$0xff]
      %v3087 = vld [vmem:[#allocation2 + $0x30] sm:$0xff]
      %v3088 = vld [vmem:[#allocation2 + $0x48] sm:$0xff]
      %v3089 = vld [vmem:[#allocation2 + $0x50] sm:$0xff]
      %v3090 = vld [vmem:[#allocation2 + $0x68] sm:$0xff]
      %v3091 = vld [vmem:[#allocation2 + $0x70] sm:$0xff]
      %v3092 = vld [vmem:[#allocation2 + $0x88] sm:$0xff]
      %v3093 = vld [vmem:[#allocation2 + $0x90] sm:$0xff]
      %v3094 = vld [vmem:[#allocation2 + $0xa8] sm:$0xff]
      %v3095 = vld [vmem:[#allocation2 + $0xb0] sm:$0xff]
      %v3096 = vld [vmem:[#allocation2 + $0xc8] sm:$0xff]
      %v3097 = vld [vmem:[#allocation2 + $0xd0] sm:$0xff]
      %v3098 = vld [vmem:[#allocation2 + $0xe8] sm:$0xff]
      %v3099 = vld [vmem:[#allocation2 + $0xf0] sm:$0xff]
      %v3100 = vld [vmem:[#allocation2 + $0x108] sm:$0xff]
      %v3101 = vld [vmem:[#allocation2 + $0x110] sm:$0xff]
      %v3102 = vld [vmem:[#allocation2 + $0x128] sm:$0xff]
      %v3103 = vld [vmem:[#allocation2 + $0x130] sm:$0xff]
      %v3104 = vld [vmem:[#allocation2 + $0x148] sm:$0xff]
      %v3105 = vld [vmem:[#allocation2 + $0x150] sm:$0xff]
      %v3106 = vld [vmem:[#allocation2 + $0x168] sm:$0xff]
      %v3107 = vld [vmem:[#allocation2 + $0x170] sm:$0xff]
      %v3108 = vld [vmem:[#allocation2 + $0x9] sm:$0xff]
      %v3109 = vld [vmem:[#allocation2 + $0x11] sm:$0xff]
      %v3110 = vld [vmem:[#allocation2 + $0x29] sm:$0xff]
      %v3111 = vld [vmem:[#allocation2 + $0x31] sm:$0xff]
      %v3112 = vld [vmem:[#allocation2 + $0x49] sm:$0xff]
      %v3113 = vld [vmem:[#allocation2 + $0x51] sm:$0xff]
      %v3114 = vld [vmem:[#allocation2 + $0x69] sm:$0xff]
      %v3115 = vld [vmem:[#allocation2 + $0x71] sm:$0xff]
      %v3116 = vld [vmem:[#allocation2 + $0x89] sm:$0xff]
      %v3117 = vld [vmem:[#allocation2 + $0x91] sm:$0xff]
      %v3118 = vld [vmem:[#allocation2 + $0xa9] sm:$0xff]
      %v3119 = vld [vmem:[#allocation2 + $0xb1] sm:$0xff]
      %v3120 = vld [vmem:[#allocation2 + $0xc9] sm:$0xff]
      %v3121 = vld [vmem:[#allocation2 + $0xd1] sm:$0xff]
      %v3122 = vld [vmem:[#allocation2 + $0xe9] sm:$0xff]
      %v3123 = vld [vmem:[#allocation2 + $0xf1] sm:$0xff]
      %v3124 = vld [vmem:[#allocation2 + $0x109] sm:$0xff]
      %v3125 = vld [vmem:[#allocation2 + $0x111] sm:$0xff]
      %v3126 = vld [vmem:[#allocation2 + $0x129] sm:$0xff]
      %v3127 = vld [vmem:[#allocation2 + $0x131] sm:$0xff]
      %v3128 = vld [vmem:[#allocation2 + $0x149] sm:$0xff]
      %v3129 = vld [vmem:[#allocation2 + $0x151] sm:$0xff]
      %v3130 = vld [vmem:[#allocation2 + $0x169] sm:$0xff]
      %v3131 = vld [vmem:[#allocation2 + $0x171] sm:$0xff]
      %v3132 = vld [vmem:[%s1526 + $0x7] sm:$0xff]
      %v3133 = vld [vmem:[%s1526 + $0xf] sm:$0xff]
      %v3134 = vld [vmem:[%s1526 + $0x27] sm:$0xff]
      %v3135 = vld [vmem:[%s1526 + $0x2f] sm:$0xff]
      %v3136 = vld [vmem:[%s1526 + $0x47] sm:$0xff]
      %v3137 = vld [vmem:[%s1526 + $0x4f] sm:$0xff]
      %v3138 = vld [vmem:[%s1526 + $0x67] sm:$0xff]
      %v3139 = vld [vmem:[%s1526 + $0x6f] sm:$0xff]
      %v3140 = vld [vmem:[%s1526 + $0x87] sm:$0xff]
      %v3141 = vld [vmem:[%s1526 + $0x8f] sm:$0xff]
      %v3142 = vld [vmem:[%s1526 + $0xa7] sm:$0xff]
      %v3143 = vld [vmem:[%s1526 + $0xaf] sm:$0xff]
      %v3144 = vld [vmem:[%s1526 + $0xc7] sm:$0xff]
      %v3145 = vld [vmem:[%s1526 + $0xcf] sm:$0xff]
      %v3146 = vld [vmem:[%s1526 + $0xe7] sm:$0xff]
      %v3147 = vld [vmem:[%s1526 + $0xef] sm:$0xff]
      %v3148 = vld [vmem:[%s1526 + $0x107] sm:$0xff]
      %v3149 = vld [vmem:[%s1526 + $0x10f] sm:$0xff]
      %v3150 = vld [vmem:[%s1526 + $0x127] sm:$0xff]
      %v3151 = vld [vmem:[%s1526 + $0x12f] sm:$0xff]
      %v3152 = vld [vmem:[%s1526 + $0x147] sm:$0xff]
      %v3153 = vld [vmem:[%s1526 + $0x14f] sm:$0xff]
      %v3154 = vld [vmem:[%s1526 + $0x167] sm:$0xff]
      %v3155 = vld [vmem:[%s1526 + $0x16f] sm:$0xff]
      %v3156 = vld [vmem:[%s1526 + $0x8] sm:$0xff]
      %v3157 = vld [vmem:[%s1526 + $0x10] sm:$0xff]
      %v3158 = vld [vmem:[%s1526 + $0x28] sm:$0xff]
      %v3159 = vld [vmem:[%s1526 + $0x30] sm:$0xff]
      %v3160 = vld [vmem:[%s1526 + $0x48] sm:$0xff]
      %v3161 = vld [vmem:[%s1526 + $0x50] sm:$0xff]
      %v3162 = vld [vmem:[%s1526 + $0x68] sm:$0xff]
      %v3163 = vld [vmem:[%s1526 + $0x70] sm:$0xff]
      %v3164 = vld [vmem:[%s1526 + $0x88] sm:$0xff]
      %v3165 = vld [vmem:[%s1526 + $0x90] sm:$0xff]
      %v3166 = vld [vmem:[%s1526 + $0xa8] sm:$0xff]
      %v3167 = vld [vmem:[%s1526 + $0xb0] sm:$0xff]
      %v3168 = vld [vmem:[%s1526 + $0xc8] sm:$0xff]
      %v3169 = vld [vmem:[%s1526 + $0xd0] sm:$0xff]
      %v3170 = vld [vmem:[%s1526 + $0xe8] sm:$0xff]
      %v3171 = vld [vmem:[%s1526 + $0xf0] sm:$0xff]
      %v3172 = vld [vmem:[%s1526 + $0x108] sm:$0xff]
      %v3173 = vld [vmem:[%s1526 + $0x110] sm:$0xff]
      %v3174 = vld [vmem:[%s1526 + $0x128] sm:$0xff]
      %v3175 = vld [vmem:[%s1526 + $0x130] sm:$0xff]
      %v3176 = vld [vmem:[%s1526 + $0x148] sm:$0xff]
      %v3177 = vld [vmem:[%s1526 + $0x150] sm:$0xff]
      %v3178 = vld [vmem:[%s1526 + $0x168] sm:$0xff]
      %v3179 = vld [vmem:[%s1526 + $0x170] sm:$0xff]
      %v3180 = vld [vmem:[%s1526 + $0x9] sm:$0xff]
      %v3181 = vld [vmem:[%s1526 + $0x11] sm:$0xff]
      %v3182 = vld [vmem:[%s1526 + $0x29] sm:$0xff]
      %v3183 = vld [vmem:[%s1526 + $0x31] sm:$0xff]
      %v3184 = vld [vmem:[%s1526 + $0x49] sm:$0xff]
      %v3185 = vld [vmem:[%s1526 + $0x51] sm:$0xff]
      %v3186 = vld [vmem:[%s1526 + $0x69] sm:$0xff]
      %v3187 = vld [vmem:[%s1526 + $0x71] sm:$0xff]
      %v3188 = vld [vmem:[%s1526 + $0x89] sm:$0xff]
      %v3189 = vld [vmem:[%s1526 + $0x91] sm:$0xff]
      %v3190 = vld [vmem:[%s1526 + $0xa9] sm:$0xff]
      %v3191 = vld [vmem:[%s1526 + $0xb1] sm:$0xff]
      %v3192 = vld [vmem:[%s1526 + $0xc9] sm:$0xff]
      %v3193 = vld [vmem:[%s1526 + $0xd1] sm:$0xff]
      %v3194 = vld [vmem:[%s1526 + $0xe9] sm:$0xff]
      %v3195 = vld [vmem:[%s1526 + $0xf1] sm:$0xff]
      %v3196 = vld [vmem:[%s1526 + $0x109] sm:$0xff]
      %v3197 = vld [vmem:[%s1526 + $0x111] sm:$0xff]
      %v3198 = vld [vmem:[%s1526 + $0x129] sm:$0xff]
      %v3199 = vld [vmem:[%s1526 + $0x131] sm:$0xff]
      %v3200 = vld [vmem:[%s1526 + $0x149] sm:$0xff]
      %v3201 = vld [vmem:[%s1526 + $0x151] sm:$0xff]
      %v3202 = vld [vmem:[%s1526 + $0x169] sm:$0xff]
      %v3203 = vld [vmem:[%s1526 + $0x171] sm:$0xff]
      %v3204 = vld [vmem:[%s1695 + $0x7] sm:$0xff]
      %v3205 = vld [vmem:[%s1695 + $0xf] sm:$0xff]
      %v3206 = vld [vmem:[%s1695 + $0x27] sm:$0xff]
      %v3207 = vld [vmem:[%s1695 + $0x2f] sm:$0xff]
      %v3208 = vld [vmem:[%s1695 + $0x47] sm:$0xff]
      %v3209 = vld [vmem:[%s1695 + $0x4f] sm:$0xff]
      %v3210 = vld [vmem:[%s1695 + $0x67] sm:$0xff]
      %v3211 = vld [vmem:[%s1695 + $0x6f] sm:$0xff]
      %v3212 = vld [vmem:[%s1695 + $0x87] sm:$0xff]
      %v3213 = vld [vmem:[%s1695 + $0x8f] sm:$0xff]
      %v3214 = vld [vmem:[%s1695 + $0xa7] sm:$0xff]
      %v3215 = vld [vmem:[%s1695 + $0xaf] sm:$0xff]
      %v3216 = vld [vmem:[%s1695 + $0xc7] sm:$0xff]
      %v3217 = vld [vmem:[%s1695 + $0xcf] sm:$0xff]
      %v3218 = vld [vmem:[%s1695 + $0xe7] sm:$0xff]
      %v3219 = vld [vmem:[%s1695 + $0xef] sm:$0xff]
      %v3220 = vld [vmem:[%s1695 + $0x107] sm:$0xff]
      %v3221 = vld [vmem:[%s1695 + $0x10f] sm:$0xff]
      %v3222 = vld [vmem:[%s1695 + $0x127] sm:$0xff]
      %v3223 = vld [vmem:[%s1695 + $0x12f] sm:$0xff]
      %v3224 = vld [vmem:[%s1695 + $0x147] sm:$0xff]
      %v3225 = vld [vmem:[%s1695 + $0x14f] sm:$0xff]
      %v3226 = vld [vmem:[%s1695 + $0x167] sm:$0xff]
      %v3227 = vld [vmem:[%s1695 + $0x16f] sm:$0xff]
      %v3228 = vld [vmem:[%s1695 + $0x8] sm:$0xff]
      %v3229 = vld [vmem:[%s1695 + $0x10] sm:$0xff]
      %v3230 = vld [vmem:[%s1695 + $0x28] sm:$0xff]
      %v3231 = vld [vmem:[%s1695 + $0x30] sm:$0xff]
      %v3232 = vld [vmem:[%s1695 + $0x48] sm:$0xff]
      %v3233 = vld [vmem:[%s1695 + $0x50] sm:$0xff]
      %v3234 = vld [vmem:[%s1695 + $0x68] sm:$0xff]
      %v3235 = vld [vmem:[%s1695 + $0x70] sm:$0xff]
      %v3236 = vld [vmem:[%s1695 + $0x88] sm:$0xff]
      %v3237 = vld [vmem:[%s1695 + $0x90] sm:$0xff]
      %v3238 = vld [vmem:[%s1695 + $0xa8] sm:$0xff]
      %v3239 = vld [vmem:[%s1695 + $0xb0] sm:$0xff]
      %v3240 = vld [vmem:[%s1695 + $0xc8] sm:$0xff]
      %v3241 = vld [vmem:[%s1695 + $0xd0] sm:$0xff]
      %v3242 = vld [vmem:[%s1695 + $0xe8] sm:$0xff]
      %v3243 = vld [vmem:[%s1695 + $0xf0] sm:$0xff]
      %v3244 = vld [vmem:[%s1695 + $0x108] sm:$0xff]
      %v3245 = vld [vmem:[%s1695 + $0x110] sm:$0xff]
      %v3246 = vld [vmem:[%s1695 + $0x128] sm:$0xff]
      %v3247 = vld [vmem:[%s1695 + $0x130] sm:$0xff]
      %v3248 = vld [vmem:[%s1695 + $0x148] sm:$0xff]
      %v3249 = vld [vmem:[%s1695 + $0x150] sm:$0xff]
      %v3250 = vld [vmem:[%s1695 + $0x168] sm:$0xff]
      %v3251 = vld [vmem:[%s1695 + $0x170] sm:$0xff]
      %v3252 = vld [vmem:[%s1695 + $0x9] sm:$0xff]
      %v3253 = vld [vmem:[%s1695 + $0x11] sm:$0xff]
      %v3254 = vld [vmem:[%s1695 + $0x29] sm:$0xff]
      %v3255 = vld [vmem:[%s1695 + $0x31] sm:$0xff]
      %v3256 = vld [vmem:[%s1695 + $0x49] sm:$0xff]
      %v3257 = vld [vmem:[%s1695 + $0x51] sm:$0xff]
      %v3258 = vld [vmem:[%s1695 + $0x69] sm:$0xff]
      %v3259 = vld [vmem:[%s1695 + $0x71] sm:$0xff]
      %v3260 = vld [vmem:[%s1695 + $0x89] sm:$0xff]
      %v3261 = vld [vmem:[%s1695 + $0x91] sm:$0xff]
      %v3262 = vld [vmem:[%s1695 + $0xa9] sm:$0xff]
      %v3263 = vld [vmem:[%s1695 + $0xb1] sm:$0xff]
      %v3264 = vld [vmem:[%s1695 + $0xc9] sm:$0xff]
      %v3265 = vld [vmem:[%s1695 + $0xd1] sm:$0xff]
      %v3266 = vld [vmem:[%s1695 + $0xe9] sm:$0xff]
      %v3267 = vld [vmem:[%s1695 + $0xf1] sm:$0xff]
      %v3268 = vld [vmem:[%s1695 + $0x109] sm:$0xff]
      %v3269 = vld [vmem:[%s1695 + $0x111] sm:$0xff]
      %v3270 = vld [vmem:[%s1695 + $0x129] sm:$0xff]
      %v3271 = vld [vmem:[%s1695 + $0x131] sm:$0xff]
      %v3272 = vld [vmem:[%s1695 + $0x149] sm:$0xff]
      %v3273 = vld [vmem:[%s1695 + $0x151] sm:$0xff]
      %v3274 = vld [vmem:[%s1695 + $0x169] sm:$0xff]
      %v3275 = vld [vmem:[%s1695 + $0x171] sm:$0xff]
      %v3277 = vlaneseq
      %v3278 = vshrl.u32 %v3277, 7
      %v3279 = vsub.s32 0, %v3278
      %v3280 = vrot.slane %v3011, %v3279
      %3282 = vmatprep.subr.mxu0 0.0
      %3283 = vmatpush1.msra.mxu0 %v2882
      %3284 = vmatprep.subr.mxu0 0.0
      %3285 = vmatpush1.msra.mxu0 %v2881
      %3286 = vmatprep.subr.mxu0 0.0
      %3287 = vmatpush1.msra.mxu0 %v2880
      %3288 = vmatprep.subr.mxu0 0.0
      %3289 = vmatpush1.msra.mxu0 %v2879
      %3290 = vmatprep.subr.mxu0 0.0
      %3291 = vmatpush1.msra.mxu0 %v2878
      %3292 = vmatprep.subr.mxu0 0.0
      %3293 = vmatpush1.msra.mxu0 %v2877
      %3294 = vmatprep.subr.mxu0 0.0
      %3295 = vmatpush1.msra.mxu0 %v2876
      %3296 = vmatprep.subr.mxu0 0.0
      %3297 = vmatpush1.msra.mxu0 %v2875
      %3298 = vmatprep.subr.mxu0 0.0
      %3299 = vmatpush1.msra.mxu0 %v2874
      %3300 = vmatprep.subr.mxu0 0.0
      %3301 = vmatpush1.msra.mxu0 %v2873
      %3302 = vmatprep.subr.mxu0 0.0
      %3303 = vmatpush1.msra.mxu0 %v2872
      %3304 = vmatprep.subr.mxu0 0.0
      %3305 = vmatpush1.msra.mxu0 %v2871
      %3306 = vmatprep.subr.mxu0 0.0
      %3307 = vmatpush1.msra.mxu0 %v2870
      %3308 = vmatprep.subr.mxu0 0.0
      %3309 = vmatpush1.msra.mxu0 %v2869
      %3310 = vmatprep.subr.mxu0 0.0
      %3311 = vmatpush1.msra.mxu0 %v2868
      %3312 = vmatprep.subr.mxu0 0.0
      %3313 = vmatpush1.msra.mxu0 %v2867
      %3314 = vmatprep.subr.mxu0 0.0
      %3315 = vmatpush2.msra.mxu0 %v2898
      %3316 = vmatprep.subr.mxu0 0.0
      %3317 = vmatpush2.msra.mxu0 %v2897
      %3318 = vmatprep.subr.mxu0 0.0
      %3319 = vmatpush2.msra.mxu0 %v2896
      %3320 = vmatprep.subr.mxu0 0.0
      %3321 = vmatpush2.msra.mxu0 %v2895
      %3322 = vmatprep.subr.mxu0 0.0
      %3323 = vmatpush2.msra.mxu0 %v2894
      %3324 = vmatprep.subr.mxu0 0.0
      %3325 = vmatpush2.msra.mxu0 %v2893
      %3326 = vmatprep.subr.mxu0 0.0
      %3327 = vmatpush2.msra.mxu0 %v2892
      %3328 = vmatprep.subr.mxu0 0.0
      %3329 = vmatpush2.msra.mxu0 %v2891
      %3330 = vmatprep.subr.mxu0 0.0
      %3331 = vmatpush2.msra.mxu0 %v2890
      %3332 = vmatprep.subr.mxu0 0.0
      %3333 = vmatpush2.msra.mxu0 %v2889
      %3334 = vmatprep.subr.mxu0 0.0
      %3335 = vmatpush2.msra.mxu0 %v2888
      %3336 = vmatprep.subr.mxu0 0.0
      %3337 = vmatpush2.msra.mxu0 %v2887
      %3338 = vmatprep.subr.mxu0 0.0
      %3339 = vmatpush2.msra.mxu0 %v2886
      %3340 = vmatprep.subr.mxu0 0.0
      %3341 = vmatpush2.msra.mxu0 %v2885
      %3342 = vmatprep.subr.mxu0 0.0
      %3343 = vmatpush2.msra.mxu0 %v2884
      %3344 = vmatprep.subr.mxu0 0.0
      %3345 = vmatpush2.msra.mxu0 %v2883
      %3346 = vmatprep.mubr.f32.mxu0 %v3084
      %3347 = vmatmul.mubr.f32.gmra.mxu0 %v3060
      %v3348 = vpop.f32.mrf.mxu0
      %v3349 = vpop.f32.mrf.mxu0
      %3350 = vmatprep.mubr.f32.mxu0 %v3085
      %3351 = vmatmul.mubr.f32.gmra.mxu0 %v3061
      %v3352 = vpop.f32.mrf.mxu0
      %v3353 = vpop.f32.mrf.mxu0
      %3354 = vmatprep.mubr.f32.mxu0 %v3086
      %3355 = vmatmul.mubr.f32.gmra.mxu0 %v3062
      %v3356 = vpop.f32.mrf.mxu0
      %v3357 = vpop.f32.mrf.mxu0
      %3358 = vmatprep.mubr.f32.mxu0 %v3087
      %3359 = vmatmul.mubr.f32.gmra.mxu0 %v3063
      %v3360 = vpop.f32.mrf.mxu0
      %v3361 = vpop.f32.mrf.mxu0
      %3362 = vmatprep.mubr.f32.mxu0 %v3088
      %3363 = vmatmul.mubr.f32.gmra.mxu0 %v3064
      %v3364 = vpop.f32.mrf.mxu0
      %v3365 = vadd.f32 %v3280, %v3364
      %v3366 = vpop.f32.mrf.mxu0
      %3367 = vmatprep.mubr.f32.mxu0 %v3089
      %3368 = vmatmul.mubr.f32.gmra.mxu0 %v3065
      %v3369 = vpop.f32.mrf.mxu0
      %v3370 = vadd.f32 %v3280, %v3369
      %v3371 = vpop.f32.mrf.mxu0
      %3372 = vmatprep.mubr.f32.mxu0 %v3090
      %3373 = vmatmul.mubr.f32.gmra.mxu0 %v3066
      %v3374 = vpop.f32.mrf.mxu0
      %v3375 = vadd.f32 %v3280, %v3374
      %v3376 = vpop.f32.mrf.mxu0
      %3377 = vmatprep.mubr.f32.mxu0 %v3091
      %3378 = vmatmul.mubr.f32.gmra.mxu0 %v3067
      %v3379 = vpop.f32.mrf.mxu0
      %v3380 = vadd.f32 %v3280, %v3379
      %v3381 = vpop.f32.mrf.mxu0
      %3382 = vmatprep.mubr.f32.mxu0 %v3092
      %3383 = vmatmul.mubr.f32.gmra.mxu0 %v3068
      %v3384 = vpop.f32.mrf.mxu0
      %v3385 = vadd.f32 %v3280, %v3384
      %v3386 = vpop.f32.mrf.mxu0
      %3387 = vmatprep.mubr.f32.mxu0 %v3093
      %3388 = vmatmul.mubr.f32.gmra.mxu0 %v3069
      %v3389 = vpop.f32.mrf.mxu0
      %v3390 = vadd.f32 %v3280, %v3389
      %v3391 = vpop.f32.mrf.mxu0
      %3392 = vmatprep.mubr.f32.mxu0 %v3094
      %3393 = vmatmul.mubr.f32.gmra.mxu0 %v3070
      %v3394 = vpop.f32.mrf.mxu0
      %v3395 = vadd.f32 %v3280, %v3394
      %v3396 = vpop.f32.mrf.mxu0
      %3397 = vmatprep.mubr.f32.mxu0 %v3095
      %3398 = vmatmul.mubr.f32.gmra.mxu0 %v3071
      %v3399 = vpop.f32.mrf.mxu0
      %v3400 = vadd.f32 %v3280, %v3399
      %v3401 = vpop.f32.mrf.mxu0
      %3402 = vmatprep.mubr.f32.mxu0 %v3096
      %3403 = vmatmul.mubr.f32.gmra.mxu0 %v3072
      %v3404 = vpop.f32.mrf.mxu0
      %v3405 = vadd.f32 %v3280, %v3404
      %v3406 = vpop.f32.mrf.mxu0
      %3407 = vmatprep.mubr.f32.mxu0 %v3097
      %3408 = vmatmul.mubr.f32.gmra.mxu0 %v3073
      %v3409 = vpop.f32.mrf.mxu0
      %v3410 = vadd.f32 %v3280, %v3409
      %v3411 = vpop.f32.mrf.mxu0
      %3412 = vmatprep.mubr.f32.mxu0 %v3098
      %3413 = vmatmul.mubr.f32.gmra.mxu0 %v3074
      %v3414 = vpop.f32.mrf.mxu0
      %v3415 = vadd.f32 %v3280, %v3414
      %v3416 = vpop.f32.mrf.mxu0
      %3417 = vmatprep.mubr.f32.mxu0 %v3099
      %3418 = vmatmul.mubr.f32.gmra.mxu0 %v3075
      %v3419 = vpop.f32.mrf.mxu0
      %v3420 = vadd.f32 %v3280, %v3419
      %v3421 = vpop.f32.mrf.mxu0
      %3422 = vmatprep.mubr.f32.mxu0 %v3100
      %3423 = vmatmul.mubr.f32.gmra.mxu0 %v3076
      %v3424 = vpop.f32.mrf.mxu0
      %v3425 = vadd.f32 %v3280, %v3424
      %v3426 = vpop.f32.mrf.mxu0
      %3427 = vmatprep.mubr.f32.mxu0 %v3101
      %3428 = vmatmul.mubr.f32.gmra.mxu0 %v3077
      %v3429 = vpop.f32.mrf.mxu0
      %v3430 = vadd.f32 %v3280, %v3429
      %v3431 = vpop.f32.mrf.mxu0
      %3432 = vmatprep.mubr.f32.mxu0 %v3102
      %3433 = vmatmul.mubr.f32.gmra.mxu0 %v3078
      %v3434 = vpop.f32.mrf.mxu0
      %v3435 = vadd.f32 %v3280, %v3434
      %v3436 = vpop.f32.mrf.mxu0
      %3437 = vmatprep.mubr.f32.mxu0 %v3103
      %3438 = vmatmul.mubr.f32.gmra.mxu0 %v3079
      %v3439 = vpop.f32.mrf.mxu0
      %v3440 = vadd.f32 %v3280, %v3439
      %v3441 = vpop.f32.mrf.mxu0
      %3442 = vmatprep.mubr.f32.mxu0 %v3104
      %3443 = vmatmul.mubr.f32.gmra.mxu0 %v3080
      %v3444 = vpop.f32.mrf.mxu0
      %v3445 = vpop.f32.mrf.mxu0
      %3446 = vmatprep.mubr.f32.mxu0 %v3105
      %3447 = vmatmul.mubr.f32.gmra.mxu0 %v3081
      %v3448 = vpop.f32.mrf.mxu0
      %v3449 = vpop.f32.mrf.mxu0
      %3450 = vmatprep.mubr.f32.mxu0 %v3106
      %3451 = vmatmul.mubr.f32.gmra.mxu0 %v3082
      %v3452 = vpop.f32.mrf.mxu0
      %v3453 = vpop.f32.mrf.mxu0
      %3454 = vmatprep.mubr.f32.mxu0 %v3107
      %3455 = vmatmul.mubr.f32.gmra.mxu0 %v3083
      %v3456 = vpop.f32.mrf.mxu0
      %v3457 = vpop.f32.mrf.mxu0
      %3458 = vdwg.mxu0
      %3459 = vmatprep.subr.mxu0 0.0
      %3460 = vmatpush1.msra.mxu0 %v2914
      %3461 = vmatprep.subr.mxu0 0.0
      %3462 = vmatpush1.msra.mxu0 %v2913
      %3463 = vmatprep.subr.mxu0 0.0
      %3464 = vmatpush1.msra.mxu0 %v2912
      %3465 = vmatprep.subr.mxu0 0.0
      %3466 = vmatpush1.msra.mxu0 %v2911
      %3467 = vmatprep.subr.mxu0 0.0
      %3468 = vmatpush1.msra.mxu0 %v2910
      %3469 = vmatprep.subr.mxu0 0.0
      %3470 = vmatpush1.msra.mxu0 %v2909
      %3471 = vmatprep.subr.mxu0 0.0
      %3472 = vmatpush1.msra.mxu0 %v2908
      %3473 = vmatprep.subr.mxu0 0.0
      %3474 = vmatpush1.msra.mxu0 %v2907
      %3475 = vmatprep.subr.mxu0 0.0
      %3476 = vmatpush1.msra.mxu0 %v2906
      %3477 = vmatprep.subr.mxu0 0.0
      %3478 = vmatpush1.msra.mxu0 %v2905
      %3479 = vmatprep.subr.mxu0 0.0
      %3480 = vmatpush1.msra.mxu0 %v2904
      %3481 = vmatprep.subr.mxu0 0.0
      %3482 = vmatpush1.msra.mxu0 %v2903
      %3483 = vmatprep.subr.mxu0 0.0
      %3484 = vmatpush1.msra.mxu0 %v2902
      %3485 = vmatprep.subr.mxu0 0.0
      %3486 = vmatpush1.msra.mxu0 %v2901
      %3487 = vmatprep.subr.mxu0 0.0
      %3488 = vmatpush1.msra.mxu0 %v2900
      %3489 = vmatprep.subr.mxu0 0.0
      %3490 = vmatpush1.msra.mxu0 %v2899
      %3491 = vmatprep.subr.mxu0 0.0
      %3492 = vmatpush2.msra.mxu0 %v2930
      %3493 = vmatprep.subr.mxu0 0.0
      %3494 = vmatpush2.msra.mxu0 %v2929
      %3495 = vmatprep.subr.mxu0 0.0
      %3496 = vmatpush2.msra.mxu0 %v2928
      %3497 = vmatprep.subr.mxu0 0.0
      %3498 = vmatpush2.msra.mxu0 %v2927
      %3499 = vmatprep.subr.mxu0 0.0
      %3500 = vmatpush2.msra.mxu0 %v2926
      %3501 = vmatprep.subr.mxu0 0.0
      %3502 = vmatpush2.msra.mxu0 %v2925
      %3503 = vmatprep.subr.mxu0 0.0
      %3504 = vmatpush2.msra.mxu0 %v2924
      %3505 = vmatprep.subr.mxu0 0.0
      %3506 = vmatpush2.msra.mxu0 %v2923
      %3507 = vmatprep.subr.mxu0 0.0
      %3508 = vmatpush2.msra.mxu0 %v2922
      %3509 = vmatprep.subr.mxu0 0.0
      %3510 = vmatpush2.msra.mxu0 %v2921
      %3511 = vmatprep.subr.mxu0 0.0
      %3512 = vmatpush2.msra.mxu0 %v2920
      %3513 = vmatprep.subr.mxu0 0.0
      %3514 = vmatpush2.msra.mxu0 %v2919
      %3515 = vmatprep.subr.mxu0 0.0
      %3516 = vmatpush2.msra.mxu0 %v2918
      %3517 = vmatprep.subr.mxu0 0.0
      %3518 = vmatpush2.msra.mxu0 %v2917
      %3519 = vmatprep.subr.mxu0 0.0
      %3520 = vmatpush2.msra.mxu0 %v2916
      %3521 = vmatprep.subr.mxu0 0.0
      %3522 = vmatpush2.msra.mxu0 %v2915
      %3523 = vmatprep.mubr.f32.mxu0 %v3132
      %3524 = vmatmul.mubr.f32.gmra.mxu0 %v3108
      %v3525 = vpop.f32.mrf.mxu0
      %v3526 = vpop.f32.mrf.mxu0
      %3527 = vmatprep.mubr.f32.mxu0 %v3133
      %3528 = vmatmul.mubr.f32.gmra.mxu0 %v3109
      %v3529 = vpop.f32.mrf.mxu0
      %v3530 = vpop.f32.mrf.mxu0
      %3531 = vmatprep.mubr.f32.mxu0 %v3134
      %3532 = vmatmul.mubr.f32.gmra.mxu0 %v3110
      %v3533 = vpop.f32.mrf.mxu0
      %v3534 = vpop.f32.mrf.mxu0
      %3535 = vmatprep.mubr.f32.mxu0 %v3135
      %3536 = vmatmul.mubr.f32.gmra.mxu0 %v3111
      %v3537 = vpop.f32.mrf.mxu0
      %v3538 = vpop.f32.mrf.mxu0
      %3539 = vmatprep.mubr.f32.mxu0 %v3136
      %3540 = vmatmul.mubr.f32.gmra.mxu0 %v3112
      %v3541 = vpop.f32.mrf.mxu0
      %v3542 = vadd.f32 %v3365, %v3541
      %v3543 = vpop.f32.mrf.mxu0
      %3544 = vmatprep.mubr.f32.mxu0 %v3137
      %3545 = vmatmul.mubr.f32.gmra.mxu0 %v3113
      %v3546 = vpop.f32.mrf.mxu0
      %v3547 = vadd.f32 %v3370, %v3546
      %v3548 = vpop.f32.mrf.mxu0
      %3549 = vmatprep.mubr.f32.mxu0 %v3138
      %3550 = vmatmul.mubr.f32.gmra.mxu0 %v3114
      %v3551 = vpop.f32.mrf.mxu0
      %v3552 = vadd.f32 %v3375, %v3551
      %v3553 = vpop.f32.mrf.mxu0
      %3554 = vmatprep.mubr.f32.mxu0 %v3139
      %3555 = vmatmul.mubr.f32.gmra.mxu0 %v3115
      %v3556 = vpop.f32.mrf.mxu0
      %v3557 = vadd.f32 %v3380, %v3556
      %v3558 = vpop.f32.mrf.mxu0
      %3559 = vmatprep.mubr.f32.mxu0 %v3140
      %3560 = vmatmul.mubr.f32.gmra.mxu0 %v3116
      %v3561 = vpop.f32.mrf.mxu0
      %v3562 = vadd.f32 %v3385, %v3561
      %v3563 = vpop.f32.mrf.mxu0
      %3564 = vmatprep.mubr.f32.mxu0 %v3141
      %3565 = vmatmul.mubr.f32.gmra.mxu0 %v3117
      %v3566 = vpop.f32.mrf.mxu0
      %v3567 = vadd.f32 %v3390, %v3566
      %v3568 = vpop.f32.mrf.mxu0
      %3569 = vmatprep.mubr.f32.mxu0 %v3142
      %3570 = vmatmul.mubr.f32.gmra.mxu0 %v3118
      %v3571 = vpop.f32.mrf.mxu0
      %v3572 = vadd.f32 %v3395, %v3571
      %v3573 = vpop.f32.mrf.mxu0
      %3574 = vmatprep.mubr.f32.mxu0 %v3143
      %3575 = vmatmul.mubr.f32.gmra.mxu0 %v3119
      %v3576 = vpop.f32.mrf.mxu0
      %v3577 = vadd.f32 %v3400, %v3576
      %v3578 = vpop.f32.mrf.mxu0
      %3579 = vmatprep.mubr.f32.mxu0 %v3144
      %3580 = vmatmul.mubr.f32.gmra.mxu0 %v3120
      %v3581 = vpop.f32.mrf.mxu0
      %v3582 = vadd.f32 %v3405, %v3581
      %v3583 = vpop.f32.mrf.mxu0
      %3584 = vmatprep.mubr.f32.mxu0 %v3145
      %3585 = vmatmul.mubr.f32.gmra.mxu0 %v3121
      %v3586 = vpop.f32.mrf.mxu0
      %v3587 = vadd.f32 %v3410, %v3586
      %v3588 = vpop.f32.mrf.mxu0
      %3589 = vmatprep.mubr.f32.mxu0 %v3146
      %3590 = vmatmul.mubr.f32.gmra.mxu0 %v3122
      %v3591 = vpop.f32.mrf.mxu0
      %v3592 = vadd.f32 %v3415, %v3591
      %v3593 = vpop.f32.mrf.mxu0
      %3594 = vmatprep.mubr.f32.mxu0 %v3147
      %3595 = vmatmul.mubr.f32.gmra.mxu0 %v3123
      %v3596 = vpop.f32.mrf.mxu0
      %v3597 = vadd.f32 %v3420, %v3596
      %v3598 = vpop.f32.mrf.mxu0
      %3599 = vmatprep.mubr.f32.mxu0 %v3148
      %3600 = vmatmul.mubr.f32.gmra.mxu0 %v3124
      %v3601 = vpop.f32.mrf.mxu0
      %v3602 = vadd.f32 %v3425, %v3601
      %v3603 = vpop.f32.mrf.mxu0
      %3604 = vmatprep.mubr.f32.mxu0 %v3149
      %3605 = vmatmul.mubr.f32.gmra.mxu0 %v3125
      %v3606 = vpop.f32.mrf.mxu0
      %v3607 = vadd.f32 %v3430, %v3606
      %v3608 = vpop.f32.mrf.mxu0
      %3609 = vmatprep.mubr.f32.mxu0 %v3150
      %3610 = vmatmul.mubr.f32.gmra.mxu0 %v3126
      %v3611 = vpop.f32.mrf.mxu0
      %v3612 = vadd.f32 %v3435, %v3611
      %v3613 = vpop.f32.mrf.mxu0
      %3614 = vmatprep.mubr.f32.mxu0 %v3151
      %3615 = vmatmul.mubr.f32.gmra.mxu0 %v3127
      %v3616 = vpop.f32.mrf.mxu0
      %v3617 = vadd.f32 %v3440, %v3616
      %v3618 = vpop.f32.mrf.mxu0
      %3619 = vmatprep.mubr.f32.mxu0 %v3152
      %3620 = vmatmul.mubr.f32.gmra.mxu0 %v3128
      %v3621 = vpop.f32.mrf.mxu0
      %v3622 = vpop.f32.mrf.mxu0
      %3623 = vmatprep.mubr.f32.mxu0 %v3153
      %3624 = vmatmul.mubr.f32.gmra.mxu0 %v3129
      %v3625 = vpop.f32.mrf.mxu0
      %v3626 = vpop.f32.mrf.mxu0
      %3627 = vmatprep.mubr.f32.mxu0 %v3154
      %3628 = vmatmul.mubr.f32.gmra.mxu0 %v3130
      %v3629 = vpop.f32.mrf.mxu0
      %v3630 = vpop.f32.mrf.mxu0
      %3631 = vmatprep.mubr.f32.mxu0 %v3155
      %3632 = vmatmul.mubr.f32.gmra.mxu0 %v3131
      %v3633 = vpop.f32.mrf.mxu0
      %v3634 = vpop.f32.mrf.mxu0
      %3635 = vdwg.mxu0
      %3636 = vmatprep.subr.mxu0 0.0
      %3637 = vmatpush1.msra.mxu0 %v2946
      %3638 = vmatprep.subr.mxu0 0.0
      %3639 = vmatpush1.msra.mxu0 %v2945
      %3640 = vmatprep.subr.mxu0 0.0
      %3641 = vmatpush1.msra.mxu0 %v2944
      %3642 = vmatprep.subr.mxu0 0.0
      %3643 = vmatpush1.msra.mxu0 %v2943
      %3644 = vmatprep.subr.mxu0 0.0
      %3645 = vmatpush1.msra.mxu0 %v2942
      %3646 = vmatprep.subr.mxu0 0.0
      %3647 = vmatpush1.msra.mxu0 %v2941
      %3648 = vmatprep.subr.mxu0 0.0
      %3649 = vmatpush1.msra.mxu0 %v2940
      %3650 = vmatprep.subr.mxu0 0.0
      %3651 = vmatpush1.msra.mxu0 %v2939
      %3652 = vmatprep.subr.mxu0 0.0
      %3653 = vmatpush1.msra.mxu0 %v2938
      %3654 = vmatprep.subr.mxu0 0.0
      %3655 = vmatpush1.msra.mxu0 %v2937
      %3656 = vmatprep.subr.mxu0 0.0
      %3657 = vmatpush1.msra.mxu0 %v2936
      %3658 = vmatprep.subr.mxu0 0.0
      %3659 = vmatpush1.msra.mxu0 %v2935
      %3660 = vmatprep.subr.mxu0 0.0
      %3661 = vmatpush1.msra.mxu0 %v2934
      %3662 = vmatprep.subr.mxu0 0.0
      %3663 = vmatpush1.msra.mxu0 %v2933
      %3664 = vmatprep.subr.mxu0 0.0
      %3665 = vmatpush1.msra.mxu0 %v2932
      %3666 = vmatprep.subr.mxu0 0.0
      %3667 = vmatpush1.msra.mxu0 %v2931
      %3668 = vmatprep.subr.mxu0 0.0
      %3669 = vmatpush2.msra.mxu0 %v2962
      %3670 = vmatprep.subr.mxu0 0.0
      %3671 = vmatpush2.msra.mxu0 %v2961
      %3672 = vmatprep.subr.mxu0 0.0
      %3673 = vmatpush2.msra.mxu0 %v2960
      %3674 = vmatprep.subr.mxu0 0.0
      %3675 = vmatpush2.msra.mxu0 %v2959
      %3676 = vmatprep.subr.mxu0 0.0
      %3677 = vmatpush2.msra.mxu0 %v2958
      %3678 = vmatprep.subr.mxu0 0.0
      %3679 = vmatpush2.msra.mxu0 %v2957
      %3680 = vmatprep.subr.mxu0 0.0
      %3681 = vmatpush2.msra.mxu0 %v2956
      %3682 = vmatprep.subr.mxu0 0.0
      %3683 = vmatpush2.msra.mxu0 %v2955
      %3684 = vmatprep.subr.mxu0 0.0
      %3685 = vmatpush2.msra.mxu0 %v2954
      %3686 = vmatprep.subr.mxu0 0.0
      %3687 = vmatpush2.msra.mxu0 %v2953
      %3688 = vmatprep.subr.mxu0 0.0
      %3689 = vmatpush2.msra.mxu0 %v2952
      %3690 = vmatprep.subr.mxu0 0.0
      %3691 = vmatpush2.msra.mxu0 %v2951
      %3692 = vmatprep.subr.mxu0 0.0
      %3693 = vmatpush2.msra.mxu0 %v2950
      %3694 = vmatprep.subr.mxu0 0.0
      %3695 = vmatpush2.msra.mxu0 %v2949
      %3696 = vmatprep.subr.mxu0 0.0
      %3697 = vmatpush2.msra.mxu0 %v2948
      %3698 = vmatprep.subr.mxu0 0.0
      %3699 = vmatpush2.msra.mxu0 %v2947
      %3700 = vmatprep.mubr.f32.mxu0 %v3180
      %3701 = vmatmul.mubr.f32.gmra.mxu0 %v3156
      %v3702 = vpop.f32.mrf.mxu0
      %v3703 = vpop.f32.mrf.mxu0
      %3704 = vmatprep.mubr.f32.mxu0 %v3181
      %3705 = vmatmul.mubr.f32.gmra.mxu0 %v3157
      %v3706 = vpop.f32.mrf.mxu0
      %v3707 = vpop.f32.mrf.mxu0
      %3708 = vmatprep.mubr.f32.mxu0 %v3182
      %3709 = vmatmul.mubr.f32.gmra.mxu0 %v3158
      %v3710 = vpop.f32.mrf.mxu0
      %v3711 = vpop.f32.mrf.mxu0
      %3712 = vmatprep.mubr.f32.mxu0 %v3183
      %3713 = vmatmul.mubr.f32.gmra.mxu0 %v3159
      %v3714 = vpop.f32.mrf.mxu0
      %v3715 = vpop.f32.mrf.mxu0
      %3716 = vmatprep.mubr.f32.mxu0 %v3184
      %3717 = vmatmul.mubr.f32.gmra.mxu0 %v3160
      %v3718 = vpop.f32.mrf.mxu0
      %v3719 = vadd.f32 %v3542, %v3718
      %v3720 = vpop.f32.mrf.mxu0
      %3721 = vmatprep.mubr.f32.mxu0 %v3185
      %3722 = vmatmul.mubr.f32.gmra.mxu0 %v3161
      %v3723 = vpop.f32.mrf.mxu0
      %v3724 = vadd.f32 %v3547, %v3723
      %v3725 = vpop.f32.mrf.mxu0
      %3726 = vmatprep.mubr.f32.mxu0 %v3186
      %3727 = vmatmul.mubr.f32.gmra.mxu0 %v3162
      %v3728 = vpop.f32.mrf.mxu0
      %v3729 = vadd.f32 %v3552, %v3728
      %v3730 = vpop.f32.mrf.mxu0
      %3731 = vmatprep.mubr.f32.mxu0 %v3187
      %3732 = vmatmul.mubr.f32.gmra.mxu0 %v3163
      %v3733 = vpop.f32.mrf.mxu0
      %v3734 = vadd.f32 %v3557, %v3733
      %v3735 = vpop.f32.mrf.mxu0
      %3736 = vmatprep.mubr.f32.mxu0 %v3188
      %3737 = vmatmul.mubr.f32.gmra.mxu0 %v3164
      %v3738 = vpop.f32.mrf.mxu0
      %v3739 = vadd.f32 %v3562, %v3738
      %v3740 = vpop.f32.mrf.mxu0
      %3741 = vmatprep.mubr.f32.mxu0 %v3189
      %3742 = vmatmul.mubr.f32.gmra.mxu0 %v3165
      %v3743 = vpop.f32.mrf.mxu0
      %v3744 = vadd.f32 %v3567, %v3743
      %v3745 = vpop.f32.mrf.mxu0
      %3746 = vmatprep.mubr.f32.mxu0 %v3190
      %3747 = vmatmul.mubr.f32.gmra.mxu0 %v3166
      %v3748 = vpop.f32.mrf.mxu0
      %v3749 = vadd.f32 %v3572, %v3748
      %v3750 = vpop.f32.mrf.mxu0
      %3751 = vmatprep.mubr.f32.mxu0 %v3191
      %3752 = vmatmul.mubr.f32.gmra.mxu0 %v3167
      %v3753 = vpop.f32.mrf.mxu0
      %v3754 = vadd.f32 %v3577, %v3753
      %v3755 = vpop.f32.mrf.mxu0
      %3756 = vmatprep.mubr.f32.mxu0 %v3192
      %3757 = vmatmul.mubr.f32.gmra.mxu0 %v3168
      %v3758 = vpop.f32.mrf.mxu0
      %v3759 = vadd.f32 %v3582, %v3758
      %v3760 = vpop.f32.mrf.mxu0
      %3761 = vmatprep.mubr.f32.mxu0 %v3193
      %3762 = vmatmul.mubr.f32.gmra.mxu0 %v3169
      %v3763 = vpop.f32.mrf.mxu0
      %v3764 = vadd.f32 %v3587, %v3763
      %v3765 = vpop.f32.mrf.mxu0
      %3766 = vmatprep.mubr.f32.mxu0 %v3194
      %3767 = vmatmul.mubr.f32.gmra.mxu0 %v3170
      %v3768 = vpop.f32.mrf.mxu0
      %v3769 = vadd.f32 %v3592, %v3768
      %v3770 = vpop.f32.mrf.mxu0
      %3771 = vmatprep.mubr.f32.mxu0 %v3195
      %3772 = vmatmul.mubr.f32.gmra.mxu0 %v3171
      %v3773 = vpop.f32.mrf.mxu0
      %v3774 = vadd.f32 %v3597, %v3773
      %v3775 = vpop.f32.mrf.mxu0
      %3776 = vmatprep.mubr.f32.mxu0 %v3196
      %3777 = vmatmul.mubr.f32.gmra.mxu0 %v3172
      %v3778 = vpop.f32.mrf.mxu0
      %v3779 = vadd.f32 %v3602, %v3778
      %v3780 = vpop.f32.mrf.mxu0
      %3781 = vmatprep.mubr.f32.mxu0 %v3197
      %3782 = vmatmul.mubr.f32.gmra.mxu0 %v3173
      %v3783 = vpop.f32.mrf.mxu0
      %v3784 = vadd.f32 %v3607, %v3783
      %v3785 = vpop.f32.mrf.mxu0
      %3786 = vmatprep.mubr.f32.mxu0 %v3198
      %3787 = vmatmul.mubr.f32.gmra.mxu0 %v3174
      %v3788 = vpop.f32.mrf.mxu0
      %v3789 = vadd.f32 %v3612, %v3788
      %v3790 = vpop.f32.mrf.mxu0
      %3791 = vmatprep.mubr.f32.mxu0 %v3199
      %3792 = vmatmul.mubr.f32.gmra.mxu0 %v3175
      %v3793 = vpop.f32.mrf.mxu0
      %v3794 = vadd.f32 %v3617, %v3793
      %v3795 = vpop.f32.mrf.mxu0
      %3796 = vmatprep.mubr.f32.mxu0 %v3200
      %3797 = vmatmul.mubr.f32.gmra.mxu0 %v3176
      %v3798 = vpop.f32.mrf.mxu0
      %v3799 = vpop.f32.mrf.mxu0
      %3800 = vmatprep.mubr.f32.mxu0 %v3201
      %3801 = vmatmul.mubr.f32.gmra.mxu0 %v3177
      %v3802 = vpop.f32.mrf.mxu0
      %v3803 = vpop.f32.mrf.mxu0
      %3804 = vmatprep.mubr.f32.mxu0 %v3202
      %3805 = vmatmul.mubr.f32.gmra.mxu0 %v3178
      %v3806 = vpop.f32.mrf.mxu0
      %v3807 = vpop.f32.mrf.mxu0
      %3808 = vmatprep.mubr.f32.mxu0 %v3203
      %3809 = vmatmul.mubr.f32.gmra.mxu0 %v3179
      %v3810 = vpop.f32.mrf.mxu0
      %v3811 = vpop.f32.mrf.mxu0
      %3812 = vdwg.mxu0
      %3813 = vmatprep.subr.mxu0 0.0
      %3814 = vmatpush1.msra.mxu0 %v2978
      %3815 = vmatprep.subr.mxu0 0.0
      %3816 = vmatpush1.msra.mxu0 %v2977
      %3817 = vmatprep.subr.mxu0 0.0
      %3818 = vmatpush1.msra.mxu0 %v2976
      %3819 = vmatprep.subr.mxu0 0.0
      %3820 = vmatpush1.msra.mxu0 %v2975
      %3821 = vmatprep.subr.mxu0 0.0
      %3822 = vmatpush1.msra.mxu0 %v2974
      %3823 = vmatprep.subr.mxu0 0.0
      %3824 = vmatpush1.msra.mxu0 %v2973
      %3825 = vmatprep.subr.mxu0 0.0
      %3826 = vmatpush1.msra.mxu0 %v2972
      %3827 = vmatprep.subr.mxu0 0.0
      %3828 = vmatpush1.msra.mxu0 %v2971
      %3829 = vmatprep.subr.mxu0 0.0
      %3830 = vmatpush1.msra.mxu0 %v2970
      %3831 = vmatprep.subr.mxu0 0.0
      %3832 = vmatpush1.msra.mxu0 %v2969
      %3833 = vmatprep.subr.mxu0 0.0
      %3834 = vmatpush1.msra.mxu0 %v2968
      %3835 = vmatprep.subr.mxu0 0.0
      %3836 = vmatpush1.msra.mxu0 %v2967
      %3837 = vmatprep.subr.mxu0 0.0
      %3838 = vmatpush1.msra.mxu0 %v2966
      %3839 = vmatprep.subr.mxu0 0.0
      %3840 = vmatpush1.msra.mxu0 %v2965
      %3841 = vmatprep.subr.mxu0 0.0
      %3842 = vmatpush1.msra.mxu0 %v2964
      %3843 = vmatprep.subr.mxu0 0.0
      %3844 = vmatpush1.msra.mxu0 %v2963
      %3845 = vmatprep.subr.mxu0 0.0
      %3846 = vmatpush2.msra.mxu0 %v2994
      %3847 = vmatprep.subr.mxu0 0.0
      %3848 = vmatpush2.msra.mxu0 %v2993
      %3849 = vmatprep.subr.mxu0 0.0
      %3850 = vmatpush2.msra.mxu0 %v2992
      %3851 = vmatprep.subr.mxu0 0.0
      %3852 = vmatpush2.msra.mxu0 %v2991
      %3853 = vmatprep.subr.mxu0 0.0
      %3854 = vmatpush2.msra.mxu0 %v2990
      %3855 = vmatprep.subr.mxu0 0.0
      %3856 = vmatpush2.msra.mxu0 %v2989
      %3857 = vmatprep.subr.mxu0 0.0
      %3858 = vmatpush2.msra.mxu0 %v2988
      %3859 = vmatprep.subr.mxu0 0.0
      %3860 = vmatpush2.msra.mxu0 %v2987
      %3861 = vmatprep.subr.mxu0 0.0
      %3862 = vmatpush2.msra.mxu0 %v2986
      %3863 = vmatprep.subr.mxu0 0.0
      %3864 = vmatpush2.msra.mxu0 %v2985
      %3865 = vmatprep.subr.mxu0 0.0
      %3866 = vmatpush2.msra.mxu0 %v2984
      %3867 = vmatprep.subr.mxu0 0.0
      %3868 = vmatpush2.msra.mxu0 %v2983
      %3869 = vmatprep.subr.mxu0 0.0
      %3870 = vmatpush2.msra.mxu0 %v2982
      %3871 = vmatprep.subr.mxu0 0.0
      %3872 = vmatpush2.msra.mxu0 %v2981
      %3873 = vmatprep.subr.mxu0 0.0
      %3874 = vmatpush2.msra.mxu0 %v2980
      %3875 = vmatprep.subr.mxu0 0.0
      %3876 = vmatpush2.msra.mxu0 %v2979
      %3877 = vmatprep.mubr.f32.mxu0 %v3228
      %3878 = vmatmul.mubr.f32.gmra.mxu0 %v3204
      %v3879 = vpop.f32.mrf.mxu0
      %v3880 = vpop.f32.mrf.mxu0
      %3881 = vmatprep.mubr.f32.mxu0 %v3229
      %3882 = vmatmul.mubr.f32.gmra.mxu0 %v3205
      %v3883 = vpop.f32.mrf.mxu0
      %v3884 = vpop.f32.mrf.mxu0
      %3885 = vmatprep.mubr.f32.mxu0 %v3230
      %3886 = vmatmul.mubr.f32.gmra.mxu0 %v3206
      %v3887 = vpop.f32.mrf.mxu0
      %v3888 = vpop.f32.mrf.mxu0
      %3889 = vmatprep.mubr.f32.mxu0 %v3231
      %3890 = vmatmul.mubr.f32.gmra.mxu0 %v3207
      %v3891 = vpop.f32.mrf.mxu0
      %v3892 = vpop.f32.mrf.mxu0
      %3893 = vmatprep.mubr.f32.mxu0 %v3232
      %3894 = vmatmul.mubr.f32.gmra.mxu0 %v3208
      %v3895 = vpop.f32.mrf.mxu0
      %v3896 = vadd.f32 %v3719, %v3895
      %v3897 = vpop.f32.mrf.mxu0
      %3898 = vmatprep.mubr.f32.mxu0 %v3233
      %3899 = vmatmul.mubr.f32.gmra.mxu0 %v3209
      %v3900 = vpop.f32.mrf.mxu0
      %v3901 = vadd.f32 %v3724, %v3900
      %v3902 = vpop.f32.mrf.mxu0
      %3903 = vmatprep.mubr.f32.mxu0 %v3234
      %3904 = vmatmul.mubr.f32.gmra.mxu0 %v3210
      %v3905 = vpop.f32.mrf.mxu0
      %v3906 = vadd.f32 %v3729, %v3905
      %v3907 = vpop.f32.mrf.mxu0
      %3908 = vmatprep.mubr.f32.mxu0 %v3235
      %3909 = vmatmul.mubr.f32.gmra.mxu0 %v3211
      %v3910 = vpop.f32.mrf.mxu0
      %v3911 = vadd.f32 %v3734, %v3910
      %v3912 = vpop.f32.mrf.mxu0
      %3913 = vmatprep.mubr.f32.mxu0 %v3236
      %3914 = vmatmul.mubr.f32.gmra.mxu0 %v3212
      %v3915 = vpop.f32.mrf.mxu0
      %v3916 = vadd.f32 %v3739, %v3915
      %v3917 = vpop.f32.mrf.mxu0
      %3918 = vmatprep.mubr.f32.mxu0 %v3237
      %3919 = vmatmul.mubr.f32.gmra.mxu0 %v3213
      %v3920 = vpop.f32.mrf.mxu0
      %v3921 = vadd.f32 %v3744, %v3920
      %v3922 = vpop.f32.mrf.mxu0
      %3923 = vmatprep.mubr.f32.mxu0 %v3238
      %3924 = vmatmul.mubr.f32.gmra.mxu0 %v3214
      %v3925 = vpop.f32.mrf.mxu0
      %v3926 = vadd.f32 %v3749, %v3925
      %v3927 = vpop.f32.mrf.mxu0
      %3928 = vmatprep.mubr.f32.mxu0 %v3239
      %3929 = vmatmul.mubr.f32.gmra.mxu0 %v3215
      %v3930 = vpop.f32.mrf.mxu0
      %v3931 = vadd.f32 %v3754, %v3930
      %v3932 = vpop.f32.mrf.mxu0
      %3933 = vmatprep.mubr.f32.mxu0 %v3240
      %3934 = vmatmul.mubr.f32.gmra.mxu0 %v3216
      %v3935 = vpop.f32.mrf.mxu0
      %v3936 = vadd.f32 %v3759, %v3935
      %v3937 = vpop.f32.mrf.mxu0
      %3938 = vmatprep.mubr.f32.mxu0 %v3241
      %3939 = vmatmul.mubr.f32.gmra.mxu0 %v3217
      %v3940 = vpop.f32.mrf.mxu0
      %v3941 = vadd.f32 %v3764, %v3940
      %v3942 = vpop.f32.mrf.mxu0
      %3943 = vmatprep.mubr.f32.mxu0 %v3242
      %3944 = vmatmul.mubr.f32.gmra.mxu0 %v3218
      %v3945 = vpop.f32.mrf.mxu0
      %v3946 = vadd.f32 %v3769, %v3945
      %v3947 = vpop.f32.mrf.mxu0
      %3948 = vmatprep.mubr.f32.mxu0 %v3243
      %3949 = vmatmul.mubr.f32.gmra.mxu0 %v3219
      %v3950 = vpop.f32.mrf.mxu0
      %v3951 = vadd.f32 %v3774, %v3950
      %v3952 = vpop.f32.mrf.mxu0
      %3953 = vmatprep.mubr.f32.mxu0 %v3244
      %3954 = vmatmul.mubr.f32.gmra.mxu0 %v3220
      %v3955 = vpop.f32.mrf.mxu0
      %v3956 = vadd.f32 %v3779, %v3955
      %v3957 = vpop.f32.mrf.mxu0
      %3958 = vmatprep.mubr.f32.mxu0 %v3245
      %3959 = vmatmul.mubr.f32.gmra.mxu0 %v3221
      %v3960 = vpop.f32.mrf.mxu0
      %v3961 = vadd.f32 %v3784, %v3960
      %v3962 = vpop.f32.mrf.mxu0
      %3963 = vmatprep.mubr.f32.mxu0 %v3246
      %3964 = vmatmul.mubr.f32.gmra.mxu0 %v3222
      %v3965 = vpop.f32.mrf.mxu0
      %v3966 = vadd.f32 %v3789, %v3965
      %v3967 = vpop.f32.mrf.mxu0
      %3968 = vmatprep.mubr.f32.mxu0 %v3247
      %3969 = vmatmul.mubr.f32.gmra.mxu0 %v3223
      %v3970 = vpop.f32.mrf.mxu0
      %v3971 = vadd.f32 %v3794, %v3970
      %v3972 = vpop.f32.mrf.mxu0
      %3973 = vmatprep.mubr.f32.mxu0 %v3248
      %3974 = vmatmul.mubr.f32.gmra.mxu0 %v3224
      %v3975 = vpop.f32.mrf.mxu0
      %v3976 = vpop.f32.mrf.mxu0
      %3977 = vmatprep.mubr.f32.mxu0 %v3249
      %3978 = vmatmul.mubr.f32.gmra.mxu0 %v3225
      %v3979 = vpop.f32.mrf.mxu0
      %v3980 = vpop.f32.mrf.mxu0
      %3981 = vmatprep.mubr.f32.mxu0 %v3250
      %3982 = vmatmul.mubr.f32.gmra.mxu0 %v3226
      %v3983 = vpop.f32.mrf.mxu0
      %v3984 = vpop.f32.mrf.mxu0
      %3985 = vmatprep.mubr.f32.mxu0 %v3251
      %3986 = vmatmul.mubr.f32.gmra.mxu0 %v3227
      %v3987 = vpop.f32.mrf.mxu0
      %v3988 = vpop.f32.mrf.mxu0
      %3989 = vdwg.mxu0
      %3990 = vmatprep.subr.mxu0 0.0
      %3991 = vmatpush1.msra.mxu0 %v3010
      %3992 = vmatprep.subr.mxu0 0.0
      %3993 = vmatpush1.msra.mxu0 %v3009
      %3994 = vmatprep.subr.mxu0 0.0
      %3995 = vmatpush1.msra.mxu0 %v3008
      %3996 = vmatprep.subr.mxu0 0.0
      %3997 = vmatpush1.msra.mxu0 %v3007
      %3998 = vmatprep.subr.mxu0 0.0
      %3999 = vmatpush1.msra.mxu0 %v3006
      %4000 = vmatprep.subr.mxu0 0.0
      %4001 = vmatpush1.msra.mxu0 %v3005
      %4002 = vmatprep.subr.mxu0 0.0
      %4003 = vmatpush1.msra.mxu0 %v3004
      %4004 = vmatprep.subr.mxu0 0.0
      %4005 = vmatpush1.msra.mxu0 %v3003
      %4006 = vmatprep.subr.mxu0 0.0
      %4007 = vmatpush1.msra.mxu0 %v3002
      %4008 = vmatprep.subr.mxu0 0.0
      %4009 = vmatpush1.msra.mxu0 %v3001
      %4010 = vmatprep.subr.mxu0 0.0
      %4011 = vmatpush1.msra.mxu0 %v3000
      %4012 = vmatprep.subr.mxu0 0.0
      %4013 = vmatpush1.msra.mxu0 %v2999
      %4014 = vmatprep.subr.mxu0 0.0
      %4015 = vmatpush1.msra.mxu0 %v2998
      %4016 = vmatprep.subr.mxu0 0.0
      %4017 = vmatpush1.msra.mxu0 %v2997
      %4018 = vmatprep.subr.mxu0 0.0
      %4019 = vmatpush1.msra.mxu0 %v2996
      %4020 = vmatprep.subr.mxu0 0.0
      %4021 = vmatpush1.msra.mxu0 %v2995
      %4022 = vmatprep.subr.mxu0 0.0
      %4023 = vmatpush2.msra.mxu0 0.0
      %4024 = vmatprep.subr.mxu0 0.0
      %4025 = vmatpush2.msra.mxu0 0.0
      %4026 = vmatprep.subr.mxu0 0.0
      %4027 = vmatpush2.msra.mxu0 0.0
      %4028 = vmatprep.subr.mxu0 0.0
      %4029 = vmatpush2.msra.mxu0 0.0
      %4030 = vmatprep.subr.mxu0 0.0
      %4031 = vmatpush2.msra.mxu0 0.0
      %4032 = vmatprep.subr.mxu0 0.0
      %4033 = vmatpush2.msra.mxu0 0.0
      %4034 = vmatprep.subr.mxu0 0.0
      %4035 = vmatpush2.msra.mxu0 0.0
      %4036 = vmatprep.subr.mxu0 0.0
      %4037 = vmatpush2.msra.mxu0 0.0
      %4038 = vmatprep.subr.mxu0 0.0
      %4039 = vmatpush2.msra.mxu0 0.0
      %4040 = vmatprep.subr.mxu0 0.0
      %4041 = vmatpush2.msra.mxu0 0.0
      %4042 = vmatprep.subr.mxu0 0.0
      %4043 = vmatpush2.msra.mxu0 0.0
      %4044 = vmatprep.subr.mxu0 0.0
      %4045 = vmatpush2.msra.mxu0 0.0
      %4046 = vmatprep.subr.mxu0 0.0
      %4047 = vmatpush2.msra.mxu0 0.0
      %4048 = vmatprep.subr.mxu0 0.0
      %4049 = vmatpush2.msra.mxu0 0.0
      %4050 = vmatprep.subr.mxu0 0.0
      %4051 = vmatpush2.msra.mxu0 0.0
      %4052 = vmatprep.subr.mxu0 0.0
      %4053 = vmatpush2.msra.mxu0 0.0
      %4054 = vmatprep.mubr.f32.mxu0 0.0
      %4055 = vmatmul.mubr.f32.gmra.mxu0 %v3252
      %v4056 = vpop.f32.mrf.mxu0
      %v4057 = vpop.f32.mrf.mxu0
      %4058 = vmatprep.mubr.f32.mxu0 0.0
      %4059 = vmatmul.mubr.f32.gmra.mxu0 %v3253
      %v4060 = vpop.f32.mrf.mxu0
      %v4061 = vpop.f32.mrf.mxu0
      %4062 = vmatprep.mubr.f32.mxu0 0.0
      %4063 = vmatmul.mubr.f32.gmra.mxu0 %v3254
      %v4064 = vpop.f32.mrf.mxu0
      %v4065 = vpop.f32.mrf.mxu0
      %4066 = vmatprep.mubr.f32.mxu0 0.0
      %4067 = vmatmul.mubr.f32.gmra.mxu0 %v3255
      %v4068 = vpop.f32.mrf.mxu0
      %v4069 = vpop.f32.mrf.mxu0
      %4070 = vmatprep.mubr.f32.mxu0 0.0
      %4071 = vmatmul.mubr.f32.gmra.mxu0 %v3256
      %v4072 = vpop.f32.mrf.mxu0
      %v4073 = vadd.f32 %v3896, %v4072
      %v4074 = vpop.f32.mrf.mxu0
      %4075 = vmatprep.mubr.f32.mxu0 0.0
      %4076 = vmatmul.mubr.f32.gmra.mxu0 %v3257
      %v4077 = vpop.f32.mrf.mxu0
      %v4078 = vadd.f32 %v3901, %v4077
      %v4079 = vpop.f32.mrf.mxu0
      %4080 = vmatprep.mubr.f32.mxu0 0.0
      %4081 = vmatmul.mubr.f32.gmra.mxu0 %v3258
      %v4082 = vpop.f32.mrf.mxu0
      %v4083 = vadd.f32 %v3906, %v4082
      %v4084 = vpop.f32.mrf.mxu0
      %4085 = vmatprep.mubr.f32.mxu0 0.0
      %4086 = vmatmul.mubr.f32.gmra.mxu0 %v3259
      %v4087 = vpop.f32.mrf.mxu0
      %v4088 = vadd.f32 %v3911, %v4087
      %v4089 = vpop.f32.mrf.mxu0
      %4090 = vmatprep.mubr.f32.mxu0 0.0
      %4091 = vmatmul.mubr.f32.gmra.mxu0 %v3260
      %v4092 = vpop.f32.mrf.mxu0
      %v4093 = vadd.f32 %v3916, %v4092
      %v4094 = vpop.f32.mrf.mxu0
      %4095 = vmatprep.mubr.f32.mxu0 0.0
      %4096 = vmatmul.mubr.f32.gmra.mxu0 %v3261
      %v4097 = vpop.f32.mrf.mxu0
      %v4098 = vadd.f32 %v3921, %v4097
      %v4099 = vpop.f32.mrf.mxu0
      %4100 = vmatprep.mubr.f32.mxu0 0.0
      %4101 = vmatmul.mubr.f32.gmra.mxu0 %v3262
      %v4102 = vpop.f32.mrf.mxu0
      %v4103 = vadd.f32 %v3926, %v4102
      %v4104 = vpop.f32.mrf.mxu0
      %4105 = vmatprep.mubr.f32.mxu0 0.0
      %4106 = vmatmul.mubr.f32.gmra.mxu0 %v3263
      %v4107 = vpop.f32.mrf.mxu0
      %v4108 = vadd.f32 %v3931, %v4107
      %v4109 = vpop.f32.mrf.mxu0
      %4110 = vmatprep.mubr.f32.mxu0 0.0
      %4111 = vmatmul.mubr.f32.gmra.mxu0 %v3264
      %v4112 = vpop.f32.mrf.mxu0
      %v4113 = vadd.f32 %v3936, %v4112
      %v4114 = vpop.f32.mrf.mxu0
      %4115 = vmatprep.mubr.f32.mxu0 0.0
      %4116 = vmatmul.mubr.f32.gmra.mxu0 %v3265
      %v4117 = vpop.f32.mrf.mxu0
      %v4118 = vadd.f32 %v3941, %v4117
      %v4119 = vpop.f32.mrf.mxu0
      %4120 = vmatprep.mubr.f32.mxu0 0.0
      %4121 = vmatmul.mubr.f32.gmra.mxu0 %v3266
      %v4122 = vpop.f32.mrf.mxu0
      %v4123 = vadd.f32 %v3946, %v4122
      %v4124 = vpop.f32.mrf.mxu0
      %4125 = vmatprep.mubr.f32.mxu0 0.0
      %4126 = vmatmul.mubr.f32.gmra.mxu0 %v3267
      %v4127 = vpop.f32.mrf.mxu0
      %v4128 = vadd.f32 %v3951, %v4127
      %v4129 = vpop.f32.mrf.mxu0
      %4130 = vmatprep.mubr.f32.mxu0 0.0
      %4131 = vmatmul.mubr.f32.gmra.mxu0 %v3268
      %v4132 = vpop.f32.mrf.mxu0
      %v4133 = vadd.f32 %v3956, %v4132
      %v4134 = vpop.f32.mrf.mxu0
      %4135 = vmatprep.mubr.f32.mxu0 0.0
      %4136 = vmatmul.mubr.f32.gmra.mxu0 %v3269
      %v4137 = vpop.f32.mrf.mxu0
      %v4138 = vadd.f32 %v3961, %v4137
      %v4139 = vpop.f32.mrf.mxu0
      %4140 = vmatprep.mubr.f32.mxu0 0.0
      %4141 = vmatmul.mubr.f32.gmra.mxu0 %v3270
      %v4142 = vpop.f32.mrf.mxu0
      %v4143 = vadd.f32 %v3966, %v4142
      %v4144 = vpop.f32.mrf.mxu0
      %4145 = vmatprep.mubr.f32.mxu0 0.0
      %4146 = vmatmul.mubr.f32.gmra.mxu0 %v3271
      %v4147 = vpop.f32.mrf.mxu0
      %v4148 = vadd.f32 %v3971, %v4147
      %v4149 = vpop.f32.mrf.mxu0
      %4150 = vmatprep.mubr.f32.mxu0 0.0
      %4151 = vmatmul.mubr.f32.gmra.mxu0 %v3272
      %v4152 = vpop.f32.mrf.mxu0
      %v4153 = vpop.f32.mrf.mxu0
      %4154 = vmatprep.mubr.f32.mxu0 0.0
      %4155 = vmatmul.mubr.f32.gmra.mxu0 %v3273
      %v4156 = vpop.f32.mrf.mxu0
      %v4157 = vpop.f32.mrf.mxu0
      %4158 = vmatprep.mubr.f32.mxu0 0.0
      %4159 = vmatmul.mubr.f32.gmra.mxu0 %v3274
      %v4160 = vpop.f32.mrf.mxu0
      %v4161 = vpop.f32.mrf.mxu0
      %4162 = vmatprep.mubr.f32.mxu0 0.0
      %4163 = vmatmul.mubr.f32.gmra.mxu0 %v3275
      %v4164 = vpop.f32.mrf.mxu0
      %v4165 = vpop.f32.mrf.mxu0
      %4166 = vdwg.mxu0
      %v4167 = vxor.u32 %v4073, 2147483648
      %v4168 = vxor.u32 %v4078, 2147483648
      %v4169 = vxor.u32 %v4083, 2147483648
      %v4170 = vxor.u32 %v4088, 2147483648
      %v4171 = vxor.u32 %v4093, 2147483648
      %v4172 = vxor.u32 %v4098, 2147483648
      %v4173 = vxor.u32 %v4103, 2147483648
      %v4174 = vxor.u32 %v4108, 2147483648
      %v4175 = vxor.u32 %v4113, 2147483648
      %v4176 = vxor.u32 %v4118, 2147483648
      %v4177 = vxor.u32 %v4123, 2147483648
      %v4178 = vxor.u32 %v4128, 2147483648
      %v4179 = vxor.u32 %v4133, 2147483648
      %v4180 = vxor.u32 %v4138, 2147483648
      %v4181 = vxor.u32 %v4143, 2147483648
      %v4182 = vxor.u32 %v4148, 2147483648
      %v4183 = vmul.f32 %v4167, 1.442695
      %v4184 = vpow.pop %v4183
      %v4185 = vmul.f32 %v4168, 1.442695
      %v4186 = vpow.pop %v4185
      %v4187 = vmul.f32 %v4169, 1.442695
      %v4188 = vpow.pop %v4187
      %v4189 = vmul.f32 %v4170, 1.442695
      %v4190 = vpow.pop %v4189
      %v4191 = vmul.f32 %v4171, 1.442695
      %v4192 = vpow.pop %v4191
      %v4193 = vmul.f32 %v4172, 1.442695
      %v4194 = vpow.pop %v4193
      %v4195 = vmul.f32 %v4173, 1.442695
      %v4196 = vpow.pop %v4195
      %v4197 = vmul.f32 %v4174, 1.442695
      %v4198 = vpow.pop %v4197
      %v4199 = vmul.f32 %v4175, 1.442695
      %v4200 = vpow.pop %v4199
      %v4201 = vmul.f32 %v4176, 1.442695
      %v4202 = vpow.pop %v4201
      %v4203 = vmul.f32 %v4177, 1.442695
      %v4204 = vpow.pop %v4203
      %v4205 = vmul.f32 %v4178, 1.442695
      %v4206 = vpow.pop %v4205
      %v4207 = vmul.f32 %v4179, 1.442695
      %v4208 = vpow.pop %v4207
      %v4209 = vmul.f32 %v4180, 1.442695
      %v4210 = vpow.pop %v4209
      %v4211 = vmul.f32 %v4181, 1.442695
      %v4212 = vpow.pop %v4211
      %v4213 = vmul.f32 %v4182, 1.442695
      %v4214 = vpow.pop %v4213
      %v4215 = vadd.f32 %v4184, 1.0
      %v4216 = vadd.f32 %v4186, 1.0
      %v4217 = vadd.f32 %v4188, 1.0
      %v4218 = vadd.f32 %v4190, 1.0
      %v4219 = vadd.f32 %v4192, 1.0
      %v4220 = vadd.f32 %v4194, 1.0
      %v4221 = vadd.f32 %v4196, 1.0
      %v4222 = vadd.f32 %v4198, 1.0
      %v4223 = vadd.f32 %v4200, 1.0
      %v4224 = vadd.f32 %v4202, 1.0
      %v4225 = vadd.f32 %v4204, 1.0
      %v4226 = vadd.f32 %v4206, 1.0
      %v4227 = vadd.f32 %v4208, 1.0
      %v4228 = vadd.f32 %v4210, 1.0
      %v4229 = vadd.f32 %v4212, 1.0
      %v4230 = vadd.f32 %v4214, 1.0
      %v4231 = vrcp.pop %v4215
      %v4232 = vmul.f32 1.0, %v4231
      %v4233 = vrcp.pop %v4216
      %v4234 = vmul.f32 1.0, %v4233
      %v4235 = vrcp.pop %v4217
      %v4236 = vmul.f32 1.0, %v4235
      %v4237 = vrcp.pop %v4218
      %v4238 = vmul.f32 1.0, %v4237
      %v4239 = vrcp.pop %v4219
      %v4240 = vmul.f32 1.0, %v4239
      %v4241 = vrcp.pop %v4220
      %v4242 = vmul.f32 1.0, %v4241
      %v4243 = vrcp.pop %v4221
      %v4244 = vmul.f32 1.0, %v4243
      %v4245 = vrcp.pop %v4222
      %v4246 = vmul.f32 1.0, %v4245
      %v4247 = vrcp.pop %v4223
      %v4248 = vmul.f32 1.0, %v4247
      %v4249 = vrcp.pop %v4224
      %v4250 = vmul.f32 1.0, %v4249
      %v4251 = vrcp.pop %v4225
      %v4252 = vmul.f32 1.0, %v4251
      %v4253 = vrcp.pop %v4226
      %v4254 = vmul.f32 1.0, %v4253
      %v4255 = vrcp.pop %v4227
      %v4256 = vmul.f32 1.0, %v4255
      %v4257 = vrcp.pop %v4228
      %v4258 = vmul.f32 1.0, %v4257
      %v4259 = vrcp.pop %v4229
      %v4260 = vmul.f32 1.0, %v4259
      %v4261 = vrcp.pop %v4230
      %v4262 = vmul.f32 1.0, %v4261
      %v4263 = vmul.f32 %v4073, %v4232
      %v4264 = vmul.f32 %v4078, %v4234
      %v4265 = vmul.f32 %v4083, %v4236
      %v4266 = vmul.f32 %v4088, %v4238
      %v4267 = vmul.f32 %v4093, %v4240
      %v4268 = vmul.f32 %v4098, %v4242
      %v4269 = vmul.f32 %v4103, %v4244
      %v4270 = vmul.f32 %v4108, %v4246
      %v4271 = vmul.f32 %v4113, %v4248
      %v4272 = vmul.f32 %v4118, %v4250
      %v4273 = vmul.f32 %v4123, %v4252
      %v4274 = vmul.f32 %v4128, %v4254
      %v4275 = vmul.f32 %v4133, %v4256
      %v4276 = vmul.f32 %v4138, %v4258
      %v4277 = vmul.f32 %v4143, %v4260
      %v4278 = vmul.f32 %v4148, %v4262
      %v4279 = vadd.f32 %v1000, %v4263
      %v4280 = vadd.f32 %v1002, %v4264
      %v4281 = vadd.f32 %v1004, %v4265
      %v4282 = vadd.f32 %v1006, %v4266
      %v4283 = vadd.f32 %v1008, %v4267
      %v4284 = vadd.f32 %v1010, %v4268
      %v4285 = vadd.f32 %v1012, %v4269
      %v4286 = vadd.f32 %v1014, %v4270
      %v4287 = vadd.f32 %v1016, %v4271
      %v4288 = vadd.f32 %v1018, %v4272
      %v4289 = vadd.f32 %v1020, %v4273
      %v4290 = vadd.f32 %v1022, %v4274
      %v4291 = vadd.f32 %v1024, %v4275
      %v4292 = vadd.f32 %v1026, %v4276
      %v4293 = vadd.f32 %v1028, %v4277
      %v4294 = vadd.f32 %v1030, %v4278
      %v4295 = vld [vmem:[%s7 + $0x100] sm:$0xff]
      %v4296 = vld [vmem:[%s7 + $0x108] sm:$0xff]
      %v4297 = vld [vmem:[%s7 + $0x110] sm:$0xff]
      %v4298 = vld [vmem:[%s7 + $0x118] sm:$0xff]
      %v4299 = vld [vmem:[%s7 + $0x120] sm:$0xff]
      %v4300 = vld [vmem:[%s7 + $0x128] sm:$0xff]
      %v4301 = vld [vmem:[%s7 + $0x130] sm:$0xff]
      %v4302 = vld [vmem:[%s7 + $0x138] sm:$0xff]
      %v4303 = vld [vmem:[%s7 + $0x140] sm:$0xff]
      %v4304 = vld [vmem:[%s7 + $0x148] sm:$0xff]
      %v4305 = vld [vmem:[%s7 + $0x150] sm:$0xff]
      %v4306 = vld [vmem:[%s7 + $0x158] sm:$0xff]
      %v4307 = vld [vmem:[%s7 + $0x160] sm:$0xff]
      %v4308 = vld [vmem:[%s7 + $0x168] sm:$0xff]
      %v4309 = vld [vmem:[%s7 + $0x170] sm:$0xff]
      %v4310 = vld [vmem:[%s7 + $0x178] sm:$0xff]
      %4311 = vmatprep.subr.mxu0 0.0
      %4312 = vmatpush1.msra.mxu0 %v4310
      %4313 = vmatprep.subr.mxu0 0.0
      %4314 = vmatpush1.msra.mxu0 %v4309
      %4315 = vmatprep.subr.mxu0 0.0
      %4316 = vmatpush1.msra.mxu0 %v4308
      %4317 = vmatprep.subr.mxu0 0.0
      %4318 = vmatpush1.msra.mxu0 %v4307
      %4319 = vmatprep.subr.mxu0 0.0
      %4320 = vmatpush1.msra.mxu0 %v4306
      %4321 = vmatprep.subr.mxu0 0.0
      %4322 = vmatpush1.msra.mxu0 %v4305
      %4323 = vmatprep.subr.mxu0 0.0
      %4324 = vmatpush1.msra.mxu0 %v4304
      %4325 = vmatprep.subr.mxu0 0.0
      %4326 = vmatpush1.msra.mxu0 %v4303
      %4327 = vmatprep.subr.mxu0 0.0
      %4328 = vmatpush1.msra.mxu0 %v4302
      %4329 = vmatprep.subr.mxu0 0.0
      %4330 = vmatpush1.msra.mxu0 %v4301
      %4331 = vmatprep.subr.mxu0 0.0
      %4332 = vmatpush1.msra.mxu0 %v4300
      %4333 = vmatprep.subr.mxu0 0.0
      %4334 = vmatpush1.msra.mxu0 %v4299
      %4335 = vmatprep.subr.mxu0 0.0
      %4336 = vmatpush1.msra.mxu0 %v4298
      %4337 = vmatprep.subr.mxu0 0.0
      %4338 = vmatpush1.msra.mxu0 %v4297
      %4339 = vmatprep.subr.mxu0 0.0
      %4340 = vmatpush1.msra.mxu0 %v4296
      %4341 = vmatprep.subr.mxu0 0.0
      %4342 = vmatpush1.msra.mxu0 %v4295
      %4343 = vmatprep.subr.mxu0 0.0
      %4344 = vmatpush2.msra.mxu0 0.0
      %4345 = vmatprep.subr.mxu0 0.0
      %4346 = vmatpush2.msra.mxu0 0.0
      %4347 = vmatprep.subr.mxu0 0.0
      %4348 = vmatpush2.msra.mxu0 0.0
      %4349 = vmatprep.subr.mxu0 0.0
      %4350 = vmatpush2.msra.mxu0 0.0
      %4351 = vmatprep.subr.mxu0 0.0
      %4352 = vmatpush2.msra.mxu0 0.0
      %4353 = vmatprep.subr.mxu0 0.0
      %4354 = vmatpush2.msra.mxu0 0.0
      %4355 = vmatprep.subr.mxu0 0.0
      %4356 = vmatpush2.msra.mxu0 0.0
      %4357 = vmatprep.subr.mxu0 0.0
      %4358 = vmatpush2.msra.mxu0 0.0
      %4359 = vmatprep.subr.mxu0 0.0
      %4360 = vmatpush2.msra.mxu0 0.0
      %4361 = vmatprep.subr.mxu0 0.0
      %4362 = vmatpush2.msra.mxu0 0.0
      %4363 = vmatprep.subr.mxu0 0.0
      %4364 = vmatpush2.msra.mxu0 0.0
      %4365 = vmatprep.subr.mxu0 0.0
      %4366 = vmatpush2.msra.mxu0 0.0
      %4367 = vmatprep.subr.mxu0 0.0
      %4368 = vmatpush2.msra.mxu0 0.0
      %4369 = vmatprep.subr.mxu0 0.0
      %4370 = vmatpush2.msra.mxu0 0.0
      %4371 = vmatprep.subr.mxu0 0.0
      %4372 = vmatpush2.msra.mxu0 0.0
      %4373 = vmatprep.subr.mxu0 0.0
      %4374 = vmatpush2.msra.mxu0 0.0
      %4375 = vmatprep.mubr.f32.mxu0 0.0
      %4376 = vmatmul.mubr.f32.gmra.mxu0 %v4279
      %v4377 = vpop.f32.mrf.mxu0
      %v4378 = vadd.f32 0.0, %v4377
      %v4379 = vpop.f32.mrf.mxu0
      %4380 = vmatprep.mubr.f32.mxu0 0.0
      %4381 = vmatmul.mubr.f32.gmra.mxu0 %v4280
      %v4382 = vpop.f32.mrf.mxu0
      %v4383 = vadd.f32 0.0, %v4382
      %v4384 = vpop.f32.mrf.mxu0
      %4385 = vmatprep.mubr.f32.mxu0 0.0
      %4386 = vmatmul.mubr.f32.gmra.mxu0 %v4281
      %v4387 = vpop.f32.mrf.mxu0
      %v4388 = vadd.f32 0.0, %v4387
      %v4389 = vpop.f32.mrf.mxu0
      %4390 = vmatprep.mubr.f32.mxu0 0.0
      %4391 = vmatmul.mubr.f32.gmra.mxu0 %v4282
      %v4392 = vpop.f32.mrf.mxu0
      %v4393 = vadd.f32 0.0, %v4392
      %v4394 = vpop.f32.mrf.mxu0
      %4395 = vmatprep.mubr.f32.mxu0 0.0
      %4396 = vmatmul.mubr.f32.gmra.mxu0 %v4283
      %v4397 = vpop.f32.mrf.mxu0
      %v4398 = vadd.f32 0.0, %v4397
      %v4399 = vpop.f32.mrf.mxu0
      %4400 = vmatprep.mubr.f32.mxu0 0.0
      %4401 = vmatmul.mubr.f32.gmra.mxu0 %v4284
      %v4402 = vpop.f32.mrf.mxu0
      %v4403 = vadd.f32 0.0, %v4402
      %v4404 = vpop.f32.mrf.mxu0
      %4405 = vmatprep.mubr.f32.mxu0 0.0
      %4406 = vmatmul.mubr.f32.gmra.mxu0 %v4285
      %v4407 = vpop.f32.mrf.mxu0
      %v4408 = vadd.f32 0.0, %v4407
      %v4409 = vpop.f32.mrf.mxu0
      %4410 = vmatprep.mubr.f32.mxu0 0.0
      %4411 = vmatmul.mubr.f32.gmra.mxu0 %v4286
      %v4412 = vpop.f32.mrf.mxu0
      %v4413 = vadd.f32 0.0, %v4412
      %v4414 = vpop.f32.mrf.mxu0
      %4415 = vmatprep.mubr.f32.mxu0 0.0
      %4416 = vmatmul.mubr.f32.gmra.mxu0 %v4287
      %v4417 = vpop.f32.mrf.mxu0
      %v4418 = vadd.f32 0.0, %v4417
      %v4419 = vpop.f32.mrf.mxu0
      %4420 = vmatprep.mubr.f32.mxu0 0.0
      %4421 = vmatmul.mubr.f32.gmra.mxu0 %v4288
      %v4422 = vpop.f32.mrf.mxu0
      %v4423 = vadd.f32 0.0, %v4422
      %v4424 = vpop.f32.mrf.mxu0
      %4425 = vmatprep.mubr.f32.mxu0 0.0
      %4426 = vmatmul.mubr.f32.gmra.mxu0 %v4289
      %v4427 = vpop.f32.mrf.mxu0
      %v4428 = vadd.f32 0.0, %v4427
      %v4429 = vpop.f32.mrf.mxu0
      %4430 = vmatprep.mubr.f32.mxu0 0.0
      %4431 = vmatmul.mubr.f32.gmra.mxu0 %v4290
      %v4432 = vpop.f32.mrf.mxu0
      %v4433 = vadd.f32 0.0, %v4432
      %v4434 = vpop.f32.mrf.mxu0
      %4435 = vmatprep.mubr.f32.mxu0 0.0
      %4436 = vmatmul.mubr.f32.gmra.mxu0 %v4291
      %v4437 = vpop.f32.mrf.mxu0
      %v4438 = vadd.f32 0.0, %v4437
      %v4439 = vpop.f32.mrf.mxu0
      %4440 = vmatprep.mubr.f32.mxu0 0.0
      %4441 = vmatmul.mubr.f32.gmra.mxu0 %v4292
      %v4442 = vpop.f32.mrf.mxu0
      %v4443 = vadd.f32 0.0, %v4442
      %v4444 = vpop.f32.mrf.mxu0
      %4445 = vmatprep.mubr.f32.mxu0 0.0
      %4446 = vmatmul.mubr.f32.gmra.mxu0 %v4293
      %v4447 = vpop.f32.mrf.mxu0
      %v4448 = vadd.f32 0.0, %v4447
      %v4449 = vpop.f32.mrf.mxu0
      %4450 = vmatprep.mubr.f32.mxu0 0.0
      %4451 = vmatmul.mubr.f32.gmra.mxu0 %v4294
      %v4452 = vpop.f32.mrf.mxu0
      %v4453 = vadd.f32 0.0, %v4452
      %v4454 = vpop.f32.mrf.mxu0
      %4455 = vdwg.mxu0
      %v4456 = vadd.f32 %v1279, %v4378
      %v4457 = vadd.f32 %v1284, %v4383
      %v4458 = vadd.f32 %v1289, %v4388
      %v4459 = vadd.f32 %v1294, %v4393
      %v4460 = vadd.f32 %v1299, %v4398
      %v4461 = vadd.f32 %v1304, %v4403
      %v4462 = vadd.f32 %v1309, %v4408
      %v4463 = vadd.f32 %v1314, %v4413
      %v4464 = vadd.f32 %v1319, %v4418
      %v4465 = vadd.f32 %v1324, %v4423
      %v4466 = vadd.f32 %v1329, %v4428
      %v4467 = vadd.f32 %v1334, %v4433
      %v4468 = vadd.f32 %v1339, %v4438
      %v4469 = vadd.f32 %v1344, %v4443
      %v4470 = vadd.f32 %v1349, %v4448
      %v4471 = vadd.f32 %v1354, %v4453
      %v4472 = vld [vmem:[%s8] sm:$0x1]
      %v4474 = vlaneseq
      %v4475 = vshrl.u32 %v4474, 7
      %v4476 = vsub.s32 0, %v4475
      %v4477 = vrot.slane %v4472, %v4476
      %v4479 = vadd.f32 %v4456, %v4477
      %v4480 = vadd.f32 %v4457, %v4477
      %v4481 = vadd.f32 %v4458, %v4477
      %v4482 = vadd.f32 %v4459, %v4477
      %v4483 = vadd.f32 %v4460, %v4477
      %v4484 = vadd.f32 %v4461, %v4477
      %v4485 = vadd.f32 %v4462, %v4477
      %v4486 = vadd.f32 %v4463, %v4477
      %v4487 = vadd.f32 %v4464, %v4477
      %v4488 = vadd.f32 %v4465, %v4477
      %v4489 = vadd.f32 %v4466, %v4477
      %v4490 = vadd.f32 %v4467, %v4477
      %v4491 = vadd.f32 %v4468, %v4477
      %v4492 = vadd.f32 %v4469, %v4477
      %v4493 = vadd.f32 %v4470, %v4477
      %v4494 = vadd.f32 %v4471, %v4477
      %v4495 = vxor.u32 %v4479, 2147483648
      %v4496 = vxor.u32 %v4480, 2147483648
      %v4497 = vxor.u32 %v4481, 2147483648
      %v4498 = vxor.u32 %v4482, 2147483648
      %v4499 = vxor.u32 %v4483, 2147483648
      %v4500 = vxor.u32 %v4484, 2147483648
      %v4501 = vxor.u32 %v4485, 2147483648
      %v4502 = vxor.u32 %v4486, 2147483648
      %v4503 = vxor.u32 %v4487, 2147483648
      %v4504 = vxor.u32 %v4488, 2147483648
      %v4505 = vxor.u32 %v4489, 2147483648
      %v4506 = vxor.u32 %v4490, 2147483648
      %v4507 = vxor.u32 %v4491, 2147483648
      %v4508 = vxor.u32 %v4492, 2147483648
      %v4509 = vxor.u32 %v4493, 2147483648
      %v4510 = vxor.u32 %v4494, 2147483648
      %v4511 = vmul.f32 %v4495, 1.442695
      %v4512 = vpow.pop %v4511
      %v4513 = vmul.f32 %v4496, 1.442695
      %v4514 = vpow.pop %v4513
      %v4515 = vmul.f32 %v4497, 1.442695
      %v4516 = vpow.pop %v4515
      %v4517 = vmul.f32 %v4498, 1.442695
      %v4518 = vpow.pop %v4517
      %v4519 = vmul.f32 %v4499, 1.442695
      %v4520 = vpow.pop %v4519
      %v4521 = vmul.f32 %v4500, 1.442695
      %v4522 = vpow.pop %v4521
      %v4523 = vmul.f32 %v4501, 1.442695
      %v4524 = vpow.pop %v4523
      %v4525 = vmul.f32 %v4502, 1.442695
      %v4526 = vpow.pop %v4525
      %v4527 = vmul.f32 %v4503, 1.442695
      %v4528 = vpow.pop %v4527
      %v4529 = vmul.f32 %v4504, 1.442695
      %v4530 = vpow.pop %v4529
      %v4531 = vmul.f32 %v4505, 1.442695
      %v4532 = vpow.pop %v4531
      %v4533 = vmul.f32 %v4506, 1.442695
      %v4534 = vpow.pop %v4533
      %v4535 = vmul.f32 %v4507, 1.442695
      %v4536 = vpow.pop %v4535
      %v4537 = vmul.f32 %v4508, 1.442695
      %v4538 = vpow.pop %v4537
      %v4539 = vmul.f32 %v4509, 1.442695
      %v4540 = vpow.pop %v4539
      %v4541 = vmul.f32 %v4510, 1.442695
      %v4542 = vpow.pop %v4541
      %v4543 = vadd.f32 %v4512, 1.0
      %v4544 = vadd.f32 %v4514, 1.0
      %v4545 = vadd.f32 %v4516, 1.0
      %v4546 = vadd.f32 %v4518, 1.0
      %v4547 = vadd.f32 %v4520, 1.0
      %v4548 = vadd.f32 %v4522, 1.0
      %v4549 = vadd.f32 %v4524, 1.0
      %v4550 = vadd.f32 %v4526, 1.0
      %v4551 = vadd.f32 %v4528, 1.0
      %v4552 = vadd.f32 %v4530, 1.0
      %v4553 = vadd.f32 %v4532, 1.0
      %v4554 = vadd.f32 %v4534, 1.0
      %v4555 = vadd.f32 %v4536, 1.0
      %v4556 = vadd.f32 %v4538, 1.0
      %v4557 = vadd.f32 %v4540, 1.0
      %v4558 = vadd.f32 %v4542, 1.0
      %v4559 = vrcp.pop %v4543
      %v4560 = vmul.f32 1.0, %v4559
      %v4561 = vrcp.pop %v4544
      %v4562 = vmul.f32 1.0, %v4561
      %v4563 = vrcp.pop %v4545
      %v4564 = vmul.f32 1.0, %v4563
      %v4565 = vrcp.pop %v4546
      %v4566 = vmul.f32 1.0, %v4565
      %v4567 = vrcp.pop %v4547
      %v4568 = vmul.f32 1.0, %v4567
      %v4569 = vrcp.pop %v4548
      %v4570 = vmul.f32 1.0, %v4569
      %v4571 = vrcp.pop %v4549
      %v4572 = vmul.f32 1.0, %v4571
      %v4573 = vrcp.pop %v4550
      %v4574 = vmul.f32 1.0, %v4573
      %v4575 = vrcp.pop %v4551
      %v4576 = vmul.f32 1.0, %v4575
      %v4577 = vrcp.pop %v4552
      %v4578 = vmul.f32 1.0, %v4577
      %v4579 = vrcp.pop %v4553
      %v4580 = vmul.f32 1.0, %v4579
      %v4581 = vrcp.pop %v4554
      %v4582 = vmul.f32 1.0, %v4581
      %v4583 = vrcp.pop %v4555
      %v4584 = vmul.f32 1.0, %v4583
      %v4585 = vrcp.pop %v4556
      %v4586 = vmul.f32 1.0, %v4585
      %v4587 = vrcp.pop %v4557
      %v4588 = vmul.f32 1.0, %v4587
      %v4589 = vrcp.pop %v4558
      %v4590 = vmul.f32 1.0, %v4589
      %v4591 = vmul.f32 %v4479, %v4560
      %v4592 = vmul.f32 %v4480, %v4562
      %v4593 = vmul.f32 %v4481, %v4564
      %v4594 = vmul.f32 %v4482, %v4566
      %v4595 = vmul.f32 %v4483, %v4568
      %v4596 = vmul.f32 %v4484, %v4570
      %v4597 = vmul.f32 %v4485, %v4572
      %v4598 = vmul.f32 %v4486, %v4574
      %v4599 = vmul.f32 %v4487, %v4576
      %v4600 = vmul.f32 %v4488, %v4578
      %v4601 = vmul.f32 %v4489, %v4580
      %v4602 = vmul.f32 %v4490, %v4582
      %v4603 = vmul.f32 %v4491, %v4584
      %v4604 = vmul.f32 %v4492, %v4586
      %v4605 = vmul.f32 %v4493, %v4588
      %v4606 = vmul.f32 %v4494, %v4590
      %4607 = vst [vmem:[%s368] sm:$0xff] %v4591
      %4608 = vst [vmem:[%s368 + $0x8] sm:$0xff] %v4592
      %4609 = vst [vmem:[%s368 + $0x10] sm:$0xff] %v4593
      %4610 = vst [vmem:[%s368 + $0x18] sm:$0xff] %v4594
      %4611 = vst [vmem:[%s368 + $0x20] sm:$0xff] %v4595
      %4612 = vst [vmem:[%s368 + $0x28] sm:$0xff] %v4596
      %4613 = vst [vmem:[%s368 + $0x30] sm:$0xff] %v4597
      %4614 = vst [vmem:[%s368 + $0x38] sm:$0xff] %v4598
      %4615 = vst [vmem:[%s368 + $0x40] sm:$0xff] %v4599
      %4616 = vst [vmem:[%s368 + $0x48] sm:$0xff] %v4600
      %4617 = vst [vmem:[%s368 + $0x50] sm:$0xff] %v4601
      %4618 = vst [vmem:[%s368 + $0x58] sm:$0xff] %v4602
      %4619 = vst [vmem:[%s368 + $0x60] sm:$0xff] %v4603
      %4620 = vst [vmem:[%s368 + $0x68] sm:$0xff] %v4604
      %4621 = vst [vmem:[%s368 + $0x70] sm:$0xff] %v4605
      %4622 = vst [vmem:[%s368 + $0x78] sm:$0xff] %v4606
      %p4623 = scmp.lt.s32.totalorder %s24, 1
      %s4624 = scalar_select %p4623, %s24, 1
      %p4625 = scmp.lt.s32.totalorder %s25, 1
      %s4626 = scalar_select %p4625, %s25, 1
      %s4627 = smul.addr %s4626, 16
      %s4628 = smul.addr %s4624, 32
      %s4629 = sadd.s32 %s4627, %s4628
      %s4630 = smul.addr %s4629, 8
      %s4631 = scalar_lea.vmem %s9, %s4630
      // Predicated region
      $region57: #{c2f_forward.1} parent=55 // pred_check
        %p4632 = pneg %p248
      $region58: #{c2f_forward.1} parent=55 // pred_check_branch
        %4634 = sbr.rel (%p4632) target = $region60
      $region59: #{c2f_forward.1} parent=55 // pred_region
        _
      $region60: #{c2f_forward.1} parent=55 // pred_fallthru
        _
    $region56: #{c2f_forward.1} parent=5 // pred_fallthru
      _
    %p4635 = scmp.le.s32.totalorder 2, %s15
    // Predicated region
    $region61: #{c2f_forward.1} parent=5 // pred_check
      %p4636 = pneg %p4635
    $region62: #{c2f_forward.1} parent=5 // pred_check_branch
      %4638 = sbr.rel (%p4636) target = $region64
    $region63: #{c2f_forward.1} parent=5 // pred_region
      %s4639 = ssub.s32 %s15, 2
      // Predicated region
      $region65: #{c2f_forward.1} parent=63 // pred_check
        %p4640 = pneg %p254
      $region66: #{c2f_forward.1} parent=63 // pred_check_branch
        %4642 = sbr.rel (%p4640) target = $region68
      $region67: #{c2f_forward.1} parent=63 // pred_region
        %p4643 = scmp.lt.s32.totalorder %s26, 1
        %s4644 = scalar_select %p4643, %s26, 1
        %p4645 = scmp.lt.s32.totalorder %s27, 1
        %s4646 = scalar_select %p4645, %s27, 1
        %s4647 = smul.addr %s4646, 16
        %s4648 = smul.addr %s4644, 32
        %s4649 = sadd.s32 %s4647, %s4648
        %s4650 = smul.addr %s4649, 8
        %s4651 = scalar_lea.vmem %s9, %s4650
      $region68: #{c2f_forward.1} parent=63 // pred_fallthru
        _
    $region64: #{c2f_forward.1} parent=5 // pred_fallthru
      _
  $region6: #{c2f_forward.1} parent=0 // loop_footer
    %s19 = sadd.s32 1, %s15
  $region7: #{c2f_forward.1} parent=0 // loop_footer_branch
    %14 = sbr.rel target = $region3
  $region8: #{c2f_forward.1} parent=0 // loop_exit
    _

</llo_original>
